<compile_context>
chip_gen: v6e
topology: v6e:2x2x1
jax: 0.10.0
libtpu: 0.0.40
codegen_flags: <defaults>
</compile_context>

<pallas_src>
import jax
import jax.numpy as jnp
from jax.experimental import pallas as pl
from jax.experimental.pallas import tpu as pltpu

LSIZE = 12          # head output size
NC = 3              # conv input channels
OC = 16             # conv output channels
H = W = 16          # spatial size (OC * H * W == 4096 == dense in_size)
P = H * W           # 256 spatial positions
KC = NC * 9         # 27 im2col features per position
KPAD = 32           # padded K: 27 patch cols + 1 ones col (bias) + 4 zero cols
DIN = OC * P        # 4096
DMID = 256          # dense out_size
NHEAD = 128         # lane-padded head width (sliced back to LSIZE outside)


# ---------------------------------------------------------------------------
# Fully fused encoder kernel — single grid step, everything VMEM-resident
# ---------------------------------------------------------------------------
def _encoder_kernel(pat_ref, cw_ref, dw_ref, db_ref, hw_ref, hb_ref,
                    feat_ref, prez_ref):
    pat = pat_ref[...]                                    # (B, KPAD, P) f32
    cw = cw_ref[...]                                      # (OC, KPAD)  f32, bias folded in col 27
    bsz = pat.shape[0]

    # ---- conv (3x3, pad=1) + bias + ReLU: one batched MXU matmul -------------
    # pat K-columns carry [patch(27) | 1 | 0 0 0 0]; cw rows carry [w(27) | bias | 0 0 0 0],
    # so the bias-add is folded into the matmul.
    cwb = jnp.broadcast_to(cw[None, :, :], (bsz, OC, KPAD))
    h = jnp.einsum("bok,bkp->bop", cwb, pat,
                   preferred_element_type=jnp.float32)    # (B, OC, P)
    h = jnp.maximum(h, 0.0)

    # ---- Flatten in PyTorch NCHW order (index o*P + p) ------------------------
    # dense_w rows are pre-arranged in the same order, so this concat IS nn.Flatten().
    hflat = jnp.concatenate([h[:, o, :] for o in range(OC)], axis=-1)   # (B, DIN)

    # ---- dense 4096 -> 256 + ReLU: one matmul against the resident bf16 weight
    feats = jnp.dot(hflat.astype(jnp.bfloat16), dw_ref[...],
                    preferred_element_type=jnp.float32) + db_ref[...]
    feats = jnp.maximum(feats, 0.0)                                     # (B, DMID) f32
    feat_ref[...] = feats

    # ---- head 256 -> 12 (lane-padded to 128, sliced outside) ------------------
    prez_ref[...] = jnp.dot(feats.astype(jnp.bfloat16), hw_ref[...],
                            preferred_element_type=jnp.float32) + hb_ref[...]


def _fused_encoder_call(pat, kp):
    bsz = pat.shape[0]
    return pl.pallas_call(
        _encoder_kernel,
        out_shape=(jax.ShapeDtypeStruct((bsz, DMID), jnp.float32),
                   jax.ShapeDtypeStruct((bsz, NHEAD), jnp.float32)),
        grid=(1,),
        in_specs=[
            pl.BlockSpec((bsz, KPAD, P), lambda i: (0, 0, 0)),   # im2col patches (f32, tiny)
            pl.BlockSpec((OC, KPAD), lambda i: (0, 0)),          # conv weight (+bias col), full block
            pl.BlockSpec((DIN, DMID), lambda i: (0, 0)),         # dense weight, fully resident (2 MB bf16)
            pl.BlockSpec((1, DMID), lambda i: (0, 0)),           # dense bias
            pl.BlockSpec((DMID, NHEAD), lambda i: (0, 0)),       # head weight (lane-padded)
            pl.BlockSpec((1, NHEAD), lambda i: (0, 0)),          # head bias (lane-padded)
        ],
        out_specs=(pl.BlockSpec((bsz, DMID), lambda i: (0, 0)),
                   pl.BlockSpec((bsz, NHEAD), lambda i: (0, 0))),
        compiler_params=pltpu.CompilerParams(dimension_semantics=("arbitrary",)),
    )(pat, kp["conv_w"], kp["dense_w"], kp["dense_b"], kp["head_w"], kp["head_b"])


# ---------------------------------------------------------------------------
# Glue: NCHW-native im2col (stack + reshape only, no transposes) + forward
# ---------------------------------------------------------------------------
def _im2col_nchw(x):
    """x: (B, NC, H, W) f32 -> (B, KPAD, H*W) f32 patches; column KC is all-ones (bias column)."""
    bsz = x.shape[0]
    xp = jnp.pad(x, ((0, 0), (0, 0), (1, 1), (1, 1)))
    cols = [xp[:, :, kh:kh + H, kw:kw + W] for kh in range(3) for kw in range(3)]
    pat = jnp.stack(cols, axis=2).reshape(bsz, KC, P)       # (B, 27, 256), row-major merges only
    ones = jnp.ones((bsz, 1, P), pat.dtype)
    zeros = jnp.zeros((bsz, KPAD - KC - 1, P), pat.dtype)
    return jnp.concatenate([pat, ones, zeros], axis=1)      # keep f32 (accuracy; ~64 KB)


@jax.jit
def encoder_forward(x, kparams):
    """x: (B, NC, H, W) NCHW, kparams from prepare_params -> {'pre_z': (B,12), 'features': (B,256)}."""
    pat = _im2col_nchw(x)
    feats, prez_pad = _fused_encoder_call(pat, kparams)
    return {"pre_z": prez_pad[:, :LSIZE], "features": feats}


# ---------------------------------------------------------------------------
# Parameters: PyTorch layout at init, converted ONCE to kernel layout
# ---------------------------------------------------------------------------
def init_params(key):
    """PyTorch-layout parameters (as the reference nn.Module would hold them)."""
    k = jax.random.split(key, 6)
    scale = lambda fan_in: 1.0 / jnp.sqrt(fan_in)
    return {
        "conv_w": jax.random.normal(k[0], (OC, NC, 3, 3), jnp.float32) * scale(NC * 9),
        "conv_b": jax.random.normal(k[1], (OC,), jnp.float32) * 0.01,
        "dense_w": jax.random.normal(k[2], (DMID, DIN), jnp.float32) * scale(DIN),
        "dense_b": jax.random.normal(k[3], (DMID,), jnp.float32) * 0.01,
        "head_w": jax.random.normal(k[4], (LSIZE, DMID), jnp.float32) * scale(DMID),
        "head_b": jax.random.normal(k[5], (LSIZE,), jnp.float32) * 0.01,
    }


def prepare_params(p):
    """One-time conversion to kernel layout (pre-transposed, bias folded). NOT in the hot path."""
    conv_w = p["conv_w"].reshape(OC, KC)                                   # matches weight.reshape(OC, C*9)
    conv_wb = jnp.concatenate(
        [conv_w, p["conv_b"][:, None], jnp.zeros((OC, KPAD - KC - 1), conv_w.dtype)],
        axis=1).astype(jnp.float32)                                        # (OC, 32): col 27 = bias

    # Linear(4096,256) weight is (256, 4096); its transpose's rows are already in NCHW
    # flatten order o*P + p, matching the in-kernel channel-major concat.
    dense_w = p["dense_w"].T.astype(jnp.bfloat16)                          # (4096, 256)
    dense_b = p["dense_b"].reshape(1, DMID).astype(jnp.float32)

    head_w = jnp.zeros((DMID, NHEAD), jnp.float32).at[:, :LSIZE].set(p["head_w"].T)
    head_b = jnp.zeros((1, NHEAD), jnp.float32).at[0, :LSIZE].set(p["head_b"])
    return {"conv_w": conv_wb, "dense_w": dense_w, "dense_b": dense_b,
            "head_w": head_w.astype(jnp.bfloat16), "head_b": head_b}


# ---------------------------------------------------------------------------
# Pure-JAX f32 reference of the (assumed) module, for a sanity check
# ---------------------------------------------------------------------------
def encoder_reference(x, p):
    out = jax.lax.conv_general_dilated(
        x, p["conv_w"], window_strides=(1, 1), padding="SAME",
        dimension_numbers=("NCHW", "OIHW", "NCHW"))
    out = jnp.maximum(out + p["conv_b"][None, :, None, None], 0.0)
    h = out.reshape(x.shape[0], -1)                                        # PyTorch NCHW flatten
    feats = jnp.maximum(h @ p["dense_w"].T + p["dense_b"], 0.0)
    pre_z = feats @ p["head_w"].T + p["head_b"]
    return {"pre_z": pre_z, "features": feats}


if __name__ == "__main__":
    key = jax.random.PRNGKey(0)
    pkey, xkey = jax.random.split(key)
    params = init_params(pkey)           # PyTorch-layout weights
    kparams = prepare_params(params)     # one-time kernel layout (no per-forward transposes)

    x = jax.random.normal(xkey, (2, NC, H, W), jnp.float32)   # NCHW, 3x16x16 -> flatten 4096

    outs = encoder_forward(x, kparams)
    jax.block_until_ready(outs)

    assert outs["features"].shape == (2, DMID)
    assert outs["pre_z"].shape == (2, LSIZE)

    ref = encoder_reference(x, params)
    assert jnp.allclose(outs["features"], ref["features"], rtol=5e-2, atol=5e-2)
    assert jnp.allclose(outs["pre_z"], ref["pre_z"], rtol=5e-2, atol=5e-2)

    print("KERNEL_OK")
</pallas_src>

<mosaic_0001>
module attributes {stable_mosaic.version = 11 : i64} {
  func.func @_encoder_kernel(%arg0: i32, %arg1: memref<2x32x256xf32, #tpu.memory_space<vmem>>, %arg2: memref<16x32xf32, #tpu.memory_space<vmem>>, %arg3: memref<4096x256xbf16, #tpu.memory_space<vmem>>, %arg4: memref<1x256xf32, #tpu.memory_space<vmem>>, %arg5: memref<256x128xbf16, #tpu.memory_space<vmem>>, %arg6: memref<1x128xf32, #tpu.memory_space<vmem>>, %arg7: memref<2x256xf32, #tpu.memory_space<vmem>>, %arg8: memref<2x128xf32, #tpu.memory_space<vmem>>) attributes {dimension_semantics = [#tpu.dimension_semantics<arbitrary>], iteration_bounds = array<i64: 1>, scalar_prefetch = 0 : i64, scratch_operands = 0 : i64, tpu.core_type = #tpu.core_type<tc>, window_params = [{pipeline_mode = #tpu.pipeline_mode<synchronous>, transform_indices = @transform_0, window_bounds = array<i64: 2, 32, 256>}, {pipeline_mode = #tpu.pipeline_mode<synchronous>, transform_indices = @transform_1, window_bounds = array<i64: 16, 32>}, {pipeline_mode = #tpu.pipeline_mode<synchronous>, transform_indices = @transform_2, window_bounds = array<i64: 4096, 256>}, {pipeline_mode = #tpu.pipeline_mode<synchronous>, transform_indices = @transform_3, window_bounds = array<i64: 1, 256>}, {pipeline_mode = #tpu.pipeline_mode<synchronous>, transform_indices = @transform_4, window_bounds = array<i64: 256, 128>}, {pipeline_mode = #tpu.pipeline_mode<synchronous>, transform_indices = @transform_5, window_bounds = array<i64: 1, 128>}, {pipeline_mode = #tpu.pipeline_mode<synchronous>, transform_indices = @transform_6, window_bounds = array<i64: 2, 256>}, {pipeline_mode = #tpu.pipeline_mode<synchronous>, transform_indices = @transform_7, window_bounds = array<i64: 2, 128>}]} {
    %c0 = arith.constant 0 : index
    %c0_0 = arith.constant 0 : index
    %c0_1 = arith.constant 0 : index
    %0 = vector.load %arg1[%c0, %c0_0, %c0_1] : memref<2x32x256xf32, #tpu.memory_space<vmem>>, vector<2x32x256xf32>
    %c0_2 = arith.constant 0 : index
    %c0_3 = arith.constant 0 : index
    %1 = vector.load %arg2[%c0_2, %c0_3] : memref<16x32xf32, #tpu.memory_space<vmem>>, vector<16x32xf32>
    %2 = vector.shape_cast %1 : vector<16x32xf32> to vector<1x16x32xf32>
    %3 = vector.shape_cast %2 : vector<1x16x32xf32> to vector<1x16x32xf32>
    %4 = vector.broadcast %3 : vector<1x16x32xf32> to vector<2x16x32xf32>
    "tpu.trace_start"() <{level = 10 : i32, message = "bok,bkp->bop"}> : () -> ()
    %cst = arith.constant dense<0.000000e+00> : vector<2x16x256xf32>
    %5 = tpu.matmul %4, %0, %cst {dimension_numbers = #tpu.dot_dimension_numbers<[2], [1], [1], [2], [0, 0, 0, 1, 1, 2], [0], [0]>} : vector<2x16x32xf32>, vector<2x32x256xf32>, vector<2x16x256xf32> -> vector<2x16x256xf32>
    "tpu.trace_stop"() : () -> ()
    %cst_4 = arith.constant 0.000000e+00 : f32
    %6 = vector.broadcast %cst_4 : f32 to vector<2x16x256xf32>
    %7 = arith.maximumf %5, %6 : vector<2x16x256xf32>
    %8 = vector.extract_strided_slice %7 {offsets = [0, 0, 0], sizes = [2, 1, 256], strides = [1, 1, 1]} : vector<2x16x256xf32> to vector<2x1x256xf32>
    %9 = vector.shape_cast %8 : vector<2x1x256xf32> to vector<2x256xf32>
    %10 = vector.extract_strided_slice %7 {offsets = [0, 1, 0], sizes = [2, 1, 256], strides = [1, 1, 1]} : vector<2x16x256xf32> to vector<2x1x256xf32>
    %11 = vector.shape_cast %10 : vector<2x1x256xf32> to vector<2x256xf32>
    %12 = vector.extract_strided_slice %7 {offsets = [0, 2, 0], sizes = [2, 1, 256], strides = [1, 1, 1]} : vector<2x16x256xf32> to vector<2x1x256xf32>
    %13 = vector.shape_cast %12 : vector<2x1x256xf32> to vector<2x256xf32>
    %14 = vector.extract_strided_slice %7 {offsets = [0, 3, 0], sizes = [2, 1, 256], strides = [1, 1, 1]} : vector<2x16x256xf32> to vector<2x1x256xf32>
    %15 = vector.shape_cast %14 : vector<2x1x256xf32> to vector<2x256xf32>
    %16 = vector.extract_strided_slice %7 {offsets = [0, 4, 0], sizes = [2, 1, 256], strides = [1, 1, 1]} : vector<2x16x256xf32> to vector<2x1x256xf32>
    %17 = vector.shape_cast %16 : vector<2x1x256xf32> to vector<2x256xf32>
    %18 = vector.extract_strided_slice %7 {offsets = [0, 5, 0], sizes = [2, 1, 256], strides = [1, 1, 1]} : vector<2x16x256xf32> to vector<2x1x256xf32>
    %19 = vector.shape_cast %18 : vector<2x1x256xf32> to vector<2x256xf32>
    %20 = vector.extract_strided_slice %7 {offsets = [0, 6, 0], sizes = [2, 1, 256], strides = [1, 1, 1]} : vector<2x16x256xf32> to vector<2x1x256xf32>
    %21 = vector.shape_cast %20 : vector<2x1x256xf32> to vector<2x256xf32>
    %22 = vector.extract_strided_slice %7 {offsets = [0, 7, 0], sizes = [2, 1, 256], strides = [1, 1, 1]} : vector<2x16x256xf32> to vector<2x1x256xf32>
    %23 = vector.shape_cast %22 : vector<2x1x256xf32> to vector<2x256xf32>
    %24 = vector.extract_strided_slice %7 {offsets = [0, 8, 0], sizes = [2, 1, 256], strides = [1, 1, 1]} : vector<2x16x256xf32> to vector<2x1x256xf32>
    %25 = vector.shape_cast %24 : vector<2x1x256xf32> to vector<2x256xf32>
    %26 = vector.extract_strided_slice %7 {offsets = [0, 9, 0], sizes = [2, 1, 256], strides = [1, 1, 1]} : vector<2x16x256xf32> to vector<2x1x256xf32>
    %27 = vector.shape_cast %26 : vector<2x1x256xf32> to vector<2x256xf32>
    %28 = vector.extract_strided_slice %7 {offsets = [0, 10, 0], sizes = [2, 1, 256], strides = [1, 1, 1]} : vector<2x16x256xf32> to vector<2x1x256xf32>
    %29 = vector.shape_cast %28 : vector<2x1x256xf32> to vector<2x256xf32>
    %30 = vector.extract_strided_slice %7 {offsets = [0, 11, 0], sizes = [2, 1, 256], strides = [1, 1, 1]} : vector<2x16x256xf32> to vector<2x1x256xf32>
    %31 = vector.shape_cast %30 : vector<2x1x256xf32> to vector<2x256xf32>
    %32 = vector.extract_strided_slice %7 {offsets = [0, 12, 0], sizes = [2, 1, 256], strides = [1, 1, 1]} : vector<2x16x256xf32> to vector<2x1x256xf32>
    %33 = vector.shape_cast %32 : vector<2x1x256xf32> to vector<2x256xf32>
    %34 = vector.extract_strided_slice %7 {offsets = [0, 13, 0], sizes = [2, 1, 256], strides = [1, 1, 1]} : vector<2x16x256xf32> to vector<2x1x256xf32>
    %35 = vector.shape_cast %34 : vector<2x1x256xf32> to vector<2x256xf32>
    %36 = vector.extract_strided_slice %7 {offsets = [0, 14, 0], sizes = [2, 1, 256], strides = [1, 1, 1]} : vector<2x16x256xf32> to vector<2x1x256xf32>
    %37 = vector.shape_cast %36 : vector<2x1x256xf32> to vector<2x256xf32>
    %38 = vector.extract_strided_slice %7 {offsets = [0, 15, 0], sizes = [2, 1, 256], strides = [1, 1, 1]} : vector<2x16x256xf32> to vector<2x1x256xf32>
    %39 = vector.shape_cast %38 : vector<2x1x256xf32> to vector<2x256xf32>
    %40 = tpu.concatenate %9, %11, %13, %15, %17, %19, %21, %23, %25, %27, %29, %31, %33, %35, %37, %39 in 1 : vector<2x256xf32>, vector<2x256xf32>, vector<2x256xf32>, vector<2x256xf32>, vector<2x256xf32>, vector<2x256xf32>, vector<2x256xf32>, vector<2x256xf32>, vector<2x256xf32>, vector<2x256xf32>, vector<2x256xf32>, vector<2x256xf32>, vector<2x256xf32>, vector<2x256xf32>, vector<2x256xf32>, vector<2x256xf32> -> vector<2x4096xf32>
    %41 = arith.truncf %40 : vector<2x4096xf32> to vector<2x4096xbf16>
    %c0_5 = arith.constant 0 : index
    %c0_6 = arith.constant 0 : index
    %42 = vector.load %arg3[%c0_5, %c0_6] : memref<4096x256xbf16, #tpu.memory_space<vmem>>, vector<4096x256xbf16>
    %cst_7 = arith.constant dense<0.000000e+00> : vector<2x256xf32>
    %43 = tpu.matmul %41, %42, %cst_7 {dimension_numbers = #tpu.dot_dimension_numbers<[1], [0], [0], [1], [0, 0, 1, 1], [], []>} : vector<2x4096xbf16>, vector<4096x256xbf16>, vector<2x256xf32> -> vector<2x256xf32>
    %c0_8 = arith.constant 0 : index
    %c0_9 = arith.constant 0 : index
    %44 = vector.load %arg4[%c0_8, %c0_9] : memref<1x256xf32, #tpu.memory_space<vmem>>, vector<1x256xf32>
    %45 = vector.broadcast %44 : vector<1x256xf32> to vector<2x256xf32>
    %46 = arith.addf %43, %45 : vector<2x256xf32>
    %cst_10 = arith.constant 0.000000e+00 : f32
    %47 = vector.broadcast %cst_10 : f32 to vector<2x256xf32>
    %48 = arith.maximumf %46, %47 : vector<2x256xf32>
    %c0_11 = arith.constant 0 : index
    %c0_12 = arith.constant 0 : index
    %49 = vector.load %arg7[%c0_11, %c0_12] : memref<2x256xf32, #tpu.memory_space<vmem>>, vector<2x256xf32>
    tpu.vector_store %arg7[%c0_11, %c0_12], %48 {strides = array<i32>} : memref<2x256xf32, #tpu.memory_space<vmem>>, vector<2x256xf32>,
    %50 = arith.truncf %48 : vector<2x256xf32> to vector<2x256xbf16>
    %c0_13 = arith.constant 0 : index
    %c0_14 = arith.constant 0 : index
    %51 = vector.load %arg5[%c0_13, %c0_14] : memref<256x128xbf16, #tpu.memory_space<vmem>>, vector<256x128xbf16>
    %cst_15 = arith.constant dense<0.000000e+00> : vector<2x128xf32>
    %52 = tpu.matmul %50, %51, %cst_15 {dimension_numbers = #tpu.dot_dimension_numbers<[1], [0], [0], [1], [0, 0, 1, 1], [], []>} : vector<2x256xbf16>, vector<256x128xbf16>, vector<2x128xf32> -> vector<2x128xf32>
    %c0_16 = arith.constant 0 : index
    %c0_17 = arith.constant 0 : index
    %53 = vector.load %arg6[%c0_16, %c0_17] : memref<1x128xf32, #tpu.memory_space<vmem>>, vector<1x128xf32>
    %54 = vector.broadcast %53 : vector<1x128xf32> to vector<2x128xf32>
    %55 = arith.addf %52, %54 : vector<2x128xf32>
    %c0_18 = arith.constant 0 : index
    %c0_19 = arith.constant 0 : index
    %56 = vector.load %arg8[%c0_18, %c0_19] : memref<2x128xf32, #tpu.memory_space<vmem>>, vector<2x128xf32>
    tpu.vector_store %arg8[%c0_18, %c0_19], %55 {strides = array<i32>} : memref<2x128xf32, #tpu.memory_space<vmem>>, vector<2x128xf32>,
    return
  }
  func.func @transform_0(%arg0: i32) -> (i32, i32, i32) {
    %c0_i32 = arith.constant 0 : i32
    %c0_i32_0 = arith.constant 0 : i32
    %c0_i32_1 = arith.constant 0 : i32
    %c0_i32_2 = arith.constant 0 : i32
    return %c0_i32, %c0_i32_0, %c0_i32_1 : i32, i32, i32
  }
  func.func @transform_1(%arg0: i32) -> (i32, i32) {
    %c0_i32 = arith.constant 0 : i32
    %c0_i32_0 = arith.constant 0 : i32
    %c0_i32_1 = arith.constant 0 : i32
    return %c0_i32, %c0_i32_0 : i32, i32
  }
  func.func @transform_2(%arg0: i32) -> (i32, i32) {
    %c0_i32 = arith.constant 0 : i32
    %c0_i32_0 = arith.constant 0 : i32
    %c0_i32_1 = arith.constant 0 : i32
    return %c0_i32, %c0_i32_0 : i32, i32
  }
  func.func @transform_3(%arg0: i32) -> (i32, i32) {
    %c0_i32 = arith.constant 0 : i32
    %c0_i32_0 = arith.constant 0 : i32
    %c0_i32_1 = arith.constant 0 : i32
    return %c0_i32, %c0_i32_0 : i32, i32
  }
  func.func @transform_4(%arg0: i32) -> (i32, i32) {
    %c0_i32 = arith.constant 0 : i32
    %c0_i32_0 = arith.constant 0 : i32
    %c0_i32_1 = arith.constant 0 : i32
    return %c0_i32, %c0_i32_0 : i32, i32
  }
  func.func @transform_5(%arg0: i32) -> (i32, i32) {
    %c0_i32 = arith.constant 0 : i32
    %c0_i32_0 = arith.constant 0 : i32
    %c0_i32_1 = arith.constant 0 : i32
    return %c0_i32, %c0_i32_0 : i32, i32
  }
  func.func @transform_6(%arg0: i32) -> (i32, i32) {
    %c0_i32 = arith.constant 0 : i32
    %c0_i32_0 = arith.constant 0 : i32
    %c0_i32_1 = arith.constant 0 : i32
    return %c0_i32, %c0_i32_0 : i32, i32
  }
  func.func @transform_7(%arg0: i32) -> (i32, i32) {
    %c0_i32 = arith.constant 0 : i32
    %c0_i32_0 = arith.constant 0 : i32
    %c0_i32_1 = arith.constant 0 : i32
    return %c0_i32, %c0_i32_0 : i32, i32
  }
}

</mosaic_0001>

<llo_original>
// kernel: encoder_forward.1
$region0: #{encoder_forward.1}
  #allocation0 [shape = 'u32[]', space=smem, size = 0x4, offset = 0x4, fixed_abs, tag = 'smem constant byte address 0x4 - core index']
  #allocation1 [shape = 'u32[144,128]{1,0:T(1,128)}', space=vmem, size = 0x12000, scoped, tag = 'internal scratch']
  %s0 = inlined_call_operand.vmem [shape: f32[2,32,256], index: 0, kind: input, shape index: {}]
  %s1 = inlined_call_operand.vmem [shape: f32[16,32], index: 1, kind: input, shape index: {}]
  %s2 = inlined_call_operand.vmem [shape: bf16[4096,256], index: 2, kind: input, shape index: {}]
  %s3 = inlined_call_operand.vmem [shape: f32[1,256], index: 3, kind: input, shape index: {}]
  %s4 = inlined_call_operand.vmem [shape: bf16[256,128], index: 4, kind: input, shape index: {}]
  %s5 = inlined_call_operand.vmem [shape: f32[1,128], index: 5, kind: input, shape index: {}]
  %s6 = inlined_call_operand.hbm [shape: f32[2,256], index: 6, kind: output, shape index: {0}]
  %s7 = inlined_call_operand.hbm [shape: f32[2,128], index: 7, kind: output, shape index: {1}]
  %8 = xla_tuple %s6, %s7
  %s9 = sld [smem:[#allocation0]]
  $region42: #{encoder_forward.1} parent=0
    _
  %s11 = ssub.s32 1, %s9
  %s12 = scalar_select 0, %s11, %s9
  $region1: #{encoder_forward.1} parent=0
    #allocation2 [shape = 'u8[2048]{0}', space=vmem, size = 0x800, scoped, tag = 'output window, operand 0, single buffered']
    #allocation3 [shape = 's32[1]{0}', space=sflag, size = 0x4, scoped, tag = 'scoped memory for encoder_forward.1']
    #allocation4 [shape = 'u8[1024]{0}', space=vmem, size = 0x400, scoped, tag = 'output window, operand 1, single buffered']
    #allocation5 [shape = 's32[1]{0}', space=sflag, size = 0x4, scoped, tag = 'scoped memory for encoder_forward.1']
    %13 = vsyncpa [#allocation3], 0
    %14 = vsyncpa [#allocation5], 0
    // Predicated region
    $region2: #{encoder_forward.1} parent=1 // pred_check
      _
    $region3: #{encoder_forward.1} parent=1 // pred_check_branch
      %16 = sbr.rel (0) target = $region5
    $region4: #{encoder_forward.1} parent=1 // pred_region
      _
    $region5: #{encoder_forward.1} parent=1 // pred_fallthru
      _
    // Predicated region
    $region6: #{encoder_forward.1} parent=1 // pred_check
      _
    $region7: #{encoder_forward.1} parent=1 // pred_check_branch
      %18 = sbr.rel (0) target = $region9
    $region8: #{encoder_forward.1} parent=1 // pred_region
      _
    $region9: #{encoder_forward.1} parent=1 // pred_fallthru
      _
    // Predicated region
    $region10: #{encoder_forward.1} parent=1 // pred_check
      _
    $region11: #{encoder_forward.1} parent=1 // pred_check_branch
      %20 = sbr.rel (0) target = $region13
    $region12: #{encoder_forward.1} parent=1 // pred_region
      _
    $region13: #{encoder_forward.1} parent=1 // pred_fallthru
      _
    // Predicated region
    $region14: #{encoder_forward.1} parent=1 // pred_check
      _
    $region15: #{encoder_forward.1} parent=1 // pred_check_branch
      %22 = sbr.rel (0) target = $region17
    $region16: #{encoder_forward.1} parent=1 // pred_region
      _
    $region17: #{encoder_forward.1} parent=1 // pred_fallthru
      _
    // Predicated region
    $region18: #{encoder_forward.1} parent=1 // pred_check
      _
    $region19: #{encoder_forward.1} parent=1 // pred_check_branch
      %24 = sbr.rel (0) target = $region21
    $region20: #{encoder_forward.1} parent=1 // pred_region
      _
    $region21: #{encoder_forward.1} parent=1 // pred_fallthru
      _
    // Predicated region
    $region22: #{encoder_forward.1} parent=1 // pred_check
      _
    $region23: #{encoder_forward.1} parent=1 // pred_check_branch
      %26 = sbr.rel (0) target = $region25
    $region24: #{encoder_forward.1} parent=1 // pred_region
      _
    $region25: #{encoder_forward.1} parent=1 // pred_fallthru
      _
    %v28 = vld [vmem:[%s0] sm:$0xff]
    %v29 = vld [vmem:[%s0 + $0x8] sm:$0xff]
    %v30 = vld [vmem:[%s0 + $0x10] sm:$0xff]
    %v31 = vld [vmem:[%s0 + $0x18] sm:$0xff]
    %v32 = vld [vmem:[%s0 + $0x20] sm:$0xff]
    %v33 = vld [vmem:[%s0 + $0x28] sm:$0xff]
    %v34 = vld [vmem:[%s0 + $0x30] sm:$0xff]
    %v35 = vld [vmem:[%s0 + $0x38] sm:$0xff]
    %v36 = vld [vmem:[%s0 + $0x40] sm:$0xff]
    %v37 = vld [vmem:[%s0 + $0x48] sm:$0xff]
    %v38 = vld [vmem:[%s0 + $0x50] sm:$0xff]
    %v39 = vld [vmem:[%s0 + $0x58] sm:$0xff]
    %v40 = vld [vmem:[%s0 + $0x60] sm:$0xff]
    %v41 = vld [vmem:[%s0 + $0x68] sm:$0xff]
    %v42 = vld [vmem:[%s0 + $0x70] sm:$0xff]
    %v43 = vld [vmem:[%s0 + $0x78] sm:$0xff]
    %v44 = vld [vmem:[%s1] sm:$0xff]
    %v45 = vld [vmem:[%s1 + $0x8] sm:$0xff]
    %vm46 = vcmask 261120
    %v48 = vsel %vm46, %v44, 0
    %v51 = vsel %vm46, %v45, 0
    %53 = vmatprep.subr.mxu0 0.0
    %54 = vmatpush1.msra.mxu0 0.0
    %55 = vmatprep.subr.mxu0 0.0
    %56 = vmatpush1.msra.mxu0 0.0
    %57 = vmatprep.subr.mxu0 0.0
    %58 = vmatpush1.msra.mxu0 0.0
    %59 = vmatprep.subr.mxu0 0.0
    %60 = vmatpush1.msra.mxu0 0.0
    %61 = vmatprep.subr.mxu0 0.0
    %62 = vmatpush1.msra.mxu0 0.0
    %63 = vmatprep.subr.mxu0 0.0
    %64 = vmatpush1.msra.mxu0 0.0
    %65 = vmatprep.subr.mxu0 0.0
    %66 = vmatpush1.msra.mxu0 0.0
    %67 = vmatprep.subr.mxu0 0.0
    %68 = vmatpush1.msra.mxu0 0.0
    %69 = vmatprep.subr.mxu0 0.0
    %70 = vmatpush1.msra.mxu0 0.0
    %71 = vmatprep.subr.mxu0 0.0
    %72 = vmatpush1.msra.mxu0 0.0
    %73 = vmatprep.subr.mxu0 0.0
    %74 = vmatpush1.msra.mxu0 0.0
    %75 = vmatprep.subr.mxu0 0.0
    %76 = vmatpush1.msra.mxu0 0.0
    %77 = vmatprep.subr.mxu0 %v35
    %78 = vmatpush1.msra.mxu0 %v34
    %79 = vmatprep.subr.mxu0 %v33
    %80 = vmatpush1.msra.mxu0 %v32
    %81 = vmatprep.subr.mxu0 %v31
    %82 = vmatpush1.msra.mxu0 %v30
    %83 = vmatprep.subr.mxu0 %v29
    %84 = vmatpush1.msra.mxu0 %v28
    %85 = vmatprep.subr.mxu0 0.0
    %86 = vmatpush2.msra.mxu0 0.0
    %87 = vmatprep.subr.mxu0 0.0
    %88 = vmatpush2.msra.mxu0 0.0
    %89 = vmatprep.subr.mxu0 0.0
    %90 = vmatpush2.msra.mxu0 0.0
    %91 = vmatprep.subr.mxu0 0.0
    %92 = vmatpush2.msra.mxu0 0.0
    %93 = vmatprep.subr.mxu0 0.0
    %94 = vmatpush2.msra.mxu0 0.0
    %95 = vmatprep.subr.mxu0 0.0
    %96 = vmatpush2.msra.mxu0 0.0
    %97 = vmatprep.subr.mxu0 0.0
    %98 = vmatpush2.msra.mxu0 0.0
    %99 = vmatprep.subr.mxu0 0.0
    %100 = vmatpush2.msra.mxu0 0.0
    %101 = vmatprep.subr.mxu0 0.0
    %102 = vmatpush2.msra.mxu0 0.0
    %103 = vmatprep.subr.mxu0 0.0
    %104 = vmatpush2.msra.mxu0 0.0
    %105 = vmatprep.subr.mxu0 0.0
    %106 = vmatpush2.msra.mxu0 0.0
    %107 = vmatprep.subr.mxu0 0.0
    %108 = vmatpush2.msra.mxu0 0.0
    %109 = vmatprep.subr.mxu0 0.0
    %110 = vmatpush2.msra.mxu0 0.0
    %111 = vmatprep.subr.mxu0 0.0
    %112 = vmatpush2.msra.mxu0 0.0
    %113 = vmatprep.subr.mxu0 0.0
    %114 = vmatpush2.msra.mxu0 0.0
    %115 = vmatprep.subr.mxu0 0.0
    %116 = vmatpush2.msra.mxu0 0.0
    %117 = vmatprep.mubr.f32.mxu0 0.0
    %118 = vmatmul.mubr.f32.gmra.mxu0 %v48
    %v119 = vpop.f32.mrf.mxu0
    %v120 = vadd.f32 0.0, %v119
    %v121 = vpop.f32.mrf.mxu0
    %v122 = vadd.f32 0.0, %v121
    %123 = vmatprep.mubr.f32.mxu0 0.0
    %124 = vmatmul.mubr.f32.gmra.mxu0 %v51
    %v125 = vpop.f32.mrf.mxu0
    %v126 = vadd.f32 0.0, %v125
    %v127 = vpop.f32.mrf.mxu0
    %v128 = vadd.f32 0.0, %v127
    %129 = vdwg.mxu0
    %130 = vmatprep.subr.mxu0 0.0
    %131 = vmatpush1.msra.mxu0 0.0
    %132 = vmatprep.subr.mxu0 0.0
    %133 = vmatpush1.msra.mxu0 0.0
    %134 = vmatprep.subr.mxu0 0.0
    %135 = vmatpush1.msra.mxu0 0.0
    %136 = vmatprep.subr.mxu0 0.0
    %137 = vmatpush1.msra.mxu0 0.0
    %138 = vmatprep.subr.mxu0 0.0
    %139 = vmatpush1.msra.mxu0 0.0
    %140 = vmatprep.subr.mxu0 0.0
    %141 = vmatpush1.msra.mxu0 0.0
    %142 = vmatprep.subr.mxu0 0.0
    %143 = vmatpush1.msra.mxu0 0.0
    %144 = vmatprep.subr.mxu0 0.0
    %145 = vmatpush1.msra.mxu0 0.0
    %146 = vmatprep.subr.mxu0 0.0
    %147 = vmatpush1.msra.mxu0 0.0
    %148 = vmatprep.subr.mxu0 0.0
    %149 = vmatpush1.msra.mxu0 0.0
    %150 = vmatprep.subr.mxu0 0.0
    %151 = vmatpush1.msra.mxu0 0.0
    %152 = vmatprep.subr.mxu0 0.0
    %153 = vmatpush1.msra.mxu0 0.0
    %154 = vmatprep.subr.mxu0 %v43
    %155 = vmatpush1.msra.mxu0 %v42
    %156 = vmatprep.subr.mxu0 %v41
    %157 = vmatpush1.msra.mxu0 %v40
    %158 = vmatprep.subr.mxu0 %v39
    %159 = vmatpush1.msra.mxu0 %v38
    %160 = vmatprep.subr.mxu0 %v37
    %161 = vmatpush1.msra.mxu0 %v36
    %162 = vmatprep.subr.mxu0 0.0
    %163 = vmatpush2.msra.mxu0 0.0
    %164 = vmatprep.subr.mxu0 0.0
    %165 = vmatpush2.msra.mxu0 0.0
    %166 = vmatprep.subr.mxu0 0.0
    %167 = vmatpush2.msra.mxu0 0.0
    %168 = vmatprep.subr.mxu0 0.0
    %169 = vmatpush2.msra.mxu0 0.0
    %170 = vmatprep.subr.mxu0 0.0
    %171 = vmatpush2.msra.mxu0 0.0
    %172 = vmatprep.subr.mxu0 0.0
    %173 = vmatpush2.msra.mxu0 0.0
    %174 = vmatprep.subr.mxu0 0.0
    %175 = vmatpush2.msra.mxu0 0.0
    %176 = vmatprep.subr.mxu0 0.0
    %177 = vmatpush2.msra.mxu0 0.0
    %178 = vmatprep.subr.mxu0 0.0
    %179 = vmatpush2.msra.mxu0 0.0
    %180 = vmatprep.subr.mxu0 0.0
    %181 = vmatpush2.msra.mxu0 0.0
    %182 = vmatprep.subr.mxu0 0.0
    %183 = vmatpush2.msra.mxu0 0.0
    %184 = vmatprep.subr.mxu0 0.0
    %185 = vmatpush2.msra.mxu0 0.0
    %186 = vmatprep.subr.mxu0 0.0
    %187 = vmatpush2.msra.mxu0 0.0
    %188 = vmatprep.subr.mxu0 0.0
    %189 = vmatpush2.msra.mxu0 0.0
    %190 = vmatprep.subr.mxu0 0.0
    %191 = vmatpush2.msra.mxu0 0.0
    %192 = vmatprep.subr.mxu0 0.0
    %193 = vmatpush2.msra.mxu0 0.0
    %194 = vmatprep.mubr.f32.mxu0 0.0
    %195 = vmatmul.mubr.f32.gmra.mxu0 %v48
    %v196 = vpop.f32.mrf.mxu0
    %v197 = vadd.f32 0.0, %v196
    %v198 = vpop.f32.mrf.mxu0
    %v199 = vadd.f32 0.0, %v198
    %200 = vmatprep.mubr.f32.mxu0 0.0
    %201 = vmatmul.mubr.f32.gmra.mxu0 %v51
    %v202 = vpop.f32.mrf.mxu0
    %v203 = vadd.f32 0.0, %v202
    %v204 = vpop.f32.mrf.mxu0
    %v205 = vadd.f32 0.0, %v204
    %206 = vdwg.mxu0
    %v207 = vmax.f32 %v120, 0.0
    %v208 = vmax.f32 %v122, 0.0
    %v209 = vmax.f32 %v126, 0.0
    %v210 = vmax.f32 %v128, 0.0
    %v211 = vmax.f32 %v197, 0.0
    %v212 = vmax.f32 %v199, 0.0
    %v213 = vmax.f32 %v203, 0.0
    %v214 = vmax.f32 %v205, 0.0
    %v219 = vrot.slane %v211, 7
    %vm220 = vcmask 1041409
    %v221 = vsel %vm220, %v219, %v207
    %v222 = vrot.slane %v212, 7
    %v223 = vsel %vm220, %v222, %v208
    %v226 = vrot.slane %v207, 1
    %v227 = vsel %vm220, %v211, %v226
    %v228 = vrot.slane %v208, 1
    %v229 = vsel %vm220, %v212, %v228
    %v232 = vrot.slane %v207, 2
    %v233 = vrot.slane %v211, 1
    %v234 = vsel %vm220, %v233, %v232
    %v235 = vrot.slane %v208, 2
    %v236 = vrot.slane %v212, 1
    %v237 = vsel %vm220, %v236, %v235
    %v240 = vrot.slane %v207, 3
    %v241 = vrot.slane %v211, 2
    %v242 = vsel %vm220, %v241, %v240
    %v243 = vrot.slane %v208, 3
    %v244 = vrot.slane %v212, 2
    %v245 = vsel %vm220, %v244, %v243
    %v248 = vrot.slane %v207, 4
    %v249 = vrot.slane %v211, 3
    %v250 = vsel %vm220, %v249, %v248
    %v251 = vrot.slane %v208, 4
    %v252 = vrot.slane %v212, 3
    %v253 = vsel %vm220, %v252, %v251
    %v256 = vrot.slane %v207, 5
    %v257 = vrot.slane %v211, 4
    %v258 = vsel %vm220, %v257, %v256
    %v259 = vrot.slane %v208, 5
    %v260 = vrot.slane %v212, 4
    %v261 = vsel %vm220, %v260, %v259
    %v264 = vrot.slane %v207, 6
    %v265 = vrot.slane %v211, 5
    %v266 = vsel %vm220, %v265, %v264
    %v267 = vrot.slane %v208, 6
    %v268 = vrot.slane %v212, 5
    %v269 = vsel %vm220, %v268, %v267
    %v272 = vrot.slane %v207, 7
    %v273 = vrot.slane %v211, 6
    %v274 = vsel %vm220, %v273, %v272
    %v275 = vrot.slane %v208, 7
    %v276 = vrot.slane %v212, 6
    %v277 = vsel %vm220, %v276, %v275
    %v284 = vrot.slane %v213, 7
    %v285 = vsel %vm220, %v284, %v209
    %v286 = vrot.slane %v214, 7
    %v287 = vsel %vm220, %v286, %v210
    %v290 = vrot.slane %v209, 1
    %v291 = vsel %vm220, %v213, %v290
    %v292 = vrot.slane %v210, 1
    %v293 = vsel %vm220, %v214, %v292
    %v296 = vrot.slane %v209, 2
    %v297 = vrot.slane %v213, 1
    %v298 = vsel %vm220, %v297, %v296
    %v299 = vrot.slane %v210, 2
    %v300 = vrot.slane %v214, 1
    %v301 = vsel %vm220, %v300, %v299
    %v304 = vrot.slane %v209, 3
    %v305 = vrot.slane %v213, 2
    %v306 = vsel %vm220, %v305, %v304
    %v307 = vrot.slane %v210, 3
    %v308 = vrot.slane %v214, 2
    %v309 = vsel %vm220, %v308, %v307
    %v312 = vrot.slane %v209, 4
    %v313 = vrot.slane %v213, 3
    %v314 = vsel %vm220, %v313, %v312
    %v315 = vrot.slane %v210, 4
    %v316 = vrot.slane %v214, 3
    %v317 = vsel %vm220, %v316, %v315
    %v320 = vrot.slane %v209, 5
    %v321 = vrot.slane %v213, 4
    %v322 = vsel %vm220, %v321, %v320
    %v323 = vrot.slane %v210, 5
    %v324 = vrot.slane %v214, 4
    %v325 = vsel %vm220, %v324, %v323
    %v328 = vrot.slane %v209, 6
    %v329 = vrot.slane %v213, 5
    %v330 = vsel %vm220, %v329, %v328
    %v331 = vrot.slane %v210, 6
    %v332 = vrot.slane %v214, 5
    %v333 = vsel %vm220, %v332, %v331
    %v336 = vrot.slane %v209, 7
    %v337 = vrot.slane %v213, 6
    %v338 = vsel %vm220, %v337, %v336
    %v339 = vrot.slane %v210, 7
    %v340 = vrot.slane %v214, 6
    %v341 = vsel %vm220, %v340, %v339
    %v344 = vpack.c.bf16 %v221, %v221
    %v345 = vpack.c.bf16 %v223, %v223
    %v346 = vpack.c.bf16 %v227, %v227
    %v347 = vpack.c.bf16 %v229, %v229
    %v348 = vpack.c.bf16 %v234, %v234
    %v349 = vpack.c.bf16 %v237, %v237
    %v350 = vpack.c.bf16 %v242, %v242
    %v351 = vpack.c.bf16 %v245, %v245
    %v352 = vpack.c.bf16 %v250, %v250
    %v353 = vpack.c.bf16 %v253, %v253
    %v354 = vpack.c.bf16 %v258, %v258
    %v355 = vpack.c.bf16 %v261, %v261
    %v356 = vpack.c.bf16 %v266, %v266
    %v357 = vpack.c.bf16 %v269, %v269
    %v358 = vpack.c.bf16 %v274, %v274
    %v359 = vpack.c.bf16 %v277, %v277
    %v360 = vpack.c.bf16 %v285, %v285
    %v361 = vpack.c.bf16 %v287, %v287
    %v362 = vpack.c.bf16 %v291, %v291
    %v363 = vpack.c.bf16 %v293, %v293
    %v364 = vpack.c.bf16 %v298, %v298
    %v365 = vpack.c.bf16 %v301, %v301
    %v366 = vpack.c.bf16 %v306, %v306
    %v367 = vpack.c.bf16 %v309, %v309
    %v368 = vpack.c.bf16 %v314, %v314
    %v369 = vpack.c.bf16 %v317, %v317
    %v370 = vpack.c.bf16 %v322, %v322
    %v371 = vpack.c.bf16 %v325, %v325
    %v372 = vpack.c.bf16 %v330, %v330
    %v373 = vpack.c.bf16 %v333, %v333
    %v374 = vpack.c.bf16 %v338, %v338
    %v375 = vpack.c.bf16 %v341, %v341
    %v376 = vld [vmem:[%s2] sm:$0xff]
    %v377 = vld [vmem:[%s2 + $0x8] sm:$0xff]
    %v378 = vld [vmem:[%s2 + $0x10] sm:$0xff]
    %v379 = vld [vmem:[%s2 + $0x18] sm:$0xff]
    %v380 = vld [vmem:[%s2 + $0x20] sm:$0xff]
    %v381 = vld [vmem:[%s2 + $0x28] sm:$0xff]
    %v382 = vld [vmem:[%s2 + $0x30] sm:$0xff]
    %v383 = vld [vmem:[%s2 + $0x38] sm:$0xff]
    %v384 = vld [vmem:[%s2 + $0x40] sm:$0xff]
    %v385 = vld [vmem:[%s2 + $0x48] sm:$0xff]
    %v386 = vld [vmem:[%s2 + $0x50] sm:$0xff]
    %v387 = vld [vmem:[%s2 + $0x58] sm:$0xff]
    %v388 = vld [vmem:[%s2 + $0x60] sm:$0xff]
    %v389 = vld [vmem:[%s2 + $0x68] sm:$0xff]
    %v390 = vld [vmem:[%s2 + $0x70] sm:$0xff]
    %v391 = vld [vmem:[%s2 + $0x78] sm:$0xff]
    %v392 = vld [vmem:[%s2 + $0x80] sm:$0xff]
    %v393 = vld [vmem:[%s2 + $0x88] sm:$0xff]
    %v394 = vld [vmem:[%s2 + $0x90] sm:$0xff]
    %v395 = vld [vmem:[%s2 + $0x98] sm:$0xff]
    %v396 = vld [vmem:[%s2 + $0xa0] sm:$0xff]
    %v397 = vld [vmem:[%s2 + $0xa8] sm:$0xff]
    %v398 = vld [vmem:[%s2 + $0xb0] sm:$0xff]
    %v399 = vld [vmem:[%s2 + $0xb8] sm:$0xff]
    %v400 = vld [vmem:[%s2 + $0xc0] sm:$0xff]
    %v401 = vld [vmem:[%s2 + $0xc8] sm:$0xff]
    %v402 = vld [vmem:[%s2 + $0xd0] sm:$0xff]
    %v403 = vld [vmem:[%s2 + $0xd8] sm:$0xff]
    %v404 = vld [vmem:[%s2 + $0xe0] sm:$0xff]
    %v405 = vld [vmem:[%s2 + $0xe8] sm:$0xff]
    %v406 = vld [vmem:[%s2 + $0xf0] sm:$0xff]
    %v407 = vld [vmem:[%s2 + $0xf8] sm:$0xff]
    %v408 = vld [vmem:[%s2 + $0x100] sm:$0xff]
    %v409 = vld [vmem:[%s2 + $0x108] sm:$0xff]
    %v410 = vld [vmem:[%s2 + $0x110] sm:$0xff]
    %v411 = vld [vmem:[%s2 + $0x118] sm:$0xff]
    %v412 = vld [vmem:[%s2 + $0x120] sm:$0xff]
    %v413 = vld [vmem:[%s2 + $0x128] sm:$0xff]
    %v414 = vld [vmem:[%s2 + $0x130] sm:$0xff]
    %v415 = vld [vmem:[%s2 + $0x138] sm:$0xff]
    %v416 = vld [vmem:[%s2 + $0x140] sm:$0xff]
    %v417 = vld [vmem:[%s2 + $0x148] sm:$0xff]
    %v418 = vld [vmem:[%s2 + $0x150] sm:$0xff]
    %v419 = vld [vmem:[%s2 + $0x158] sm:$0xff]
    %v420 = vld [vmem:[%s2 + $0x160] sm:$0xff]
    %v421 = vld [vmem:[%s2 + $0x168] sm:$0xff]
    %v422 = vld [vmem:[%s2 + $0x170] sm:$0xff]
    %v423 = vld [vmem:[%s2 + $0x178] sm:$0xff]
    %v424 = vld [vmem:[%s2 + $0x180] sm:$0xff]
    %v425 = vld [vmem:[%s2 + $0x188] sm:$0xff]
    %v426 = vld [vmem:[%s2 + $0x190] sm:$0xff]
    %v427 = vld [vmem:[%s2 + $0x198] sm:$0xff]
    %v428 = vld [vmem:[%s2 + $0x1a0] sm:$0xff]
    %v429 = vld [vmem:[%s2 + $0x1a8] sm:$0xff]
    %v430 = vld [vmem:[%s2 + $0x1b0] sm:$0xff]
    %v431 = vld [vmem:[%s2 + $0x1b8] sm:$0xff]
    %v432 = vld [vmem:[%s2 + $0x1c0] sm:$0xff]
    %v433 = vld [vmem:[%s2 + $0x1c8] sm:$0xff]
    %v434 = vld [vmem:[%s2 + $0x1d0] sm:$0xff]
    %v435 = vld [vmem:[%s2 + $0x1d8] sm:$0xff]
    %v436 = vld [vmem:[%s2 + $0x1e0] sm:$0xff]
    %v437 = vld [vmem:[%s2 + $0x1e8] sm:$0xff]
    %v438 = vld [vmem:[%s2 + $0x1f0] sm:$0xff]
    %v439 = vld [vmem:[%s2 + $0x1f8] sm:$0xff]
    %v440 = vld [vmem:[%s2 + $0x200] sm:$0xff]
    %v441 = vld [vmem:[%s2 + $0x208] sm:$0xff]
    %v442 = vld [vmem:[%s2 + $0x210] sm:$0xff]
    %v443 = vld [vmem:[%s2 + $0x218] sm:$0xff]
    %v444 = vld [vmem:[%s2 + $0x220] sm:$0xff]
    %v445 = vld [vmem:[%s2 + $0x228] sm:$0xff]
    %v446 = vld [vmem:[%s2 + $0x230] sm:$0xff]
    %v447 = vld [vmem:[%s2 + $0x238] sm:$0xff]
    %v448 = vld [vmem:[%s2 + $0x240] sm:$0xff]
    %v449 = vld [vmem:[%s2 + $0x248] sm:$0xff]
    %v450 = vld [vmem:[%s2 + $0x250] sm:$0xff]
    %v451 = vld [vmem:[%s2 + $0x258] sm:$0xff]
    %v452 = vld [vmem:[%s2 + $0x260] sm:$0xff]
    %v453 = vld [vmem:[%s2 + $0x268] sm:$0xff]
    %v454 = vld [vmem:[%s2 + $0x270] sm:$0xff]
    %v455 = vld [vmem:[%s2 + $0x278] sm:$0xff]
    %v456 = vld [vmem:[%s2 + $0x280] sm:$0xff]
    %v457 = vld [vmem:[%s2 + $0x288] sm:$0xff]
    %v458 = vld [vmem:[%s2 + $0x290] sm:$0xff]
    %v459 = vld [vmem:[%s2 + $0x298] sm:$0xff]
    %v460 = vld [vmem:[%s2 + $0x2a0] sm:$0xff]
    %v461 = vld [vmem:[%s2 + $0x2a8] sm:$0xff]
    %v462 = vld [vmem:[%s2 + $0x2b0] sm:$0xff]
    %v463 = vld [vmem:[%s2 + $0x2b8] sm:$0xff]
    %v464 = vld [vmem:[%s2 + $0x2c0] sm:$0xff]
    %v465 = vld [vmem:[%s2 + $0x2c8] sm:$0xff]
    %v466 = vld [vmem:[%s2 + $0x2d0] sm:$0xff]
    %v467 = vld [vmem:[%s2 + $0x2d8] sm:$0xff]
    %v468 = vld [vmem:[%s2 + $0x2e0] sm:$0xff]
    %v469 = vld [vmem:[%s2 + $0x2e8] sm:$0xff]
    %v470 = vld [vmem:[%s2 + $0x2f0] sm:$0xff]
    %v471 = vld [vmem:[%s2 + $0x2f8] sm:$0xff]
    %v472 = vld [vmem:[%s2 + $0x300] sm:$0xff]
    %v473 = vld [vmem:[%s2 + $0x308] sm:$0xff]
    %v474 = vld [vmem:[%s2 + $0x310] sm:$0xff]
    %v475 = vld [vmem:[%s2 + $0x318] sm:$0xff]
    %v476 = vld [vmem:[%s2 + $0x320] sm:$0xff]
    %v477 = vld [vmem:[%s2 + $0x328] sm:$0xff]
    %v478 = vld [vmem:[%s2 + $0x330] sm:$0xff]
    %v479 = vld [vmem:[%s2 + $0x338] sm:$0xff]
    %v480 = vld [vmem:[%s2 + $0x340] sm:$0xff]
    %v481 = vld [vmem:[%s2 + $0x348] sm:$0xff]
    %v482 = vld [vmem:[%s2 + $0x350] sm:$0xff]
    %v483 = vld [vmem:[%s2 + $0x358] sm:$0xff]
    %v484 = vld [vmem:[%s2 + $0x360] sm:$0xff]
    %v485 = vld [vmem:[%s2 + $0x368] sm:$0xff]
    %v486 = vld [vmem:[%s2 + $0x370] sm:$0xff]
    %v487 = vld [vmem:[%s2 + $0x378] sm:$0xff]
    %v488 = vld [vmem:[%s2 + $0x380] sm:$0xff]
    %v489 = vld [vmem:[%s2 + $0x388] sm:$0xff]
    %v490 = vld [vmem:[%s2 + $0x390] sm:$0xff]
    %v491 = vld [vmem:[%s2 + $0x398] sm:$0xff]
    %v492 = vld [vmem:[%s2 + $0x3a0] sm:$0xff]
    %v493 = vld [vmem:[%s2 + $0x3a8] sm:$0xff]
    %v494 = vld [vmem:[%s2 + $0x3b0] sm:$0xff]
    %v495 = vld [vmem:[%s2 + $0x3b8] sm:$0xff]
    %v496 = vld [vmem:[%s2 + $0x3c0] sm:$0xff]
    %v497 = vld [vmem:[%s2 + $0x3c8] sm:$0xff]
    %v498 = vld [vmem:[%s2 + $0x3d0] sm:$0xff]
    %v499 = vld [vmem:[%s2 + $0x3d8] sm:$0xff]
    %v500 = vld [vmem:[%s2 + $0x3e0] sm:$0xff]
    %v501 = vld [vmem:[%s2 + $0x3e8] sm:$0xff]
    %v502 = vld [vmem:[%s2 + $0x3f0] sm:$0xff]
    %v503 = vld [vmem:[%s2 + $0x3f8] sm:$0xff]
    %v504 = vld [vmem:[%s2 + $0x400] sm:$0xff]
    %v505 = vld [vmem:[%s2 + $0x408] sm:$0xff]
    %v506 = vld [vmem:[%s2 + $0x410] sm:$0xff]
    %v507 = vld [vmem:[%s2 + $0x418] sm:$0xff]
    %v508 = vld [vmem:[%s2 + $0x420] sm:$0xff]
    %v509 = vld [vmem:[%s2 + $0x428] sm:$0xff]
    %v510 = vld [vmem:[%s2 + $0x430] sm:$0xff]
    %v511 = vld [vmem:[%s2 + $0x438] sm:$0xff]
    %v512 = vld [vmem:[%s2 + $0x440] sm:$0xff]
    %v513 = vld [vmem:[%s2 + $0x448] sm:$0xff]
    %v514 = vld [vmem:[%s2 + $0x450] sm:$0xff]
    %v515 = vld [vmem:[%s2 + $0x458] sm:$0xff]
    %v516 = vld [vmem:[%s2 + $0x460] sm:$0xff]
    %v517 = vld [vmem:[%s2 + $0x468] sm:$0xff]
    %v518 = vld [vmem:[%s2 + $0x470] sm:$0xff]
    %v519 = vld [vmem:[%s2 + $0x478] sm:$0xff]
    %v520 = vld [vmem:[%s2 + $0x480] sm:$0xff]
    %v521 = vld [vmem:[%s2 + $0x488] sm:$0xff]
    %v522 = vld [vmem:[%s2 + $0x490] sm:$0xff]
    %v523 = vld [vmem:[%s2 + $0x498] sm:$0xff]
    %v524 = vld [vmem:[%s2 + $0x4a0] sm:$0xff]
    %v525 = vld [vmem:[%s2 + $0x4a8] sm:$0xff]
    %v526 = vld [vmem:[%s2 + $0x4b0] sm:$0xff]
    %v527 = vld [vmem:[%s2 + $0x4b8] sm:$0xff]
    %v528 = vld [vmem:[%s2 + $0x4c0] sm:$0xff]
    %v529 = vld [vmem:[%s2 + $0x4c8] sm:$0xff]
    %v530 = vld [vmem:[%s2 + $0x4d0] sm:$0xff]
    %v531 = vld [vmem:[%s2 + $0x4d8] sm:$0xff]
    %v532 = vld [vmem:[%s2 + $0x4e0] sm:$0xff]
    %v533 = vld [vmem:[%s2 + $0x4e8] sm:$0xff]
    %v534 = vld [vmem:[%s2 + $0x4f0] sm:$0xff]
    %v535 = vld [vmem:[%s2 + $0x4f8] sm:$0xff]
    %v536 = vld [vmem:[%s2 + $0x500] sm:$0xff]
    %v537 = vld [vmem:[%s2 + $0x508] sm:$0xff]
    %v538 = vld [vmem:[%s2 + $0x510] sm:$0xff]
    %v539 = vld [vmem:[%s2 + $0x518] sm:$0xff]
    %v540 = vld [vmem:[%s2 + $0x520] sm:$0xff]
    %v541 = vld [vmem:[%s2 + $0x528] sm:$0xff]
    %v542 = vld [vmem:[%s2 + $0x530] sm:$0xff]
    %v543 = vld [vmem:[%s2 + $0x538] sm:$0xff]
    %v544 = vld [vmem:[%s2 + $0x540] sm:$0xff]
    %v545 = vld [vmem:[%s2 + $0x548] sm:$0xff]
    %v546 = vld [vmem:[%s2 + $0x550] sm:$0xff]
    %v547 = vld [vmem:[%s2 + $0x558] sm:$0xff]
    %v548 = vld [vmem:[%s2 + $0x560] sm:$0xff]
    %v549 = vld [vmem:[%s2 + $0x568] sm:$0xff]
    %v550 = vld [vmem:[%s2 + $0x570] sm:$0xff]
    %v551 = vld [vmem:[%s2 + $0x578] sm:$0xff]
    %v552 = vld [vmem:[%s2 + $0x580] sm:$0xff]
    %v553 = vld [vmem:[%s2 + $0x588] sm:$0xff]
    %v554 = vld [vmem:[%s2 + $0x590] sm:$0xff]
    %v555 = vld [vmem:[%s2 + $0x598] sm:$0xff]
    %v556 = vld [vmem:[%s2 + $0x5a0] sm:$0xff]
    %v557 = vld [vmem:[%s2 + $0x5a8] sm:$0xff]
    %v558 = vld [vmem:[%s2 + $0x5b0] sm:$0xff]
    %v559 = vld [vmem:[%s2 + $0x5b8] sm:$0xff]
    %v560 = vld [vmem:[%s2 + $0x5c0] sm:$0xff]
    %v561 = vld [vmem:[%s2 + $0x5c8] sm:$0xff]
    %v562 = vld [vmem:[%s2 + $0x5d0] sm:$0xff]
    %v563 = vld [vmem:[%s2 + $0x5d8] sm:$0xff]
    %v564 = vld [vmem:[%s2 + $0x5e0] sm:$0xff]
    %v565 = vld [vmem:[%s2 + $0x5e8] sm:$0xff]
    %v566 = vld [vmem:[%s2 + $0x5f0] sm:$0xff]
    %v567 = vld [vmem:[%s2 + $0x5f8] sm:$0xff]
    %v568 = vld [vmem:[%s2 + $0x600] sm:$0xff]
    %v569 = vld [vmem:[%s2 + $0x608] sm:$0xff]
    %v570 = vld [vmem:[%s2 + $0x610] sm:$0xff]
    %v571 = vld [vmem:[%s2 + $0x618] sm:$0xff]
    %v572 = vld [vmem:[%s2 + $0x620] sm:$0xff]
    %v573 = vld [vmem:[%s2 + $0x628] sm:$0xff]
    %v574 = vld [vmem:[%s2 + $0x630] sm:$0xff]
    %v575 = vld [vmem:[%s2 + $0x638] sm:$0xff]
    %v576 = vld [vmem:[%s2 + $0x640] sm:$0xff]
    %v577 = vld [vmem:[%s2 + $0x648] sm:$0xff]
    %v578 = vld [vmem:[%s2 + $0x650] sm:$0xff]
    %v579 = vld [vmem:[%s2 + $0x658] sm:$0xff]
    %v580 = vld [vmem:[%s2 + $0x660] sm:$0xff]
    %v581 = vld [vmem:[%s2 + $0x668] sm:$0xff]
    %v582 = vld [vmem:[%s2 + $0x670] sm:$0xff]
    %v583 = vld [vmem:[%s2 + $0x678] sm:$0xff]
    %v584 = vld [vmem:[%s2 + $0x680] sm:$0xff]
    %v585 = vld [vmem:[%s2 + $0x688] sm:$0xff]
    %v586 = vld [vmem:[%s2 + $0x690] sm:$0xff]
    %v587 = vld [vmem:[%s2 + $0x698] sm:$0xff]
    %v588 = vld [vmem:[%s2 + $0x6a0] sm:$0xff]
    %v589 = vld [vmem:[%s2 + $0x6a8] sm:$0xff]
    %v590 = vld [vmem:[%s2 + $0x6b0] sm:$0xff]
    %v591 = vld [vmem:[%s2 + $0x6b8] sm:$0xff]
    %v592 = vld [vmem:[%s2 + $0x6c0] sm:$0xff]
    %v593 = vld [vmem:[%s2 + $0x6c8] sm:$0xff]
    %v594 = vld [vmem:[%s2 + $0x6d0] sm:$0xff]
    %v595 = vld [vmem:[%s2 + $0x6d8] sm:$0xff]
    %v596 = vld [vmem:[%s2 + $0x6e0] sm:$0xff]
    %v597 = vld [vmem:[%s2 + $0x6e8] sm:$0xff]
    %v598 = vld [vmem:[%s2 + $0x6f0] sm:$0xff]
    %v599 = vld [vmem:[%s2 + $0x6f8] sm:$0xff]
    %v600 = vld [vmem:[%s2 + $0x700] sm:$0xff]
    %v601 = vld [vmem:[%s2 + $0x708] sm:$0xff]
    %v602 = vld [vmem:[%s2 + $0x710] sm:$0xff]
    %v603 = vld [vmem:[%s2 + $0x718] sm:$0xff]
    %v604 = vld [vmem:[%s2 + $0x720] sm:$0xff]
    %v605 = vld [vmem:[%s2 + $0x728] sm:$0xff]
    %v606 = vld [vmem:[%s2 + $0x730] sm:$0xff]
    %v607 = vld [vmem:[%s2 + $0x738] sm:$0xff]
    %v608 = vld [vmem:[%s2 + $0x740] sm:$0xff]
    %v609 = vld [vmem:[%s2 + $0x748] sm:$0xff]
    %v610 = vld [vmem:[%s2 + $0x750] sm:$0xff]
    %v611 = vld [vmem:[%s2 + $0x758] sm:$0xff]
    %v612 = vld [vmem:[%s2 + $0x760] sm:$0xff]
    %v613 = vld [vmem:[%s2 + $0x768] sm:$0xff]
    %v614 = vld [vmem:[%s2 + $0x770] sm:$0xff]
    %v615 = vld [vmem:[%s2 + $0x778] sm:$0xff]
    %v616 = vld [vmem:[%s2 + $0x780] sm:$0xff]
    %v617 = vld [vmem:[%s2 + $0x788] sm:$0xff]
    %v618 = vld [vmem:[%s2 + $0x790] sm:$0xff]
    %v619 = vld [vmem:[%s2 + $0x798] sm:$0xff]
    %v620 = vld [vmem:[%s2 + $0x7a0] sm:$0xff]
    %v621 = vld [vmem:[%s2 + $0x7a8] sm:$0xff]
    %v622 = vld [vmem:[%s2 + $0x7b0] sm:$0xff]
    %v623 = vld [vmem:[%s2 + $0x7b8] sm:$0xff]
    %v624 = vld [vmem:[%s2 + $0x7c0] sm:$0xff]
    %v625 = vld [vmem:[%s2 + $0x7c8] sm:$0xff]
    %v626 = vld [vmem:[%s2 + $0x7d0] sm:$0xff]
    %v627 = vld [vmem:[%s2 + $0x7d8] sm:$0xff]
    %v628 = vld [vmem:[%s2 + $0x7e0] sm:$0xff]
    %v629 = vld [vmem:[%s2 + $0x7e8] sm:$0xff]
    %v630 = vld [vmem:[%s2 + $0x7f0] sm:$0xff]
    %v631 = vld [vmem:[%s2 + $0x7f8] sm:$0xff]
    %v632 = vld [vmem:[%s2 + $0x800] sm:$0xff]
    %v633 = vld [vmem:[%s2 + $0x808] sm:$0xff]
    %v634 = vld [vmem:[%s2 + $0x810] sm:$0xff]
    %v635 = vld [vmem:[%s2 + $0x818] sm:$0xff]
    %v636 = vld [vmem:[%s2 + $0x820] sm:$0xff]
    %v637 = vld [vmem:[%s2 + $0x828] sm:$0xff]
    %v638 = vld [vmem:[%s2 + $0x830] sm:$0xff]
    %v639 = vld [vmem:[%s2 + $0x838] sm:$0xff]
    %v640 = vld [vmem:[%s2 + $0x840] sm:$0xff]
    %v641 = vld [vmem:[%s2 + $0x848] sm:$0xff]
    %v642 = vld [vmem:[%s2 + $0x850] sm:$0xff]
    %v643 = vld [vmem:[%s2 + $0x858] sm:$0xff]
    %v644 = vld [vmem:[%s2 + $0x860] sm:$0xff]
    %v645 = vld [vmem:[%s2 + $0x868] sm:$0xff]
    %v646 = vld [vmem:[%s2 + $0x870] sm:$0xff]
    %v647 = vld [vmem:[%s2 + $0x878] sm:$0xff]
    %v648 = vld [vmem:[%s2 + $0x880] sm:$0xff]
    %v649 = vld [vmem:[%s2 + $0x888] sm:$0xff]
    %v650 = vld [vmem:[%s2 + $0x890] sm:$0xff]
    %v651 = vld [vmem:[%s2 + $0x898] sm:$0xff]
    %v652 = vld [vmem:[%s2 + $0x8a0] sm:$0xff]
    %v653 = vld [vmem:[%s2 + $0x8a8] sm:$0xff]
    %v654 = vld [vmem:[%s2 + $0x8b0] sm:$0xff]
    %v655 = vld [vmem:[%s2 + $0x8b8] sm:$0xff]
    %v656 = vld [vmem:[%s2 + $0x8c0] sm:$0xff]
    %v657 = vld [vmem:[%s2 + $0x8c8] sm:$0xff]
    %v658 = vld [vmem:[%s2 + $0x8d0] sm:$0xff]
    %v659 = vld [vmem:[%s2 + $0x8d8] sm:$0xff]
    %v660 = vld [vmem:[%s2 + $0x8e0] sm:$0xff]
    %v661 = vld [vmem:[%s2 + $0x8e8] sm:$0xff]
    %v662 = vld [vmem:[%s2 + $0x8f0] sm:$0xff]
    %v663 = vld [vmem:[%s2 + $0x8f8] sm:$0xff]
    %v664 = vld [vmem:[%s2 + $0x900] sm:$0xff]
    %v665 = vld [vmem:[%s2 + $0x908] sm:$0xff]
    %v666 = vld [vmem:[%s2 + $0x910] sm:$0xff]
    %v667 = vld [vmem:[%s2 + $0x918] sm:$0xff]
    %v668 = vld [vmem:[%s2 + $0x920] sm:$0xff]
    %v669 = vld [vmem:[%s2 + $0x928] sm:$0xff]
    %v670 = vld [vmem:[%s2 + $0x930] sm:$0xff]
    %v671 = vld [vmem:[%s2 + $0x938] sm:$0xff]
    %v672 = vld [vmem:[%s2 + $0x940] sm:$0xff]
    %v673 = vld [vmem:[%s2 + $0x948] sm:$0xff]
    %v674 = vld [vmem:[%s2 + $0x950] sm:$0xff]
    %v675 = vld [vmem:[%s2 + $0x958] sm:$0xff]
    %v676 = vld [vmem:[%s2 + $0x960] sm:$0xff]
    %v677 = vld [vmem:[%s2 + $0x968] sm:$0xff]
    %v678 = vld [vmem:[%s2 + $0x970] sm:$0xff]
    %v679 = vld [vmem:[%s2 + $0x978] sm:$0xff]
    %v680 = vld [vmem:[%s2 + $0x980] sm:$0xff]
    %v681 = vld [vmem:[%s2 + $0x988] sm:$0xff]
    %v682 = vld [vmem:[%s2 + $0x990] sm:$0xff]
    %v683 = vld [vmem:[%s2 + $0x998] sm:$0xff]
    %v684 = vld [vmem:[%s2 + $0x9a0] sm:$0xff]
    %v685 = vld [vmem:[%s2 + $0x9a8] sm:$0xff]
    %v686 = vld [vmem:[%s2 + $0x9b0] sm:$0xff]
    %v687 = vld [vmem:[%s2 + $0x9b8] sm:$0xff]
    %v688 = vld [vmem:[%s2 + $0x9c0] sm:$0xff]
    %v689 = vld [vmem:[%s2 + $0x9c8] sm:$0xff]
    %v690 = vld [vmem:[%s2 + $0x9d0] sm:$0xff]
    %v691 = vld [vmem:[%s2 + $0x9d8] sm:$0xff]
    %v692 = vld [vmem:[%s2 + $0x9e0] sm:$0xff]
    %v693 = vld [vmem:[%s2 + $0x9e8] sm:$0xff]
    %v694 = vld [vmem:[%s2 + $0x9f0] sm:$0xff]
    %v695 = vld [vmem:[%s2 + $0x9f8] sm:$0xff]
    %v696 = vld [vmem:[%s2 + $0xa00] sm:$0xff]
    %v697 = vld [vmem:[%s2 + $0xa08] sm:$0xff]
    %v698 = vld [vmem:[%s2 + $0xa10] sm:$0xff]
    %v699 = vld [vmem:[%s2 + $0xa18] sm:$0xff]
    %v700 = vld [vmem:[%s2 + $0xa20] sm:$0xff]
    %v701 = vld [vmem:[%s2 + $0xa28] sm:$0xff]
    %v702 = vld [vmem:[%s2 + $0xa30] sm:$0xff]
    %v703 = vld [vmem:[%s2 + $0xa38] sm:$0xff]
    %v704 = vld [vmem:[%s2 + $0xa40] sm:$0xff]
    %v705 = vld [vmem:[%s2 + $0xa48] sm:$0xff]
    %v706 = vld [vmem:[%s2 + $0xa50] sm:$0xff]
    %v707 = vld [vmem:[%s2 + $0xa58] sm:$0xff]
    %v708 = vld [vmem:[%s2 + $0xa60] sm:$0xff]
    %v709 = vld [vmem:[%s2 + $0xa68] sm:$0xff]
    %v710 = vld [vmem:[%s2 + $0xa70] sm:$0xff]
    %v711 = vld [vmem:[%s2 + $0xa78] sm:$0xff]
    %v712 = vld [vmem:[%s2 + $0xa80] sm:$0xff]
    %v713 = vld [vmem:[%s2 + $0xa88] sm:$0xff]
    %v714 = vld [vmem:[%s2 + $0xa90] sm:$0xff]
    %v715 = vld [vmem:[%s2 + $0xa98] sm:$0xff]
    %v716 = vld [vmem:[%s2 + $0xaa0] sm:$0xff]
    %v717 = vld [vmem:[%s2 + $0xaa8] sm:$0xff]
    %v718 = vld [vmem:[%s2 + $0xab0] sm:$0xff]
    %v719 = vld [vmem:[%s2 + $0xab8] sm:$0xff]
    %v720 = vld [vmem:[%s2 + $0xac0] sm:$0xff]
    %v721 = vld [vmem:[%s2 + $0xac8] sm:$0xff]
    %v722 = vld [vmem:[%s2 + $0xad0] sm:$0xff]
    %v723 = vld [vmem:[%s2 + $0xad8] sm:$0xff]
    %v724 = vld [vmem:[%s2 + $0xae0] sm:$0xff]
    %v725 = vld [vmem:[%s2 + $0xae8] sm:$0xff]
    %v726 = vld [vmem:[%s2 + $0xaf0] sm:$0xff]
    %v727 = vld [vmem:[%s2 + $0xaf8] sm:$0xff]
    %v728 = vld [vmem:[%s2 + $0xb00] sm:$0xff]
    %v729 = vld [vmem:[%s2 + $0xb08] sm:$0xff]
    %v730 = vld [vmem:[%s2 + $0xb10] sm:$0xff]
    %v731 = vld [vmem:[%s2 + $0xb18] sm:$0xff]
    %v732 = vld [vmem:[%s2 + $0xb20] sm:$0xff]
    %v733 = vld [vmem:[%s2 + $0xb28] sm:$0xff]
    %v734 = vld [vmem:[%s2 + $0xb30] sm:$0xff]
    %v735 = vld [vmem:[%s2 + $0xb38] sm:$0xff]
    %v736 = vld [vmem:[%s2 + $0xb40] sm:$0xff]
    %v737 = vld [vmem:[%s2 + $0xb48] sm:$0xff]
    %v738 = vld [vmem:[%s2 + $0xb50] sm:$0xff]
    %v739 = vld [vmem:[%s2 + $0xb58] sm:$0xff]
    %v740 = vld [vmem:[%s2 + $0xb60] sm:$0xff]
    %v741 = vld [vmem:[%s2 + $0xb68] sm:$0xff]
    %v742 = vld [vmem:[%s2 + $0xb70] sm:$0xff]
    %v743 = vld [vmem:[%s2 + $0xb78] sm:$0xff]
    %v744 = vld [vmem:[%s2 + $0xb80] sm:$0xff]
    %v745 = vld [vmem:[%s2 + $0xb88] sm:$0xff]
    %v746 = vld [vmem:[%s2 + $0xb90] sm:$0xff]
    %v747 = vld [vmem:[%s2 + $0xb98] sm:$0xff]
    %v748 = vld [vmem:[%s2 + $0xba0] sm:$0xff]
    %v749 = vld [vmem:[%s2 + $0xba8] sm:$0xff]
    %v750 = vld [vmem:[%s2 + $0xbb0] sm:$0xff]
    %v751 = vld [vmem:[%s2 + $0xbb8] sm:$0xff]
    %v752 = vld [vmem:[%s2 + $0xbc0] sm:$0xff]
    %v753 = vld [vmem:[%s2 + $0xbc8] sm:$0xff]
    %v754 = vld [vmem:[%s2 + $0xbd0] sm:$0xff]
    %v755 = vld [vmem:[%s2 + $0xbd8] sm:$0xff]
    %v756 = vld [vmem:[%s2 + $0xbe0] sm:$0xff]
    %v757 = vld [vmem:[%s2 + $0xbe8] sm:$0xff]
    %v758 = vld [vmem:[%s2 + $0xbf0] sm:$0xff]
    %v759 = vld [vmem:[%s2 + $0xbf8] sm:$0xff]
    %v760 = vld [vmem:[%s2 + $0xc00] sm:$0xff]
    %v761 = vld [vmem:[%s2 + $0xc08] sm:$0xff]
    %v762 = vld [vmem:[%s2 + $0xc10] sm:$0xff]
    %v763 = vld [vmem:[%s2 + $0xc18] sm:$0xff]
    %v764 = vld [vmem:[%s2 + $0xc20] sm:$0xff]
    %v765 = vld [vmem:[%s2 + $0xc28] sm:$0xff]
    %v766 = vld [vmem:[%s2 + $0xc30] sm:$0xff]
    %v767 = vld [vmem:[%s2 + $0xc38] sm:$0xff]
    %v768 = vld [vmem:[%s2 + $0xc40] sm:$0xff]
    %v769 = vld [vmem:[%s2 + $0xc48] sm:$0xff]
    %v770 = vld [vmem:[%s2 + $0xc50] sm:$0xff]
    %v771 = vld [vmem:[%s2 + $0xc58] sm:$0xff]
    %v772 = vld [vmem:[%s2 + $0xc60] sm:$0xff]
    %v773 = vld [vmem:[%s2 + $0xc68] sm:$0xff]
    %v774 = vld [vmem:[%s2 + $0xc70] sm:$0xff]
    %v775 = vld [vmem:[%s2 + $0xc78] sm:$0xff]
    %v776 = vld [vmem:[%s2 + $0xc80] sm:$0xff]
    %v777 = vld [vmem:[%s2 + $0xc88] sm:$0xff]
    %v778 = vld [vmem:[%s2 + $0xc90] sm:$0xff]
    %v779 = vld [vmem:[%s2 + $0xc98] sm:$0xff]
    %v780 = vld [vmem:[%s2 + $0xca0] sm:$0xff]
    %v781 = vld [vmem:[%s2 + $0xca8] sm:$0xff]
    %v782 = vld [vmem:[%s2 + $0xcb0] sm:$0xff]
    %v783 = vld [vmem:[%s2 + $0xcb8] sm:$0xff]
    %v784 = vld [vmem:[%s2 + $0xcc0] sm:$0xff]
    %v785 = vld [vmem:[%s2 + $0xcc8] sm:$0xff]
    %v786 = vld [vmem:[%s2 + $0xcd0] sm:$0xff]
    %v787 = vld [vmem:[%s2 + $0xcd8] sm:$0xff]
    %v788 = vld [vmem:[%s2 + $0xce0] sm:$0xff]
    %v789 = vld [vmem:[%s2 + $0xce8] sm:$0xff]
    %v790 = vld [vmem:[%s2 + $0xcf0] sm:$0xff]
    %v791 = vld [vmem:[%s2 + $0xcf8] sm:$0xff]
    %v792 = vld [vmem:[%s2 + $0xd00] sm:$0xff]
    %v793 = vld [vmem:[%s2 + $0xd08] sm:$0xff]
    %v794 = vld [vmem:[%s2 + $0xd10] sm:$0xff]
    %v795 = vld [vmem:[%s2 + $0xd18] sm:$0xff]
    %v796 = vld [vmem:[%s2 + $0xd20] sm:$0xff]
    %v797 = vld [vmem:[%s2 + $0xd28] sm:$0xff]
    %v798 = vld [vmem:[%s2 + $0xd30] sm:$0xff]
    %v799 = vld [vmem:[%s2 + $0xd38] sm:$0xff]
    %v800 = vld [vmem:[%s2 + $0xd40] sm:$0xff]
    %v801 = vld [vmem:[%s2 + $0xd48] sm:$0xff]
    %v802 = vld [vmem:[%s2 + $0xd50] sm:$0xff]
    %v803 = vld [vmem:[%s2 + $0xd58] sm:$0xff]
    %v804 = vld [vmem:[%s2 + $0xd60] sm:$0xff]
    %v805 = vld [vmem:[%s2 + $0xd68] sm:$0xff]
    %v806 = vld [vmem:[%s2 + $0xd70] sm:$0xff]
    %v807 = vld [vmem:[%s2 + $0xd78] sm:$0xff]
    %v808 = vld [vmem:[%s2 + $0xd80] sm:$0xff]
    %v809 = vld [vmem:[%s2 + $0xd88] sm:$0xff]
    %v810 = vld [vmem:[%s2 + $0xd90] sm:$0xff]
    %v811 = vld [vmem:[%s2 + $0xd98] sm:$0xff]
    %v812 = vld [vmem:[%s2 + $0xda0] sm:$0xff]
    %v813 = vld [vmem:[%s2 + $0xda8] sm:$0xff]
    %v814 = vld [vmem:[%s2 + $0xdb0] sm:$0xff]
    %v815 = vld [vmem:[%s2 + $0xdb8] sm:$0xff]
    %v816 = vld [vmem:[%s2 + $0xdc0] sm:$0xff]
    %v817 = vld [vmem:[%s2 + $0xdc8] sm:$0xff]
    %v818 = vld [vmem:[%s2 + $0xdd0] sm:$0xff]
    %v819 = vld [vmem:[%s2 + $0xdd8] sm:$0xff]
    %v820 = vld [vmem:[%s2 + $0xde0] sm:$0xff]
    %v821 = vld [vmem:[%s2 + $0xde8] sm:$0xff]
    %v822 = vld [vmem:[%s2 + $0xdf0] sm:$0xff]
    %v823 = vld [vmem:[%s2 + $0xdf8] sm:$0xff]
    %v824 = vld [vmem:[%s2 + $0xe00] sm:$0xff]
    %v825 = vld [vmem:[%s2 + $0xe08] sm:$0xff]
    %v826 = vld [vmem:[%s2 + $0xe10] sm:$0xff]
    %v827 = vld [vmem:[%s2 + $0xe18] sm:$0xff]
    %v828 = vld [vmem:[%s2 + $0xe20] sm:$0xff]
    %v829 = vld [vmem:[%s2 + $0xe28] sm:$0xff]
    %v830 = vld [vmem:[%s2 + $0xe30] sm:$0xff]
    %v831 = vld [vmem:[%s2 + $0xe38] sm:$0xff]
    %v832 = vld [vmem:[%s2 + $0xe40] sm:$0xff]
    %v833 = vld [vmem:[%s2 + $0xe48] sm:$0xff]
    %v834 = vld [vmem:[%s2 + $0xe50] sm:$0xff]
    %v835 = vld [vmem:[%s2 + $0xe58] sm:$0xff]
    %v836 = vld [vmem:[%s2 + $0xe60] sm:$0xff]
    %v837 = vld [vmem:[%s2 + $0xe68] sm:$0xff]
    %v838 = vld [vmem:[%s2 + $0xe70] sm:$0xff]
    %v839 = vld [vmem:[%s2 + $0xe78] sm:$0xff]
    %v840 = vld [vmem:[%s2 + $0xe80] sm:$0xff]
    %v841 = vld [vmem:[%s2 + $0xe88] sm:$0xff]
    %v842 = vld [vmem:[%s2 + $0xe90] sm:$0xff]
    %v843 = vld [vmem:[%s2 + $0xe98] sm:$0xff]
    %v844 = vld [vmem:[%s2 + $0xea0] sm:$0xff]
    %v845 = vld [vmem:[%s2 + $0xea8] sm:$0xff]
    %v846 = vld [vmem:[%s2 + $0xeb0] sm:$0xff]
    %v847 = vld [vmem:[%s2 + $0xeb8] sm:$0xff]
    %v848 = vld [vmem:[%s2 + $0xec0] sm:$0xff]
    %v849 = vld [vmem:[%s2 + $0xec8] sm:$0xff]
    %v850 = vld [vmem:[%s2 + $0xed0] sm:$0xff]
    %v851 = vld [vmem:[%s2 + $0xed8] sm:$0xff]
    %v852 = vld [vmem:[%s2 + $0xee0] sm:$0xff]
    %v853 = vld [vmem:[%s2 + $0xee8] sm:$0xff]
    %v854 = vld [vmem:[%s2 + $0xef0] sm:$0xff]
    %v855 = vld [vmem:[%s2 + $0xef8] sm:$0xff]
    %v856 = vld [vmem:[%s2 + $0xf00] sm:$0xff]
    %v857 = vld [vmem:[%s2 + $0xf08] sm:$0xff]
    %v858 = vld [vmem:[%s2 + $0xf10] sm:$0xff]
    %v859 = vld [vmem:[%s2 + $0xf18] sm:$0xff]
    %v860 = vld [vmem:[%s2 + $0xf20] sm:$0xff]
    %v861 = vld [vmem:[%s2 + $0xf28] sm:$0xff]
    %v862 = vld [vmem:[%s2 + $0xf30] sm:$0xff]
    %v863 = vld [vmem:[%s2 + $0xf38] sm:$0xff]
    %v864 = vld [vmem:[%s2 + $0xf40] sm:$0xff]
    %v865 = vld [vmem:[%s2 + $0xf48] sm:$0xff]
    %v866 = vld [vmem:[%s2 + $0xf50] sm:$0xff]
    %v867 = vld [vmem:[%s2 + $0xf58] sm:$0xff]
    %v868 = vld [vmem:[%s2 + $0xf60] sm:$0xff]
    %v869 = vld [vmem:[%s2 + $0xf68] sm:$0xff]
    %v870 = vld [vmem:[%s2 + $0xf70] sm:$0xff]
    %v871 = vld [vmem:[%s2 + $0xf78] sm:$0xff]
    %v872 = vld [vmem:[%s2 + $0xf80] sm:$0xff]
    %v873 = vld [vmem:[%s2 + $0xf88] sm:$0xff]
    %v874 = vld [vmem:[%s2 + $0xf90] sm:$0xff]
    %v875 = vld [vmem:[%s2 + $0xf98] sm:$0xff]
    %v876 = vld [vmem:[%s2 + $0xfa0] sm:$0xff]
    %v877 = vld [vmem:[%s2 + $0xfa8] sm:$0xff]
    %v878 = vld [vmem:[%s2 + $0xfb0] sm:$0xff]
    %v879 = vld [vmem:[%s2 + $0xfb8] sm:$0xff]
    %v880 = vld [vmem:[%s2 + $0xfc0] sm:$0xff]
    %v881 = vld [vmem:[%s2 + $0xfc8] sm:$0xff]
    %v882 = vld [vmem:[%s2 + $0xfd0] sm:$0xff]
    %v883 = vld [vmem:[%s2 + $0xfd8] sm:$0xff]
    %v884 = vld [vmem:[%s2 + $0xfe0] sm:$0xff]
    %v885 = vld [vmem:[%s2 + $0xfe8] sm:$0xff]
    %v886 = vld [vmem:[%s2 + $0xff0] sm:$0xff]
    %v887 = vld [vmem:[%s2 + $0xff8] sm:$0xff]
    %v888 = vld [vmem:[%s3] sm:$0x3]
    %v890 = vlaneseq
    %v891 = vshrl.u32 %v890, 7
    %v892 = vsub.s32 0, %v891
    %v893 = vrot.slane %v888, %v892
    %v894 = vlaneseq
    %v895 = vshrl.u32 %v894, 7
    %v896 = vsub.s32 1, %v895
    %v897 = vrot.slane %v888, %v896
    %v1412 = vunpack.c.l.b16 %v376
    %v1413 = vunpack.c.h.b16 %v376
    %v1414 = vunpack.c.l.b16 %v377
    %v1415 = vunpack.c.h.b16 %v377
    %v1416 = vunpack.c.l.b16 %v378
    %v1417 = vunpack.c.h.b16 %v378
    %v1418 = vunpack.c.l.b16 %v379
    %v1419 = vunpack.c.h.b16 %v379
    %v1420 = vunpack.c.l.b16 %v380
    %v1421 = vunpack.c.h.b16 %v380
    %v1422 = vunpack.c.l.b16 %v381
    %v1423 = vunpack.c.h.b16 %v381
    %v1424 = vunpack.c.l.b16 %v382
    %v1425 = vunpack.c.h.b16 %v382
    %v1426 = vunpack.c.l.b16 %v383
    %v1427 = vunpack.c.h.b16 %v383
    %v1428 = vunpack.c.l.b16 %v384
    %v1429 = vunpack.c.h.b16 %v384
    %v1430 = vunpack.c.l.b16 %v385
    %v1431 = vunpack.c.h.b16 %v385
    %v1432 = vunpack.c.l.b16 %v386
    %v1433 = vunpack.c.h.b16 %v386
    %v1434 = vunpack.c.l.b16 %v387
    %v1435 = vunpack.c.h.b16 %v387
    %v1436 = vunpack.c.l.b16 %v388
    %v1437 = vunpack.c.h.b16 %v388
    %v1438 = vunpack.c.l.b16 %v389
    %v1439 = vunpack.c.h.b16 %v389
    %v1440 = vunpack.c.l.b16 %v390
    %v1441 = vunpack.c.h.b16 %v390
    %v1442 = vunpack.c.l.b16 %v391
    %v1443 = vunpack.c.h.b16 %v391
    %v1444 = vunpack.c.l.b16 %v392
    %v1445 = vunpack.c.h.b16 %v392
    %v1446 = vunpack.c.l.b16 %v393
    %v1447 = vunpack.c.h.b16 %v393
    %v1448 = vunpack.c.l.b16 %v394
    %v1449 = vunpack.c.h.b16 %v394
    %v1450 = vunpack.c.l.b16 %v395
    %v1451 = vunpack.c.h.b16 %v395
    %v1452 = vunpack.c.l.b16 %v396
    %v1453 = vunpack.c.h.b16 %v396
    %v1454 = vunpack.c.l.b16 %v397
    %v1455 = vunpack.c.h.b16 %v397
    %v1456 = vunpack.c.l.b16 %v398
    %v1457 = vunpack.c.h.b16 %v398
    %v1458 = vunpack.c.l.b16 %v399
    %v1459 = vunpack.c.h.b16 %v399
    %v1460 = vunpack.c.l.b16 %v400
    %v1461 = vunpack.c.h.b16 %v400
    %v1462 = vunpack.c.l.b16 %v401
    %v1463 = vunpack.c.h.b16 %v401
    %v1464 = vunpack.c.l.b16 %v402
    %v1465 = vunpack.c.h.b16 %v402
    %v1466 = vunpack.c.l.b16 %v403
    %v1467 = vunpack.c.h.b16 %v403
    %v1468 = vunpack.c.l.b16 %v404
    %v1469 = vunpack.c.h.b16 %v404
    %v1470 = vunpack.c.l.b16 %v405
    %v1471 = vunpack.c.h.b16 %v405
    %v1472 = vunpack.c.l.b16 %v406
    %v1473 = vunpack.c.h.b16 %v406
    %v1474 = vunpack.c.l.b16 %v407
    %v1475 = vunpack.c.h.b16 %v407
    %v1476 = vunpack.c.l.b16 %v408
    %v1477 = vunpack.c.h.b16 %v408
    %v1478 = vunpack.c.l.b16 %v409
    %v1479 = vunpack.c.h.b16 %v409
    %v1480 = vunpack.c.l.b16 %v410
    %v1481 = vunpack.c.h.b16 %v410
    %v1482 = vunpack.c.l.b16 %v411
    %v1483 = vunpack.c.h.b16 %v411
    %v1484 = vunpack.c.l.b16 %v412
    %v1485 = vunpack.c.h.b16 %v412
    %v1486 = vunpack.c.l.b16 %v413
    %v1487 = vunpack.c.h.b16 %v413
    %v1488 = vunpack.c.l.b16 %v414
    %v1489 = vunpack.c.h.b16 %v414
    %v1490 = vunpack.c.l.b16 %v415
    %v1491 = vunpack.c.h.b16 %v415
    %v1492 = vunpack.c.l.b16 %v416
    %v1493 = vunpack.c.h.b16 %v416
    %v1494 = vunpack.c.l.b16 %v417
    %v1495 = vunpack.c.h.b16 %v417
    %v1496 = vunpack.c.l.b16 %v418
    %v1497 = vunpack.c.h.b16 %v418
    %v1498 = vunpack.c.l.b16 %v419
    %v1499 = vunpack.c.h.b16 %v419
    %v1500 = vunpack.c.l.b16 %v420
    %v1501 = vunpack.c.h.b16 %v420
    %v1502 = vunpack.c.l.b16 %v421
    %v1503 = vunpack.c.h.b16 %v421
    %v1504 = vunpack.c.l.b16 %v422
    %v1505 = vunpack.c.h.b16 %v422
    %v1506 = vunpack.c.l.b16 %v423
    %v1507 = vunpack.c.h.b16 %v423
    %v1508 = vunpack.c.l.b16 %v424
    %v1509 = vunpack.c.h.b16 %v424
    %v1510 = vunpack.c.l.b16 %v425
    %v1511 = vunpack.c.h.b16 %v425
    %v1512 = vunpack.c.l.b16 %v426
    %v1513 = vunpack.c.h.b16 %v426
    %v1514 = vunpack.c.l.b16 %v427
    %v1515 = vunpack.c.h.b16 %v427
    %v1516 = vunpack.c.l.b16 %v428
    %v1517 = vunpack.c.h.b16 %v428
    %v1518 = vunpack.c.l.b16 %v429
    %v1519 = vunpack.c.h.b16 %v429
    %v1520 = vunpack.c.l.b16 %v430
    %v1521 = vunpack.c.h.b16 %v430
    %v1522 = vunpack.c.l.b16 %v431
    %v1523 = vunpack.c.h.b16 %v431
    %v1524 = vunpack.c.l.b16 %v432
    %v1525 = vunpack.c.h.b16 %v432
    %v1526 = vunpack.c.l.b16 %v433
    %v1527 = vunpack.c.h.b16 %v433
    %v1528 = vunpack.c.l.b16 %v434
    %v1529 = vunpack.c.h.b16 %v434
    %v1530 = vunpack.c.l.b16 %v435
    %v1531 = vunpack.c.h.b16 %v435
    %v1532 = vunpack.c.l.b16 %v436
    %v1533 = vunpack.c.h.b16 %v436
    %v1534 = vunpack.c.l.b16 %v437
    %v1535 = vunpack.c.h.b16 %v437
    %v1536 = vunpack.c.l.b16 %v438
    %v1537 = vunpack.c.h.b16 %v438
    %v1538 = vunpack.c.l.b16 %v439
    %v1539 = vunpack.c.h.b16 %v439
    %v1540 = vunpack.c.l.b16 %v440
    %v1541 = vunpack.c.h.b16 %v440
    %v1542 = vunpack.c.l.b16 %v441
    %v1543 = vunpack.c.h.b16 %v441
    %v1544 = vunpack.c.l.b16 %v442
    %v1545 = vunpack.c.h.b16 %v442
    %v1546 = vunpack.c.l.b16 %v443
    %v1547 = vunpack.c.h.b16 %v443
    %v1548 = vunpack.c.l.b16 %v444
    %v1549 = vunpack.c.h.b16 %v444
    %v1550 = vunpack.c.l.b16 %v445
    %v1551 = vunpack.c.h.b16 %v445
    %v1552 = vunpack.c.l.b16 %v446
    %v1553 = vunpack.c.h.b16 %v446
    %v1554 = vunpack.c.l.b16 %v447
    %v1555 = vunpack.c.h.b16 %v447
    %v1556 = vunpack.c.l.b16 %v448
    %v1557 = vunpack.c.h.b16 %v448
    %v1558 = vunpack.c.l.b16 %v449
    %v1559 = vunpack.c.h.b16 %v449
    %v1560 = vunpack.c.l.b16 %v450
    %v1561 = vunpack.c.h.b16 %v450
    %v1562 = vunpack.c.l.b16 %v451
    %v1563 = vunpack.c.h.b16 %v451
    %v1564 = vunpack.c.l.b16 %v452
    %v1565 = vunpack.c.h.b16 %v452
    %v1566 = vunpack.c.l.b16 %v453
    %v1567 = vunpack.c.h.b16 %v453
    %v1568 = vunpack.c.l.b16 %v454
    %v1569 = vunpack.c.h.b16 %v454
    %v1570 = vunpack.c.l.b16 %v455
    %v1571 = vunpack.c.h.b16 %v455
    %v1572 = vunpack.c.l.b16 %v456
    %v1573 = vunpack.c.h.b16 %v456
    %v1574 = vunpack.c.l.b16 %v457
    %v1575 = vunpack.c.h.b16 %v457
    %v1576 = vunpack.c.l.b16 %v458
    %v1577 = vunpack.c.h.b16 %v458
    %v1578 = vunpack.c.l.b16 %v459
    %v1579 = vunpack.c.h.b16 %v459
    %v1580 = vunpack.c.l.b16 %v460
    %v1581 = vunpack.c.h.b16 %v460
    %v1582 = vunpack.c.l.b16 %v461
    %v1583 = vunpack.c.h.b16 %v461
    %v1584 = vunpack.c.l.b16 %v462
    %v1585 = vunpack.c.h.b16 %v462
    %v1586 = vunpack.c.l.b16 %v463
    %v1587 = vunpack.c.h.b16 %v463
    %v1588 = vunpack.c.l.b16 %v464
    %v1589 = vunpack.c.h.b16 %v464
    %v1590 = vunpack.c.l.b16 %v465
    %v1591 = vunpack.c.h.b16 %v465
    %v1592 = vunpack.c.l.b16 %v466
    %v1593 = vunpack.c.h.b16 %v466
    %v1594 = vunpack.c.l.b16 %v467
    %v1595 = vunpack.c.h.b16 %v467
    %v1596 = vunpack.c.l.b16 %v468
    %v1597 = vunpack.c.h.b16 %v468
    %v1598 = vunpack.c.l.b16 %v469
    %v1599 = vunpack.c.h.b16 %v469
    %v1600 = vunpack.c.l.b16 %v470
    %v1601 = vunpack.c.h.b16 %v470
    %v1602 = vunpack.c.l.b16 %v471
    %v1603 = vunpack.c.h.b16 %v471
    %v1604 = vunpack.c.l.b16 %v472
    %v1605 = vunpack.c.h.b16 %v472
    %v1606 = vunpack.c.l.b16 %v473
    %v1607 = vunpack.c.h.b16 %v473
    %v1608 = vunpack.c.l.b16 %v474
    %v1609 = vunpack.c.h.b16 %v474
    %v1610 = vunpack.c.l.b16 %v475
    %v1611 = vunpack.c.h.b16 %v475
    %v1612 = vunpack.c.l.b16 %v476
    %v1613 = vunpack.c.h.b16 %v476
    %v1614 = vunpack.c.l.b16 %v477
    %v1615 = vunpack.c.h.b16 %v477
    %v1616 = vunpack.c.l.b16 %v478
    %v1617 = vunpack.c.h.b16 %v478
    %v1618 = vunpack.c.l.b16 %v479
    %v1619 = vunpack.c.h.b16 %v479
    %v1620 = vunpack.c.l.b16 %v480
    %v1621 = vunpack.c.h.b16 %v480
    %v1622 = vunpack.c.l.b16 %v481
    %v1623 = vunpack.c.h.b16 %v481
    %v1624 = vunpack.c.l.b16 %v482
    %v1625 = vunpack.c.h.b16 %v482
    %v1626 = vunpack.c.l.b16 %v483
    %v1627 = vunpack.c.h.b16 %v483
    %v1628 = vunpack.c.l.b16 %v484
    %v1629 = vunpack.c.h.b16 %v484
    %v1630 = vunpack.c.l.b16 %v485
    %v1631 = vunpack.c.h.b16 %v485
    %v1632 = vunpack.c.l.b16 %v486
    %v1633 = vunpack.c.h.b16 %v486
    %v1634 = vunpack.c.l.b16 %v487
    %v1635 = vunpack.c.h.b16 %v487
    %v1636 = vunpack.c.l.b16 %v488
    %v1637 = vunpack.c.h.b16 %v488
    %v1638 = vunpack.c.l.b16 %v489
    %v1639 = vunpack.c.h.b16 %v489
    %v1640 = vunpack.c.l.b16 %v490
    %v1641 = vunpack.c.h.b16 %v490
    %v1642 = vunpack.c.l.b16 %v491
    %v1643 = vunpack.c.h.b16 %v491
    %v1644 = vunpack.c.l.b16 %v492
    %v1645 = vunpack.c.h.b16 %v492
    %v1646 = vunpack.c.l.b16 %v493
    %v1647 = vunpack.c.h.b16 %v493
    %v1648 = vunpack.c.l.b16 %v494
    %v1649 = vunpack.c.h.b16 %v494
    %v1650 = vunpack.c.l.b16 %v495
    %v1651 = vunpack.c.h.b16 %v495
    %v1652 = vunpack.c.l.b16 %v496
    %v1653 = vunpack.c.h.b16 %v496
    %v1654 = vunpack.c.l.b16 %v497
    %v1655 = vunpack.c.h.b16 %v497
    %v1656 = vunpack.c.l.b16 %v498
    %v1657 = vunpack.c.h.b16 %v498
    %v1658 = vunpack.c.l.b16 %v499
    %v1659 = vunpack.c.h.b16 %v499
    %v1660 = vunpack.c.l.b16 %v500
    %v1661 = vunpack.c.h.b16 %v500
    %v1662 = vunpack.c.l.b16 %v501
    %v1663 = vunpack.c.h.b16 %v501
    %v1664 = vunpack.c.l.b16 %v502
    %v1665 = vunpack.c.h.b16 %v502
    %v1666 = vunpack.c.l.b16 %v503
    %v1667 = vunpack.c.h.b16 %v503
    %v1668 = vunpack.c.l.b16 %v504
    %v1669 = vunpack.c.h.b16 %v504
    %v1670 = vunpack.c.l.b16 %v505
    %v1671 = vunpack.c.h.b16 %v505
    %v1672 = vunpack.c.l.b16 %v506
    %v1673 = vunpack.c.h.b16 %v506
    %v1674 = vunpack.c.l.b16 %v507
    %v1675 = vunpack.c.h.b16 %v507
    %v1676 = vunpack.c.l.b16 %v508
    %v1677 = vunpack.c.h.b16 %v508
    %v1678 = vunpack.c.l.b16 %v509
    %v1679 = vunpack.c.h.b16 %v509
    %v1680 = vunpack.c.l.b16 %v510
    %v1681 = vunpack.c.h.b16 %v510
    %v1682 = vunpack.c.l.b16 %v511
    %v1683 = vunpack.c.h.b16 %v511
    %v1684 = vunpack.c.l.b16 %v512
    %v1685 = vunpack.c.h.b16 %v512
    %v1686 = vunpack.c.l.b16 %v513
    %v1687 = vunpack.c.h.b16 %v513
    %v1688 = vunpack.c.l.b16 %v514
    %v1689 = vunpack.c.h.b16 %v514
    %v1690 = vunpack.c.l.b16 %v515
    %v1691 = vunpack.c.h.b16 %v515
    %v1692 = vunpack.c.l.b16 %v516
    %v1693 = vunpack.c.h.b16 %v516
    %v1694 = vunpack.c.l.b16 %v517
    %v1695 = vunpack.c.h.b16 %v517
    %v1696 = vunpack.c.l.b16 %v518
    %v1697 = vunpack.c.h.b16 %v518
    %v1698 = vunpack.c.l.b16 %v519
    %v1699 = vunpack.c.h.b16 %v519
    %v1700 = vunpack.c.l.b16 %v520
    %v1701 = vunpack.c.h.b16 %v520
    %v1702 = vunpack.c.l.b16 %v521
    %v1703 = vunpack.c.h.b16 %v521
    %v1704 = vunpack.c.l.b16 %v522
    %v1705 = vunpack.c.h.b16 %v522
    %v1706 = vunpack.c.l.b16 %v523
    %v1707 = vunpack.c.h.b16 %v523
    %v1708 = vunpack.c.l.b16 %v524
    %v1709 = vunpack.c.h.b16 %v524
    %v1710 = vunpack.c.l.b16 %v525
    %v1711 = vunpack.c.h.b16 %v525
    %v1712 = vunpack.c.l.b16 %v526
    %v1713 = vunpack.c.h.b16 %v526
    %v1714 = vunpack.c.l.b16 %v527
    %v1715 = vunpack.c.h.b16 %v527
    %v1716 = vunpack.c.l.b16 %v528
    %v1717 = vunpack.c.h.b16 %v528
    %v1718 = vunpack.c.l.b16 %v529
    %v1719 = vunpack.c.h.b16 %v529
    %v1720 = vunpack.c.l.b16 %v530
    %v1721 = vunpack.c.h.b16 %v530
    %v1722 = vunpack.c.l.b16 %v531
    %v1723 = vunpack.c.h.b16 %v531
    %v1724 = vunpack.c.l.b16 %v532
    %v1725 = vunpack.c.h.b16 %v532
    %v1726 = vunpack.c.l.b16 %v533
    %v1727 = vunpack.c.h.b16 %v533
    %v1728 = vunpack.c.l.b16 %v534
    %v1729 = vunpack.c.h.b16 %v534
    %v1730 = vunpack.c.l.b16 %v535
    %v1731 = vunpack.c.h.b16 %v535
    %v1732 = vunpack.c.l.b16 %v536
    %v1733 = vunpack.c.h.b16 %v536
    %v1734 = vunpack.c.l.b16 %v537
    %v1735 = vunpack.c.h.b16 %v537
    %v1736 = vunpack.c.l.b16 %v538
    %v1737 = vunpack.c.h.b16 %v538
    %v1738 = vunpack.c.l.b16 %v539
    %v1739 = vunpack.c.h.b16 %v539
    %v1740 = vunpack.c.l.b16 %v540
    %v1741 = vunpack.c.h.b16 %v540
    %v1742 = vunpack.c.l.b16 %v541
    %v1743 = vunpack.c.h.b16 %v541
    %v1744 = vunpack.c.l.b16 %v542
    %v1745 = vunpack.c.h.b16 %v542
    %v1746 = vunpack.c.l.b16 %v543
    %v1747 = vunpack.c.h.b16 %v543
    %v1748 = vunpack.c.l.b16 %v544
    %v1749 = vunpack.c.h.b16 %v544
    %v1750 = vunpack.c.l.b16 %v545
    %v1751 = vunpack.c.h.b16 %v545
    %v1752 = vunpack.c.l.b16 %v546
    %v1753 = vunpack.c.h.b16 %v546
    %v1754 = vunpack.c.l.b16 %v547
    %v1755 = vunpack.c.h.b16 %v547
    %v1756 = vunpack.c.l.b16 %v548
    %v1757 = vunpack.c.h.b16 %v548
    %v1758 = vunpack.c.l.b16 %v549
    %v1759 = vunpack.c.h.b16 %v549
    %v1760 = vunpack.c.l.b16 %v550
    %v1761 = vunpack.c.h.b16 %v550
    %v1762 = vunpack.c.l.b16 %v551
    %v1763 = vunpack.c.h.b16 %v551
    %v1764 = vunpack.c.l.b16 %v552
    %v1765 = vunpack.c.h.b16 %v552
    %v1766 = vunpack.c.l.b16 %v553
    %v1767 = vunpack.c.h.b16 %v553
    %v1768 = vunpack.c.l.b16 %v554
    %v1769 = vunpack.c.h.b16 %v554
    %v1770 = vunpack.c.l.b16 %v555
    %v1771 = vunpack.c.h.b16 %v555
    %v1772 = vunpack.c.l.b16 %v556
    %v1773 = vunpack.c.h.b16 %v556
    %v1774 = vunpack.c.l.b16 %v557
    %v1775 = vunpack.c.h.b16 %v557
    %v1776 = vunpack.c.l.b16 %v558
    %v1777 = vunpack.c.h.b16 %v558
    %v1778 = vunpack.c.l.b16 %v559
    %v1779 = vunpack.c.h.b16 %v559
    %v1780 = vunpack.c.l.b16 %v560
    %v1781 = vunpack.c.h.b16 %v560
    %v1782 = vunpack.c.l.b16 %v561
    %v1783 = vunpack.c.h.b16 %v561
    %v1784 = vunpack.c.l.b16 %v562
    %v1785 = vunpack.c.h.b16 %v562
    %v1786 = vunpack.c.l.b16 %v563
    %v1787 = vunpack.c.h.b16 %v563
    %v1788 = vunpack.c.l.b16 %v564
    %v1789 = vunpack.c.h.b16 %v564
    %v1790 = vunpack.c.l.b16 %v565
    %v1791 = vunpack.c.h.b16 %v565
    %v1792 = vunpack.c.l.b16 %v566
    %v1793 = vunpack.c.h.b16 %v566
    %v1794 = vunpack.c.l.b16 %v567
    %v1795 = vunpack.c.h.b16 %v567
    %v1796 = vunpack.c.l.b16 %v568
    %v1797 = vunpack.c.h.b16 %v568
    %v1798 = vunpack.c.l.b16 %v569
    %v1799 = vunpack.c.h.b16 %v569
    %v1800 = vunpack.c.l.b16 %v570
    %v1801 = vunpack.c.h.b16 %v570
    %v1802 = vunpack.c.l.b16 %v571
    %v1803 = vunpack.c.h.b16 %v571
    %v1804 = vunpack.c.l.b16 %v572
    %v1805 = vunpack.c.h.b16 %v572
    %v1806 = vunpack.c.l.b16 %v573
    %v1807 = vunpack.c.h.b16 %v573
    %v1808 = vunpack.c.l.b16 %v574
    %v1809 = vunpack.c.h.b16 %v574
    %v1810 = vunpack.c.l.b16 %v575
    %v1811 = vunpack.c.h.b16 %v575
    %v1812 = vunpack.c.l.b16 %v576
    %v1813 = vunpack.c.h.b16 %v576
    %v1814 = vunpack.c.l.b16 %v577
    %v1815 = vunpack.c.h.b16 %v577
    %v1816 = vunpack.c.l.b16 %v578
    %v1817 = vunpack.c.h.b16 %v578
    %v1818 = vunpack.c.l.b16 %v579
    %v1819 = vunpack.c.h.b16 %v579
    %v1820 = vunpack.c.l.b16 %v580
    %v1821 = vunpack.c.h.b16 %v580
    %v1822 = vunpack.c.l.b16 %v581
    %v1823 = vunpack.c.h.b16 %v581
    %v1824 = vunpack.c.l.b16 %v582
    %v1825 = vunpack.c.h.b16 %v582
    %v1826 = vunpack.c.l.b16 %v583
    %v1827 = vunpack.c.h.b16 %v583
    %v1828 = vunpack.c.l.b16 %v584
    %v1829 = vunpack.c.h.b16 %v584
    %v1830 = vunpack.c.l.b16 %v585
    %v1831 = vunpack.c.h.b16 %v585
    %v1832 = vunpack.c.l.b16 %v586
    %v1833 = vunpack.c.h.b16 %v586
    %v1834 = vunpack.c.l.b16 %v587
    %v1835 = vunpack.c.h.b16 %v587
    %v1836 = vunpack.c.l.b16 %v588
    %v1837 = vunpack.c.h.b16 %v588
    %v1838 = vunpack.c.l.b16 %v589
    %v1839 = vunpack.c.h.b16 %v589
    %v1840 = vunpack.c.l.b16 %v590
    %v1841 = vunpack.c.h.b16 %v590
    %v1842 = vunpack.c.l.b16 %v591
    %v1843 = vunpack.c.h.b16 %v591
    %v1844 = vunpack.c.l.b16 %v592
    %v1845 = vunpack.c.h.b16 %v592
    %v1846 = vunpack.c.l.b16 %v593
    %v1847 = vunpack.c.h.b16 %v593
    %v1848 = vunpack.c.l.b16 %v594
    %v1849 = vunpack.c.h.b16 %v594
    %v1850 = vunpack.c.l.b16 %v595
    %v1851 = vunpack.c.h.b16 %v595
    %v1852 = vunpack.c.l.b16 %v596
    %v1853 = vunpack.c.h.b16 %v596
    %v1854 = vunpack.c.l.b16 %v597
    %v1855 = vunpack.c.h.b16 %v597
    %v1856 = vunpack.c.l.b16 %v598
    %v1857 = vunpack.c.h.b16 %v598
    %v1858 = vunpack.c.l.b16 %v599
    %v1859 = vunpack.c.h.b16 %v599
    %v1860 = vunpack.c.l.b16 %v600
    %v1861 = vunpack.c.h.b16 %v600
    %v1862 = vunpack.c.l.b16 %v601
    %v1863 = vunpack.c.h.b16 %v601
    %v1864 = vunpack.c.l.b16 %v602
    %v1865 = vunpack.c.h.b16 %v602
    %v1866 = vunpack.c.l.b16 %v603
    %v1867 = vunpack.c.h.b16 %v603
    %v1868 = vunpack.c.l.b16 %v604
    %v1869 = vunpack.c.h.b16 %v604
    %v1870 = vunpack.c.l.b16 %v605
    %v1871 = vunpack.c.h.b16 %v605
    %v1872 = vunpack.c.l.b16 %v606
    %v1873 = vunpack.c.h.b16 %v606
    %v1874 = vunpack.c.l.b16 %v607
    %v1875 = vunpack.c.h.b16 %v607
    %v1876 = vunpack.c.l.b16 %v608
    %v1877 = vunpack.c.h.b16 %v608
    %v1878 = vunpack.c.l.b16 %v609
    %v1879 = vunpack.c.h.b16 %v609
    %v1880 = vunpack.c.l.b16 %v610
    %v1881 = vunpack.c.h.b16 %v610
    %v1882 = vunpack.c.l.b16 %v611
    %v1883 = vunpack.c.h.b16 %v611
    %v1884 = vunpack.c.l.b16 %v612
    %v1885 = vunpack.c.h.b16 %v612
    %v1886 = vunpack.c.l.b16 %v613
    %v1887 = vunpack.c.h.b16 %v613
    %v1888 = vunpack.c.l.b16 %v614
    %v1889 = vunpack.c.h.b16 %v614
    %v1890 = vunpack.c.l.b16 %v615
    %v1891 = vunpack.c.h.b16 %v615
    %v1892 = vunpack.c.l.b16 %v616
    %v1893 = vunpack.c.h.b16 %v616
    %v1894 = vunpack.c.l.b16 %v617
    %v1895 = vunpack.c.h.b16 %v617
    %v1896 = vunpack.c.l.b16 %v618
    %v1897 = vunpack.c.h.b16 %v618
    %v1898 = vunpack.c.l.b16 %v619
    %v1899 = vunpack.c.h.b16 %v619
    %v1900 = vunpack.c.l.b16 %v620
    %v1901 = vunpack.c.h.b16 %v620
    %v1902 = vunpack.c.l.b16 %v621
    %v1903 = vunpack.c.h.b16 %v621
    %v1904 = vunpack.c.l.b16 %v622
    %v1905 = vunpack.c.h.b16 %v622
    %v1906 = vunpack.c.l.b16 %v623
    %v1907 = vunpack.c.h.b16 %v623
    %v1908 = vunpack.c.l.b16 %v624
    %v1909 = vunpack.c.h.b16 %v624
    %v1910 = vunpack.c.l.b16 %v625
    %v1911 = vunpack.c.h.b16 %v625
    %v1912 = vunpack.c.l.b16 %v626
    %v1913 = vunpack.c.h.b16 %v626
    %v1914 = vunpack.c.l.b16 %v627
    %v1915 = vunpack.c.h.b16 %v627
    %v1916 = vunpack.c.l.b16 %v628
    %v1917 = vunpack.c.h.b16 %v628
    %v1918 = vunpack.c.l.b16 %v629
    %v1919 = vunpack.c.h.b16 %v629
    %v1920 = vunpack.c.l.b16 %v630
    %v1921 = vunpack.c.h.b16 %v630
    %v1922 = vunpack.c.l.b16 %v631
    %v1923 = vunpack.c.h.b16 %v631
    %v1924 = vunpack.c.l.b16 %v632
    %v1925 = vunpack.c.h.b16 %v632
    %v1926 = vunpack.c.l.b16 %v633
    %v1927 = vunpack.c.h.b16 %v633
    %v1928 = vunpack.c.l.b16 %v634
    %v1929 = vunpack.c.h.b16 %v634
    %v1930 = vunpack.c.l.b16 %v635
    %v1931 = vunpack.c.h.b16 %v635
    %v1932 = vunpack.c.l.b16 %v636
    %v1933 = vunpack.c.h.b16 %v636
    %v1934 = vunpack.c.l.b16 %v637
    %v1935 = vunpack.c.h.b16 %v637
    %v1936 = vunpack.c.l.b16 %v638
    %v1937 = vunpack.c.h.b16 %v638
    %v1938 = vunpack.c.l.b16 %v639
    %v1939 = vunpack.c.h.b16 %v639
    %v1940 = vunpack.c.l.b16 %v640
    %v1941 = vunpack.c.h.b16 %v640
    %v1942 = vunpack.c.l.b16 %v641
    %v1943 = vunpack.c.h.b16 %v641
    %v1944 = vunpack.c.l.b16 %v642
    %v1945 = vunpack.c.h.b16 %v642
    %v1946 = vunpack.c.l.b16 %v643
    %v1947 = vunpack.c.h.b16 %v643
    %v1948 = vunpack.c.l.b16 %v644
    %v1949 = vunpack.c.h.b16 %v644
    %v1950 = vunpack.c.l.b16 %v645
    %v1951 = vunpack.c.h.b16 %v645
    %v1952 = vunpack.c.l.b16 %v646
    %v1953 = vunpack.c.h.b16 %v646
    %v1954 = vunpack.c.l.b16 %v647
    %v1955 = vunpack.c.h.b16 %v647
    %v1956 = vunpack.c.l.b16 %v648
    %v1957 = vunpack.c.h.b16 %v648
    %v1958 = vunpack.c.l.b16 %v649
    %v1959 = vunpack.c.h.b16 %v649
    %v1960 = vunpack.c.l.b16 %v650
    %v1961 = vunpack.c.h.b16 %v650
    %v1962 = vunpack.c.l.b16 %v651
    %v1963 = vunpack.c.h.b16 %v651
    %v1964 = vunpack.c.l.b16 %v652
    %v1965 = vunpack.c.h.b16 %v652
    %v1966 = vunpack.c.l.b16 %v653
    %v1967 = vunpack.c.h.b16 %v653
    %v1968 = vunpack.c.l.b16 %v654
    %v1969 = vunpack.c.h.b16 %v654
    %v1970 = vunpack.c.l.b16 %v655
    %v1971 = vunpack.c.h.b16 %v655
    %v1972 = vunpack.c.l.b16 %v656
    %v1973 = vunpack.c.h.b16 %v656
    %v1974 = vunpack.c.l.b16 %v657
    %v1975 = vunpack.c.h.b16 %v657
    %v1976 = vunpack.c.l.b16 %v658
    %v1977 = vunpack.c.h.b16 %v658
    %v1978 = vunpack.c.l.b16 %v659
    %v1979 = vunpack.c.h.b16 %v659
    %v1980 = vunpack.c.l.b16 %v660
    %v1981 = vunpack.c.h.b16 %v660
    %v1982 = vunpack.c.l.b16 %v661
    %v1983 = vunpack.c.h.b16 %v661
    %v1984 = vunpack.c.l.b16 %v662
    %v1985 = vunpack.c.h.b16 %v662
    %v1986 = vunpack.c.l.b16 %v663
    %v1987 = vunpack.c.h.b16 %v663
    %v1988 = vunpack.c.l.b16 %v664
    %v1989 = vunpack.c.h.b16 %v664
    %v1990 = vunpack.c.l.b16 %v665
    %v1991 = vunpack.c.h.b16 %v665
    %v1992 = vunpack.c.l.b16 %v666
    %v1993 = vunpack.c.h.b16 %v666
    %v1994 = vunpack.c.l.b16 %v667
    %v1995 = vunpack.c.h.b16 %v667
    %v1996 = vunpack.c.l.b16 %v668
    %v1997 = vunpack.c.h.b16 %v668
    %v1998 = vunpack.c.l.b16 %v669
    %v1999 = vunpack.c.h.b16 %v669
    %v2000 = vunpack.c.l.b16 %v670
    %v2001 = vunpack.c.h.b16 %v670
    %v2002 = vunpack.c.l.b16 %v671
    %v2003 = vunpack.c.h.b16 %v671
    %v2004 = vunpack.c.l.b16 %v672
    %v2005 = vunpack.c.h.b16 %v672
    %v2006 = vunpack.c.l.b16 %v673
    %v2007 = vunpack.c.h.b16 %v673
    %v2008 = vunpack.c.l.b16 %v674
    %v2009 = vunpack.c.h.b16 %v674
    %v2010 = vunpack.c.l.b16 %v675
    %v2011 = vunpack.c.h.b16 %v675
    %v2012 = vunpack.c.l.b16 %v676
    %v2013 = vunpack.c.h.b16 %v676
    %v2014 = vunpack.c.l.b16 %v677
    %v2015 = vunpack.c.h.b16 %v677
    %v2016 = vunpack.c.l.b16 %v678
    %v2017 = vunpack.c.h.b16 %v678
    %v2018 = vunpack.c.l.b16 %v679
    %v2019 = vunpack.c.h.b16 %v679
    %v2020 = vunpack.c.l.b16 %v680
    %v2021 = vunpack.c.h.b16 %v680
    %v2022 = vunpack.c.l.b16 %v681
    %v2023 = vunpack.c.h.b16 %v681
    %v2024 = vunpack.c.l.b16 %v682
    %v2025 = vunpack.c.h.b16 %v682
    %v2026 = vunpack.c.l.b16 %v683
    %v2027 = vunpack.c.h.b16 %v683
    %v2028 = vunpack.c.l.b16 %v684
    %v2029 = vunpack.c.h.b16 %v684
    %v2030 = vunpack.c.l.b16 %v685
    %v2031 = vunpack.c.h.b16 %v685
    %v2032 = vunpack.c.l.b16 %v686
    %v2033 = vunpack.c.h.b16 %v686
    %v2034 = vunpack.c.l.b16 %v687
    %v2035 = vunpack.c.h.b16 %v687
    %v2036 = vunpack.c.l.b16 %v688
    %v2037 = vunpack.c.h.b16 %v688
    %v2038 = vunpack.c.l.b16 %v689
    %v2039 = vunpack.c.h.b16 %v689
    %v2040 = vunpack.c.l.b16 %v690
    %v2041 = vunpack.c.h.b16 %v690
    %v2042 = vunpack.c.l.b16 %v691
    %v2043 = vunpack.c.h.b16 %v691
    %v2044 = vunpack.c.l.b16 %v692
    %v2045 = vunpack.c.h.b16 %v692
    %v2046 = vunpack.c.l.b16 %v693
    %v2047 = vunpack.c.h.b16 %v693
    %v2048 = vunpack.c.l.b16 %v694
    %v2049 = vunpack.c.h.b16 %v694
    %v2050 = vunpack.c.l.b16 %v695
    %v2051 = vunpack.c.h.b16 %v695
    %v2052 = vunpack.c.l.b16 %v696
    %v2053 = vunpack.c.h.b16 %v696
    %v2054 = vunpack.c.l.b16 %v697
    %v2055 = vunpack.c.h.b16 %v697
    %v2056 = vunpack.c.l.b16 %v698
    %v2057 = vunpack.c.h.b16 %v698
    %v2058 = vunpack.c.l.b16 %v699
    %v2059 = vunpack.c.h.b16 %v699
    %v2060 = vunpack.c.l.b16 %v700
    %v2061 = vunpack.c.h.b16 %v700
    %v2062 = vunpack.c.l.b16 %v701
    %v2063 = vunpack.c.h.b16 %v701
    %v2064 = vunpack.c.l.b16 %v702
    %v2065 = vunpack.c.h.b16 %v702
    %v2066 = vunpack.c.l.b16 %v703
    %v2067 = vunpack.c.h.b16 %v703
    %v2068 = vunpack.c.l.b16 %v704
    %v2069 = vunpack.c.h.b16 %v704
    %v2070 = vunpack.c.l.b16 %v705
    %v2071 = vunpack.c.h.b16 %v705
    %v2072 = vunpack.c.l.b16 %v706
    %v2073 = vunpack.c.h.b16 %v706
    %v2074 = vunpack.c.l.b16 %v707
    %v2075 = vunpack.c.h.b16 %v707
    %v2076 = vunpack.c.l.b16 %v708
    %v2077 = vunpack.c.h.b16 %v708
    %v2078 = vunpack.c.l.b16 %v709
    %v2079 = vunpack.c.h.b16 %v709
    %v2080 = vunpack.c.l.b16 %v710
    %v2081 = vunpack.c.h.b16 %v710
    %v2082 = vunpack.c.l.b16 %v711
    %v2083 = vunpack.c.h.b16 %v711
    %v2084 = vunpack.c.l.b16 %v712
    %v2085 = vunpack.c.h.b16 %v712
    %v2086 = vunpack.c.l.b16 %v713
    %v2087 = vunpack.c.h.b16 %v713
    %v2088 = vunpack.c.l.b16 %v714
    %v2089 = vunpack.c.h.b16 %v714
    %v2090 = vunpack.c.l.b16 %v715
    %v2091 = vunpack.c.h.b16 %v715
    %v2092 = vunpack.c.l.b16 %v716
    %v2093 = vunpack.c.h.b16 %v716
    %v2094 = vunpack.c.l.b16 %v717
    %v2095 = vunpack.c.h.b16 %v717
    %v2096 = vunpack.c.l.b16 %v718
    %v2097 = vunpack.c.h.b16 %v718
    %v2098 = vunpack.c.l.b16 %v719
    %v2099 = vunpack.c.h.b16 %v719
    %v2100 = vunpack.c.l.b16 %v720
    %v2101 = vunpack.c.h.b16 %v720
    %v2102 = vunpack.c.l.b16 %v721
    %v2103 = vunpack.c.h.b16 %v721
    %v2104 = vunpack.c.l.b16 %v722
    %v2105 = vunpack.c.h.b16 %v722
    %v2106 = vunpack.c.l.b16 %v723
    %v2107 = vunpack.c.h.b16 %v723
    %v2108 = vunpack.c.l.b16 %v724
    %v2109 = vunpack.c.h.b16 %v724
    %v2110 = vunpack.c.l.b16 %v725
    %v2111 = vunpack.c.h.b16 %v725
    %v2112 = vunpack.c.l.b16 %v726
    %v2113 = vunpack.c.h.b16 %v726
    %v2114 = vunpack.c.l.b16 %v727
    %v2115 = vunpack.c.h.b16 %v727
    %v2116 = vunpack.c.l.b16 %v728
    %v2117 = vunpack.c.h.b16 %v728
    %v2118 = vunpack.c.l.b16 %v729
    %v2119 = vunpack.c.h.b16 %v729
    %v2120 = vunpack.c.l.b16 %v730
    %v2121 = vunpack.c.h.b16 %v730
    %v2122 = vunpack.c.l.b16 %v731
    %v2123 = vunpack.c.h.b16 %v731
    %v2124 = vunpack.c.l.b16 %v732
    %v2125 = vunpack.c.h.b16 %v732
    %v2126 = vunpack.c.l.b16 %v733
    %v2127 = vunpack.c.h.b16 %v733
    %v2128 = vunpack.c.l.b16 %v734
    %v2129 = vunpack.c.h.b16 %v734
    %v2130 = vunpack.c.l.b16 %v735
    %v2131 = vunpack.c.h.b16 %v735
    %v2132 = vunpack.c.l.b16 %v736
    %v2133 = vunpack.c.h.b16 %v736
    %v2134 = vunpack.c.l.b16 %v737
    %v2135 = vunpack.c.h.b16 %v737
    %v2136 = vunpack.c.l.b16 %v738
    %v2137 = vunpack.c.h.b16 %v738
    %v2138 = vunpack.c.l.b16 %v739
    %v2139 = vunpack.c.h.b16 %v739
    %v2140 = vunpack.c.l.b16 %v740
    %v2141 = vunpack.c.h.b16 %v740
    %v2142 = vunpack.c.l.b16 %v741
    %v2143 = vunpack.c.h.b16 %v741
    %v2144 = vunpack.c.l.b16 %v742
    %v2145 = vunpack.c.h.b16 %v742
    %v2146 = vunpack.c.l.b16 %v743
    %v2147 = vunpack.c.h.b16 %v743
    %v2148 = vunpack.c.l.b16 %v744
    %v2149 = vunpack.c.h.b16 %v744
    %v2150 = vunpack.c.l.b16 %v745
    %v2151 = vunpack.c.h.b16 %v745
    %v2152 = vunpack.c.l.b16 %v746
    %v2153 = vunpack.c.h.b16 %v746
    %v2154 = vunpack.c.l.b16 %v747
    %v2155 = vunpack.c.h.b16 %v747
    %v2156 = vunpack.c.l.b16 %v748
    %v2157 = vunpack.c.h.b16 %v748
    %v2158 = vunpack.c.l.b16 %v749
    %v2159 = vunpack.c.h.b16 %v749
    %v2160 = vunpack.c.l.b16 %v750
    %v2161 = vunpack.c.h.b16 %v750
    %v2162 = vunpack.c.l.b16 %v751
    %v2163 = vunpack.c.h.b16 %v751
    %v2164 = vunpack.c.l.b16 %v752
    %v2165 = vunpack.c.h.b16 %v752
    %v2166 = vunpack.c.l.b16 %v753
    %v2167 = vunpack.c.h.b16 %v753
    %v2168 = vunpack.c.l.b16 %v754
    %v2169 = vunpack.c.h.b16 %v754
    %v2170 = vunpack.c.l.b16 %v755
    %v2171 = vunpack.c.h.b16 %v755
    %v2172 = vunpack.c.l.b16 %v756
    %v2173 = vunpack.c.h.b16 %v756
    %v2174 = vunpack.c.l.b16 %v757
    %v2175 = vunpack.c.h.b16 %v757
    %v2176 = vunpack.c.l.b16 %v758
    %v2177 = vunpack.c.h.b16 %v758
    %v2178 = vunpack.c.l.b16 %v759
    %v2179 = vunpack.c.h.b16 %v759
    %v2180 = vunpack.c.l.b16 %v760
    %v2181 = vunpack.c.h.b16 %v760
    %v2182 = vunpack.c.l.b16 %v761
    %v2183 = vunpack.c.h.b16 %v761
    %v2184 = vunpack.c.l.b16 %v762
    %v2185 = vunpack.c.h.b16 %v762
    %v2186 = vunpack.c.l.b16 %v763
    %v2187 = vunpack.c.h.b16 %v763
    %v2188 = vunpack.c.l.b16 %v764
    %v2189 = vunpack.c.h.b16 %v764
    %v2190 = vunpack.c.l.b16 %v765
    %v2191 = vunpack.c.h.b16 %v765
    %v2192 = vunpack.c.l.b16 %v766
    %v2193 = vunpack.c.h.b16 %v766
    %v2194 = vunpack.c.l.b16 %v767
    %v2195 = vunpack.c.h.b16 %v767
    %v2196 = vunpack.c.l.b16 %v768
    %v2197 = vunpack.c.h.b16 %v768
    %v2198 = vunpack.c.l.b16 %v769
    %v2199 = vunpack.c.h.b16 %v769
    %v2200 = vunpack.c.l.b16 %v770
    %v2201 = vunpack.c.h.b16 %v770
    %v2202 = vunpack.c.l.b16 %v771
    %v2203 = vunpack.c.h.b16 %v771
    %v2204 = vunpack.c.l.b16 %v772
    %v2205 = vunpack.c.h.b16 %v772
    %v2206 = vunpack.c.l.b16 %v773
    %v2207 = vunpack.c.h.b16 %v773
    %v2208 = vunpack.c.l.b16 %v774
    %v2209 = vunpack.c.h.b16 %v774
    %v2210 = vunpack.c.l.b16 %v775
    %v2211 = vunpack.c.h.b16 %v775
    %v2212 = vunpack.c.l.b16 %v776
    %v2213 = vunpack.c.h.b16 %v776
    %v2214 = vunpack.c.l.b16 %v777
    %v2215 = vunpack.c.h.b16 %v777
    %v2216 = vunpack.c.l.b16 %v778
    %v2217 = vunpack.c.h.b16 %v778
    %v2218 = vunpack.c.l.b16 %v779
    %v2219 = vunpack.c.h.b16 %v779
    %v2220 = vunpack.c.l.b16 %v780
    %v2221 = vunpack.c.h.b16 %v780
    %v2222 = vunpack.c.l.b16 %v781
    %v2223 = vunpack.c.h.b16 %v781
    %v2224 = vunpack.c.l.b16 %v782
    %v2225 = vunpack.c.h.b16 %v782
    %v2226 = vunpack.c.l.b16 %v783
    %v2227 = vunpack.c.h.b16 %v783
    %v2228 = vunpack.c.l.b16 %v784
    %v2229 = vunpack.c.h.b16 %v784
    %v2230 = vunpack.c.l.b16 %v785
    %v2231 = vunpack.c.h.b16 %v785
    %v2232 = vunpack.c.l.b16 %v786
    %v2233 = vunpack.c.h.b16 %v786
    %v2234 = vunpack.c.l.b16 %v787
    %v2235 = vunpack.c.h.b16 %v787
    %v2236 = vunpack.c.l.b16 %v788
    %v2237 = vunpack.c.h.b16 %v788
    %v2238 = vunpack.c.l.b16 %v789
    %v2239 = vunpack.c.h.b16 %v789
    %v2240 = vunpack.c.l.b16 %v790
    %v2241 = vunpack.c.h.b16 %v790
    %v2242 = vunpack.c.l.b16 %v791
    %v2243 = vunpack.c.h.b16 %v791
    %v2244 = vunpack.c.l.b16 %v792
    %v2245 = vunpack.c.h.b16 %v792
    %v2246 = vunpack.c.l.b16 %v793
    %v2247 = vunpack.c.h.b16 %v793
    %v2248 = vunpack.c.l.b16 %v794
    %v2249 = vunpack.c.h.b16 %v794
    %v2250 = vunpack.c.l.b16 %v795
    %v2251 = vunpack.c.h.b16 %v795
    %v2252 = vunpack.c.l.b16 %v796
    %v2253 = vunpack.c.h.b16 %v796
    %v2254 = vunpack.c.l.b16 %v797
    %v2255 = vunpack.c.h.b16 %v797
    %v2256 = vunpack.c.l.b16 %v798
    %v2257 = vunpack.c.h.b16 %v798
    %v2258 = vunpack.c.l.b16 %v799
    %v2259 = vunpack.c.h.b16 %v799
    %v2260 = vunpack.c.l.b16 %v800
    %v2261 = vunpack.c.h.b16 %v800
    %v2262 = vunpack.c.l.b16 %v801
    %v2263 = vunpack.c.h.b16 %v801
    %v2264 = vunpack.c.l.b16 %v802
    %v2265 = vunpack.c.h.b16 %v802
    %v2266 = vunpack.c.l.b16 %v803
    %v2267 = vunpack.c.h.b16 %v803
    %v2268 = vunpack.c.l.b16 %v804
    %v2269 = vunpack.c.h.b16 %v804
    %v2270 = vunpack.c.l.b16 %v805
    %v2271 = vunpack.c.h.b16 %v805
    %v2272 = vunpack.c.l.b16 %v806
    %v2273 = vunpack.c.h.b16 %v806
    %v2274 = vunpack.c.l.b16 %v807
    %v2275 = vunpack.c.h.b16 %v807
    %v2276 = vunpack.c.l.b16 %v808
    %v2277 = vunpack.c.h.b16 %v808
    %v2278 = vunpack.c.l.b16 %v809
    %v2279 = vunpack.c.h.b16 %v809
    %v2280 = vunpack.c.l.b16 %v810
    %v2281 = vunpack.c.h.b16 %v810
    %v2282 = vunpack.c.l.b16 %v811
    %v2283 = vunpack.c.h.b16 %v811
    %v2284 = vunpack.c.l.b16 %v812
    %v2285 = vunpack.c.h.b16 %v812
    %v2286 = vunpack.c.l.b16 %v813
    %v2287 = vunpack.c.h.b16 %v813
    %v2288 = vunpack.c.l.b16 %v814
    %v2289 = vunpack.c.h.b16 %v814
    %v2290 = vunpack.c.l.b16 %v815
    %v2291 = vunpack.c.h.b16 %v815
    %v2292 = vunpack.c.l.b16 %v816
    %v2293 = vunpack.c.h.b16 %v816
    %v2294 = vunpack.c.l.b16 %v817
    %v2295 = vunpack.c.h.b16 %v817
    %v2296 = vunpack.c.l.b16 %v818
    %v2297 = vunpack.c.h.b16 %v818
    %v2298 = vunpack.c.l.b16 %v819
    %v2299 = vunpack.c.h.b16 %v819
    %v2300 = vunpack.c.l.b16 %v820
    %v2301 = vunpack.c.h.b16 %v820
    %v2302 = vunpack.c.l.b16 %v821
    %v2303 = vunpack.c.h.b16 %v821
    %v2304 = vunpack.c.l.b16 %v822
    %v2305 = vunpack.c.h.b16 %v822
    %v2306 = vunpack.c.l.b16 %v823
    %v2307 = vunpack.c.h.b16 %v823
    %v2308 = vunpack.c.l.b16 %v824
    %v2309 = vunpack.c.h.b16 %v824
    %v2310 = vunpack.c.l.b16 %v825
    %v2311 = vunpack.c.h.b16 %v825
    %v2312 = vunpack.c.l.b16 %v826
    %v2313 = vunpack.c.h.b16 %v826
    %v2314 = vunpack.c.l.b16 %v827
    %v2315 = vunpack.c.h.b16 %v827
    %v2316 = vunpack.c.l.b16 %v828
    %v2317 = vunpack.c.h.b16 %v828
    %v2318 = vunpack.c.l.b16 %v829
    %v2319 = vunpack.c.h.b16 %v829
    %v2320 = vunpack.c.l.b16 %v830
    %v2321 = vunpack.c.h.b16 %v830
    %v2322 = vunpack.c.l.b16 %v831
    %v2323 = vunpack.c.h.b16 %v831
    %v2324 = vunpack.c.l.b16 %v832
    %v2325 = vunpack.c.h.b16 %v832
    %v2326 = vunpack.c.l.b16 %v833
    %v2327 = vunpack.c.h.b16 %v833
    %v2328 = vunpack.c.l.b16 %v834
    %v2329 = vunpack.c.h.b16 %v834
    %v2330 = vunpack.c.l.b16 %v835
    %v2331 = vunpack.c.h.b16 %v835
    %v2332 = vunpack.c.l.b16 %v836
    %v2333 = vunpack.c.h.b16 %v836
    %v2334 = vunpack.c.l.b16 %v837
    %v2335 = vunpack.c.h.b16 %v837
    %v2336 = vunpack.c.l.b16 %v838
    %v2337 = vunpack.c.h.b16 %v838
    %v2338 = vunpack.c.l.b16 %v839
    %v2339 = vunpack.c.h.b16 %v839
    %v2340 = vunpack.c.l.b16 %v840
    %v2341 = vunpack.c.h.b16 %v840
    %v2342 = vunpack.c.l.b16 %v841
    %v2343 = vunpack.c.h.b16 %v841
    %v2344 = vunpack.c.l.b16 %v842
    %v2345 = vunpack.c.h.b16 %v842
    %v2346 = vunpack.c.l.b16 %v843
    %v2347 = vunpack.c.h.b16 %v843
    %v2348 = vunpack.c.l.b16 %v844
    %v2349 = vunpack.c.h.b16 %v844
    %v2350 = vunpack.c.l.b16 %v845
    %v2351 = vunpack.c.h.b16 %v845
    %v2352 = vunpack.c.l.b16 %v846
    %v2353 = vunpack.c.h.b16 %v846
    %v2354 = vunpack.c.l.b16 %v847
    %v2355 = vunpack.c.h.b16 %v847
    %v2356 = vunpack.c.l.b16 %v848
    %v2357 = vunpack.c.h.b16 %v848
    %v2358 = vunpack.c.l.b16 %v849
    %v2359 = vunpack.c.h.b16 %v849
    %v2360 = vunpack.c.l.b16 %v850
    %v2361 = vunpack.c.h.b16 %v850
    %v2362 = vunpack.c.l.b16 %v851
    %v2363 = vunpack.c.h.b16 %v851
    %v2364 = vunpack.c.l.b16 %v852
    %v2365 = vunpack.c.h.b16 %v852
    %v2366 = vunpack.c.l.b16 %v853
    %v2367 = vunpack.c.h.b16 %v853
    %v2368 = vunpack.c.l.b16 %v854
    %v2369 = vunpack.c.h.b16 %v854
    %v2370 = vunpack.c.l.b16 %v855
    %v2371 = vunpack.c.h.b16 %v855
    %v2372 = vunpack.c.l.b16 %v856
    %v2373 = vunpack.c.h.b16 %v856
    %v2374 = vunpack.c.l.b16 %v857
    %v2375 = vunpack.c.h.b16 %v857
    %v2376 = vunpack.c.l.b16 %v858
    %v2377 = vunpack.c.h.b16 %v858
    %v2378 = vunpack.c.l.b16 %v859
    %v2379 = vunpack.c.h.b16 %v859
    %v2380 = vunpack.c.l.b16 %v860
    %v2381 = vunpack.c.h.b16 %v860
    %v2382 = vunpack.c.l.b16 %v861
    %v2383 = vunpack.c.h.b16 %v861
    %v2384 = vunpack.c.l.b16 %v862
    %v2385 = vunpack.c.h.b16 %v862
    %v2386 = vunpack.c.l.b16 %v863
    %v2387 = vunpack.c.h.b16 %v863
    %v2388 = vunpack.c.l.b16 %v864
    %v2389 = vunpack.c.h.b16 %v864
    %v2390 = vunpack.c.l.b16 %v865
    %v2391 = vunpack.c.h.b16 %v865
    %v2392 = vunpack.c.l.b16 %v866
    %v2393 = vunpack.c.h.b16 %v866
    %v2394 = vunpack.c.l.b16 %v867
    %v2395 = vunpack.c.h.b16 %v867
    %v2396 = vunpack.c.l.b16 %v868
    %v2397 = vunpack.c.h.b16 %v868
    %v2398 = vunpack.c.l.b16 %v869
    %v2399 = vunpack.c.h.b16 %v869
    %v2400 = vunpack.c.l.b16 %v870
    %v2401 = vunpack.c.h.b16 %v870
    %v2402 = vunpack.c.l.b16 %v871
    %v2403 = vunpack.c.h.b16 %v871
    %v2404 = vunpack.c.l.b16 %v872
    %v2405 = vunpack.c.h.b16 %v872
    %v2406 = vunpack.c.l.b16 %v873
    %v2407 = vunpack.c.h.b16 %v873
    %v2408 = vunpack.c.l.b16 %v874
    %v2409 = vunpack.c.h.b16 %v874
    %v2410 = vunpack.c.l.b16 %v875
    %v2411 = vunpack.c.h.b16 %v875
    %v2412 = vunpack.c.l.b16 %v876
    %v2413 = vunpack.c.h.b16 %v876
    %v2414 = vunpack.c.l.b16 %v877
    %v2415 = vunpack.c.h.b16 %v877
    %v2416 = vunpack.c.l.b16 %v878
    %v2417 = vunpack.c.h.b16 %v878
    %v2418 = vunpack.c.l.b16 %v879
    %v2419 = vunpack.c.h.b16 %v879
    %v2420 = vunpack.c.l.b16 %v880
    %v2421 = vunpack.c.h.b16 %v880
    %v2422 = vunpack.c.l.b16 %v881
    %v2423 = vunpack.c.h.b16 %v881
    %v2424 = vunpack.c.l.b16 %v882
    %v2425 = vunpack.c.h.b16 %v882
    %v2426 = vunpack.c.l.b16 %v883
    %v2427 = vunpack.c.h.b16 %v883
    %v2428 = vunpack.c.l.b16 %v884
    %v2429 = vunpack.c.h.b16 %v884
    %v2430 = vunpack.c.l.b16 %v885
    %v2431 = vunpack.c.h.b16 %v885
    %v2432 = vunpack.c.l.b16 %v886
    %v2433 = vunpack.c.h.b16 %v886
    %v2434 = vunpack.c.l.b16 %v887
    %v2435 = vunpack.c.h.b16 %v887
    %v2436 = vpack.c.b16 %v1414, %v1412
    %v2437 = vpack.c.b16 %v1415, %v1413
    %v2438 = vpack.c.b16 %v1418, %v1416
    %v2439 = vpack.c.b16 %v1419, %v1417
    %v2440 = vpack.c.b16 %v1422, %v1420
    %v2441 = vpack.c.b16 %v1423, %v1421
    %v2442 = vpack.c.b16 %v1426, %v1424
    %v2443 = vpack.c.b16 %v1427, %v1425
    %v2444 = vpack.c.b16 %v1430, %v1428
    %v2445 = vpack.c.b16 %v1431, %v1429
    %v2446 = vpack.c.b16 %v1434, %v1432
    %v2447 = vpack.c.b16 %v1435, %v1433
    %v2448 = vpack.c.b16 %v1438, %v1436
    %v2449 = vpack.c.b16 %v1439, %v1437
    %v2450 = vpack.c.b16 %v1442, %v1440
    %v2451 = vpack.c.b16 %v1443, %v1441
    %v2452 = vpack.c.b16 %v1446, %v1444
    %v2453 = vpack.c.b16 %v1447, %v1445
    %v2454 = vpack.c.b16 %v1450, %v1448
    %v2455 = vpack.c.b16 %v1451, %v1449
    %v2456 = vpack.c.b16 %v1454, %v1452
    %v2457 = vpack.c.b16 %v1455, %v1453
    %v2458 = vpack.c.b16 %v1458, %v1456
    %v2459 = vpack.c.b16 %v1459, %v1457
    %v2460 = vpack.c.b16 %v1462, %v1460
    %v2461 = vpack.c.b16 %v1463, %v1461
    %v2462 = vpack.c.b16 %v1466, %v1464
    %v2463 = vpack.c.b16 %v1467, %v1465
    %v2464 = vpack.c.b16 %v1470, %v1468
    %v2465 = vpack.c.b16 %v1471, %v1469
    %v2466 = vpack.c.b16 %v1474, %v1472
    %v2467 = vpack.c.b16 %v1475, %v1473
    %v2468 = vpack.c.b16 %v1478, %v1476
    %v2469 = vpack.c.b16 %v1479, %v1477
    %v2470 = vpack.c.b16 %v1482, %v1480
    %v2471 = vpack.c.b16 %v1483, %v1481
    %v2472 = vpack.c.b16 %v1486, %v1484
    %v2473 = vpack.c.b16 %v1487, %v1485
    %v2474 = vpack.c.b16 %v1490, %v1488
    %v2475 = vpack.c.b16 %v1491, %v1489
    %v2476 = vpack.c.b16 %v1494, %v1492
    %v2477 = vpack.c.b16 %v1495, %v1493
    %v2478 = vpack.c.b16 %v1498, %v1496
    %v2479 = vpack.c.b16 %v1499, %v1497
    %v2480 = vpack.c.b16 %v1502, %v1500
    %v2481 = vpack.c.b16 %v1503, %v1501
    %v2482 = vpack.c.b16 %v1506, %v1504
    %v2483 = vpack.c.b16 %v1507, %v1505
    %v2484 = vpack.c.b16 %v1510, %v1508
    %v2485 = vpack.c.b16 %v1511, %v1509
    %v2486 = vpack.c.b16 %v1514, %v1512
    %v2487 = vpack.c.b16 %v1515, %v1513
    %v2488 = vpack.c.b16 %v1518, %v1516
    %v2489 = vpack.c.b16 %v1519, %v1517
    %v2490 = vpack.c.b16 %v1522, %v1520
    %v2491 = vpack.c.b16 %v1523, %v1521
    %v2492 = vpack.c.b16 %v1526, %v1524
    %v2493 = vpack.c.b16 %v1527, %v1525
    %v2494 = vpack.c.b16 %v1530, %v1528
    %v2495 = vpack.c.b16 %v1531, %v1529
    %v2496 = vpack.c.b16 %v1534, %v1532
    %v2497 = vpack.c.b16 %v1535, %v1533
    %v2498 = vpack.c.b16 %v1538, %v1536
    %v2499 = vpack.c.b16 %v1539, %v1537
    %v2500 = vpack.c.b16 %v1542, %v1540
    %v2501 = vpack.c.b16 %v1543, %v1541
    %v2502 = vpack.c.b16 %v1546, %v1544
    %v2503 = vpack.c.b16 %v1547, %v1545
    %v2504 = vpack.c.b16 %v1550, %v1548
    %v2505 = vpack.c.b16 %v1551, %v1549
    %v2506 = vpack.c.b16 %v1554, %v1552
    %v2507 = vpack.c.b16 %v1555, %v1553
    %v2508 = vpack.c.b16 %v1558, %v1556
    %v2509 = vpack.c.b16 %v1559, %v1557
    %v2510 = vpack.c.b16 %v1562, %v1560
    %v2511 = vpack.c.b16 %v1563, %v1561
    %v2512 = vpack.c.b16 %v1566, %v1564
    %v2513 = vpack.c.b16 %v1567, %v1565
    %v2514 = vpack.c.b16 %v1570, %v1568
    %v2515 = vpack.c.b16 %v1571, %v1569
    %v2516 = vpack.c.b16 %v1574, %v1572
    %v2517 = vpack.c.b16 %v1575, %v1573
    %v2518 = vpack.c.b16 %v1578, %v1576
    %v2519 = vpack.c.b16 %v1579, %v1577
    %v2520 = vpack.c.b16 %v1582, %v1580
    %v2521 = vpack.c.b16 %v1583, %v1581
    %v2522 = vpack.c.b16 %v1586, %v1584
    %v2523 = vpack.c.b16 %v1587, %v1585
    %v2524 = vpack.c.b16 %v1590, %v1588
    %v2525 = vpack.c.b16 %v1591, %v1589
    %v2526 = vpack.c.b16 %v1594, %v1592
    %v2527 = vpack.c.b16 %v1595, %v1593
    %v2528 = vpack.c.b16 %v1598, %v1596
    %v2529 = vpack.c.b16 %v1599, %v1597
    %v2530 = vpack.c.b16 %v1602, %v1600
    %v2531 = vpack.c.b16 %v1603, %v1601
    %v2532 = vpack.c.b16 %v1606, %v1604
    %v2533 = vpack.c.b16 %v1607, %v1605
    %v2534 = vpack.c.b16 %v1610, %v1608
    %v2535 = vpack.c.b16 %v1611, %v1609
    %v2536 = vpack.c.b16 %v1614, %v1612
    %v2537 = vpack.c.b16 %v1615, %v1613
    %v2538 = vpack.c.b16 %v1618, %v1616
    %v2539 = vpack.c.b16 %v1619, %v1617
    %v2540 = vpack.c.b16 %v1622, %v1620
    %v2541 = vpack.c.b16 %v1623, %v1621
    %v2542 = vpack.c.b16 %v1626, %v1624
    %v2543 = vpack.c.b16 %v1627, %v1625
    %v2544 = vpack.c.b16 %v1630, %v1628
    %v2545 = vpack.c.b16 %v1631, %v1629
    %v2546 = vpack.c.b16 %v1634, %v1632
    %v2547 = vpack.c.b16 %v1635, %v1633
    %v2548 = vpack.c.b16 %v1638, %v1636
    %v2549 = vpack.c.b16 %v1639, %v1637
    %v2550 = vpack.c.b16 %v1642, %v1640
    %v2551 = vpack.c.b16 %v1643, %v1641
    %v2552 = vpack.c.b16 %v1646, %v1644
    %v2553 = vpack.c.b16 %v1647, %v1645
    %v2554 = vpack.c.b16 %v1650, %v1648
    %v2555 = vpack.c.b16 %v1651, %v1649
    %v2556 = vpack.c.b16 %v1654, %v1652
    %v2557 = vpack.c.b16 %v1655, %v1653
    %v2558 = vpack.c.b16 %v1658, %v1656
    %v2559 = vpack.c.b16 %v1659, %v1657
    %v2560 = vpack.c.b16 %v1662, %v1660
    %v2561 = vpack.c.b16 %v1663, %v1661
    %v2562 = vpack.c.b16 %v1666, %v1664
    %v2563 = vpack.c.b16 %v1667, %v1665
    %v2564 = vpack.c.b16 %v1670, %v1668
    %v2565 = vpack.c.b16 %v1671, %v1669
    %v2566 = vpack.c.b16 %v1674, %v1672
    %v2567 = vpack.c.b16 %v1675, %v1673
    %v2568 = vpack.c.b16 %v1678, %v1676
    %v2569 = vpack.c.b16 %v1679, %v1677
    %v2570 = vpack.c.b16 %v1682, %v1680
    %v2571 = vpack.c.b16 %v1683, %v1681
    %v2572 = vpack.c.b16 %v1686, %v1684
    %v2573 = vpack.c.b16 %v1687, %v1685
    %v2574 = vpack.c.b16 %v1690, %v1688
    %v2575 = vpack.c.b16 %v1691, %v1689
    %v2576 = vpack.c.b16 %v1694, %v1692
    %v2577 = vpack.c.b16 %v1695, %v1693
    %v2578 = vpack.c.b16 %v1698, %v1696
    %v2579 = vpack.c.b16 %v1699, %v1697
    %v2580 = vpack.c.b16 %v1702, %v1700
    %v2581 = vpack.c.b16 %v1703, %v1701
    %v2582 = vpack.c.b16 %v1706, %v1704
    %v2583 = vpack.c.b16 %v1707, %v1705
    %v2584 = vpack.c.b16 %v1710, %v1708
    %v2585 = vpack.c.b16 %v1711, %v1709
    %v2586 = vpack.c.b16 %v1714, %v1712
    %v2587 = vpack.c.b16 %v1715, %v1713
    %v2588 = vpack.c.b16 %v1718, %v1716
    %v2589 = vpack.c.b16 %v1719, %v1717
    %v2590 = vpack.c.b16 %v1722, %v1720
    %v2591 = vpack.c.b16 %v1723, %v1721
    %v2592 = vpack.c.b16 %v1726, %v1724
    %v2593 = vpack.c.b16 %v1727, %v1725
    %v2594 = vpack.c.b16 %v1730, %v1728
    %v2595 = vpack.c.b16 %v1731, %v1729
    %v2596 = vpack.c.b16 %v1734, %v1732
    %v2597 = vpack.c.b16 %v1735, %v1733
    %v2598 = vpack.c.b16 %v1738, %v1736
    %v2599 = vpack.c.b16 %v1739, %v1737
    %v2600 = vpack.c.b16 %v1742, %v1740
    %v2601 = vpack.c.b16 %v1743, %v1741
    %v2602 = vpack.c.b16 %v1746, %v1744
    %v2603 = vpack.c.b16 %v1747, %v1745
    %v2604 = vpack.c.b16 %v1750, %v1748
    %v2605 = vpack.c.b16 %v1751, %v1749
    %v2606 = vpack.c.b16 %v1754, %v1752
    %v2607 = vpack.c.b16 %v1755, %v1753
    %v2608 = vpack.c.b16 %v1758, %v1756
    %v2609 = vpack.c.b16 %v1759, %v1757
    %v2610 = vpack.c.b16 %v1762, %v1760
    %v2611 = vpack.c.b16 %v1763, %v1761
    %v2612 = vpack.c.b16 %v1766, %v1764
    %v2613 = vpack.c.b16 %v1767, %v1765
    %v2614 = vpack.c.b16 %v1770, %v1768
    %v2615 = vpack.c.b16 %v1771, %v1769
    %v2616 = vpack.c.b16 %v1774, %v1772
    %v2617 = vpack.c.b16 %v1775, %v1773
    %v2618 = vpack.c.b16 %v1778, %v1776
    %v2619 = vpack.c.b16 %v1779, %v1777
    %v2620 = vpack.c.b16 %v1782, %v1780
    %v2621 = vpack.c.b16 %v1783, %v1781
    %v2622 = vpack.c.b16 %v1786, %v1784
    %v2623 = vpack.c.b16 %v1787, %v1785
    %v2624 = vpack.c.b16 %v1790, %v1788
    %v2625 = vpack.c.b16 %v1791, %v1789
    %v2626 = vpack.c.b16 %v1794, %v1792
    %v2627 = vpack.c.b16 %v1795, %v1793
    %v2628 = vpack.c.b16 %v1798, %v1796
    %v2629 = vpack.c.b16 %v1799, %v1797
    %v2630 = vpack.c.b16 %v1802, %v1800
    %v2631 = vpack.c.b16 %v1803, %v1801
    %v2632 = vpack.c.b16 %v1806, %v1804
    %v2633 = vpack.c.b16 %v1807, %v1805
    %v2634 = vpack.c.b16 %v1810, %v1808
    %v2635 = vpack.c.b16 %v1811, %v1809
    %v2636 = vpack.c.b16 %v1814, %v1812
    %v2637 = vpack.c.b16 %v1815, %v1813
    %v2638 = vpack.c.b16 %v1818, %v1816
    %v2639 = vpack.c.b16 %v1819, %v1817
    %v2640 = vpack.c.b16 %v1822, %v1820
    %v2641 = vpack.c.b16 %v1823, %v1821
    %v2642 = vpack.c.b16 %v1826, %v1824
    %v2643 = vpack.c.b16 %v1827, %v1825
    %v2644 = vpack.c.b16 %v1830, %v1828
    %v2645 = vpack.c.b16 %v1831, %v1829
    %v2646 = vpack.c.b16 %v1834, %v1832
    %v2647 = vpack.c.b16 %v1835, %v1833
    %v2648 = vpack.c.b16 %v1838, %v1836
    %v2649 = vpack.c.b16 %v1839, %v1837
    %v2650 = vpack.c.b16 %v1842, %v1840
    %v2651 = vpack.c.b16 %v1843, %v1841
    %v2652 = vpack.c.b16 %v1846, %v1844
    %v2653 = vpack.c.b16 %v1847, %v1845
    %v2654 = vpack.c.b16 %v1850, %v1848
    %v2655 = vpack.c.b16 %v1851, %v1849
    %v2656 = vpack.c.b16 %v1854, %v1852
    %v2657 = vpack.c.b16 %v1855, %v1853
    %v2658 = vpack.c.b16 %v1858, %v1856
    %v2659 = vpack.c.b16 %v1859, %v1857
    %v2660 = vpack.c.b16 %v1862, %v1860
    %v2661 = vpack.c.b16 %v1863, %v1861
    %v2662 = vpack.c.b16 %v1866, %v1864
    %v2663 = vpack.c.b16 %v1867, %v1865
    %v2664 = vpack.c.b16 %v1870, %v1868
    %v2665 = vpack.c.b16 %v1871, %v1869
    %v2666 = vpack.c.b16 %v1874, %v1872
    %v2667 = vpack.c.b16 %v1875, %v1873
    %v2668 = vpack.c.b16 %v1878, %v1876
    %v2669 = vpack.c.b16 %v1879, %v1877
    %v2670 = vpack.c.b16 %v1882, %v1880
    %v2671 = vpack.c.b16 %v1883, %v1881
    %v2672 = vpack.c.b16 %v1886, %v1884
    %v2673 = vpack.c.b16 %v1887, %v1885
    %v2674 = vpack.c.b16 %v1890, %v1888
    %v2675 = vpack.c.b16 %v1891, %v1889
    %v2676 = vpack.c.b16 %v1894, %v1892
    %v2677 = vpack.c.b16 %v1895, %v1893
    %v2678 = vpack.c.b16 %v1898, %v1896
    %v2679 = vpack.c.b16 %v1899, %v1897
    %v2680 = vpack.c.b16 %v1902, %v1900
    %v2681 = vpack.c.b16 %v1903, %v1901
    %v2682 = vpack.c.b16 %v1906, %v1904
    %v2683 = vpack.c.b16 %v1907, %v1905
    %v2684 = vpack.c.b16 %v1910, %v1908
    %v2685 = vpack.c.b16 %v1911, %v1909
    %v2686 = vpack.c.b16 %v1914, %v1912
    %v2687 = vpack.c.b16 %v1915, %v1913
    %v2688 = vpack.c.b16 %v1918, %v1916
    %v2689 = vpack.c.b16 %v1919, %v1917
    %v2690 = vpack.c.b16 %v1922, %v1920
    %v2691 = vpack.c.b16 %v1923, %v1921
    %v2692 = vpack.c.b16 %v1926, %v1924
    %v2693 = vpack.c.b16 %v1927, %v1925
    %v2694 = vpack.c.b16 %v1930, %v1928
    %v2695 = vpack.c.b16 %v1931, %v1929
    %v2696 = vpack.c.b16 %v1934, %v1932
    %v2697 = vpack.c.b16 %v1935, %v1933
    %v2698 = vpack.c.b16 %v1938, %v1936
    %v2699 = vpack.c.b16 %v1939, %v1937
    %v2700 = vpack.c.b16 %v1942, %v1940
    %v2701 = vpack.c.b16 %v1943, %v1941
    %v2702 = vpack.c.b16 %v1946, %v1944
    %v2703 = vpack.c.b16 %v1947, %v1945
    %v2704 = vpack.c.b16 %v1950, %v1948
    %v2705 = vpack.c.b16 %v1951, %v1949
    %v2706 = vpack.c.b16 %v1954, %v1952
    %v2707 = vpack.c.b16 %v1955, %v1953
    %v2708 = vpack.c.b16 %v1958, %v1956
    %v2709 = vpack.c.b16 %v1959, %v1957
    %v2710 = vpack.c.b16 %v1962, %v1960
    %v2711 = vpack.c.b16 %v1963, %v1961
    %v2712 = vpack.c.b16 %v1966, %v1964
    %v2713 = vpack.c.b16 %v1967, %v1965
    %v2714 = vpack.c.b16 %v1970, %v1968
    %v2715 = vpack.c.b16 %v1971, %v1969
    %v2716 = vpack.c.b16 %v1974, %v1972
    %v2717 = vpack.c.b16 %v1975, %v1973
    %v2718 = vpack.c.b16 %v1978, %v1976
    %v2719 = vpack.c.b16 %v1979, %v1977
    %v2720 = vpack.c.b16 %v1982, %v1980
    %v2721 = vpack.c.b16 %v1983, %v1981
    %v2722 = vpack.c.b16 %v1986, %v1984
    %v2723 = vpack.c.b16 %v1987, %v1985
    %v2724 = vpack.c.b16 %v1990, %v1988
    %v2725 = vpack.c.b16 %v1991, %v1989
    %v2726 = vpack.c.b16 %v1994, %v1992
    %v2727 = vpack.c.b16 %v1995, %v1993
    %v2728 = vpack.c.b16 %v1998, %v1996
    %v2729 = vpack.c.b16 %v1999, %v1997
    %v2730 = vpack.c.b16 %v2002, %v2000
    %v2731 = vpack.c.b16 %v2003, %v2001
    %v2732 = vpack.c.b16 %v2006, %v2004
    %v2733 = vpack.c.b16 %v2007, %v2005
    %v2734 = vpack.c.b16 %v2010, %v2008
    %v2735 = vpack.c.b16 %v2011, %v2009
    %v2736 = vpack.c.b16 %v2014, %v2012
    %v2737 = vpack.c.b16 %v2015, %v2013
    %v2738 = vpack.c.b16 %v2018, %v2016
    %v2739 = vpack.c.b16 %v2019, %v2017
    %v2740 = vpack.c.b16 %v2022, %v2020
    %v2741 = vpack.c.b16 %v2023, %v2021
    %v2742 = vpack.c.b16 %v2026, %v2024
    %v2743 = vpack.c.b16 %v2027, %v2025
    %v2744 = vpack.c.b16 %v2030, %v2028
    %v2745 = vpack.c.b16 %v2031, %v2029
    %v2746 = vpack.c.b16 %v2034, %v2032
    %v2747 = vpack.c.b16 %v2035, %v2033
    %v2748 = vpack.c.b16 %v2038, %v2036
    %v2749 = vpack.c.b16 %v2039, %v2037
    %v2750 = vpack.c.b16 %v2042, %v2040
    %v2751 = vpack.c.b16 %v2043, %v2041
    %v2752 = vpack.c.b16 %v2046, %v2044
    %v2753 = vpack.c.b16 %v2047, %v2045
    %v2754 = vpack.c.b16 %v2050, %v2048
    %v2755 = vpack.c.b16 %v2051, %v2049
    %v2756 = vpack.c.b16 %v2054, %v2052
    %v2757 = vpack.c.b16 %v2055, %v2053
    %v2758 = vpack.c.b16 %v2058, %v2056
    %v2759 = vpack.c.b16 %v2059, %v2057
    %v2760 = vpack.c.b16 %v2062, %v2060
    %v2761 = vpack.c.b16 %v2063, %v2061
    %v2762 = vpack.c.b16 %v2066, %v2064
    %v2763 = vpack.c.b16 %v2067, %v2065
    %v2764 = vpack.c.b16 %v2070, %v2068
    %v2765 = vpack.c.b16 %v2071, %v2069
    %v2766 = vpack.c.b16 %v2074, %v2072
    %v2767 = vpack.c.b16 %v2075, %v2073
    %v2768 = vpack.c.b16 %v2078, %v2076
    %v2769 = vpack.c.b16 %v2079, %v2077
    %v2770 = vpack.c.b16 %v2082, %v2080
    %v2771 = vpack.c.b16 %v2083, %v2081
    %v2772 = vpack.c.b16 %v2086, %v2084
    %v2773 = vpack.c.b16 %v2087, %v2085
    %v2774 = vpack.c.b16 %v2090, %v2088
    %v2775 = vpack.c.b16 %v2091, %v2089
    %v2776 = vpack.c.b16 %v2094, %v2092
    %v2777 = vpack.c.b16 %v2095, %v2093
    %v2778 = vpack.c.b16 %v2098, %v2096
    %v2779 = vpack.c.b16 %v2099, %v2097
    %v2780 = vpack.c.b16 %v2102, %v2100
    %v2781 = vpack.c.b16 %v2103, %v2101
    %v2782 = vpack.c.b16 %v2106, %v2104
    %v2783 = vpack.c.b16 %v2107, %v2105
    %v2784 = vpack.c.b16 %v2110, %v2108
    %v2785 = vpack.c.b16 %v2111, %v2109
    %v2786 = vpack.c.b16 %v2114, %v2112
    %v2787 = vpack.c.b16 %v2115, %v2113
    %v2788 = vpack.c.b16 %v2118, %v2116
    %v2789 = vpack.c.b16 %v2119, %v2117
    %v2790 = vpack.c.b16 %v2122, %v2120
    %v2791 = vpack.c.b16 %v2123, %v2121
    %v2792 = vpack.c.b16 %v2126, %v2124
    %v2793 = vpack.c.b16 %v2127, %v2125
    %v2794 = vpack.c.b16 %v2130, %v2128
    %v2795 = vpack.c.b16 %v2131, %v2129
    %v2796 = vpack.c.b16 %v2134, %v2132
    %v2797 = vpack.c.b16 %v2135, %v2133
    %v2798 = vpack.c.b16 %v2138, %v2136
    %v2799 = vpack.c.b16 %v2139, %v2137
    %v2800 = vpack.c.b16 %v2142, %v2140
    %v2801 = vpack.c.b16 %v2143, %v2141
    %v2802 = vpack.c.b16 %v2146, %v2144
    %v2803 = vpack.c.b16 %v2147, %v2145
    %v2804 = vpack.c.b16 %v2150, %v2148
    %v2805 = vpack.c.b16 %v2151, %v2149
    %v2806 = vpack.c.b16 %v2154, %v2152
    %v2807 = vpack.c.b16 %v2155, %v2153
    %v2808 = vpack.c.b16 %v2158, %v2156
    %v2809 = vpack.c.b16 %v2159, %v2157
    %v2810 = vpack.c.b16 %v2162, %v2160
    %v2811 = vpack.c.b16 %v2163, %v2161
    %v2812 = vpack.c.b16 %v2166, %v2164
    %v2813 = vpack.c.b16 %v2167, %v2165
    %v2814 = vpack.c.b16 %v2170, %v2168
    %v2815 = vpack.c.b16 %v2171, %v2169
    %v2816 = vpack.c.b16 %v2174, %v2172
    %v2817 = vpack.c.b16 %v2175, %v2173
    %v2818 = vpack.c.b16 %v2178, %v2176
    %v2819 = vpack.c.b16 %v2179, %v2177
    %v2820 = vpack.c.b16 %v2182, %v2180
    %v2821 = vpack.c.b16 %v2183, %v2181
    %v2822 = vpack.c.b16 %v2186, %v2184
    %v2823 = vpack.c.b16 %v2187, %v2185
    %v2824 = vpack.c.b16 %v2190, %v2188
    %v2825 = vpack.c.b16 %v2191, %v2189
    %v2826 = vpack.c.b16 %v2194, %v2192
    %v2827 = vpack.c.b16 %v2195, %v2193
    %v2828 = vpack.c.b16 %v2198, %v2196
    %v2829 = vpack.c.b16 %v2199, %v2197
    %v2830 = vpack.c.b16 %v2202, %v2200
    %v2831 = vpack.c.b16 %v2203, %v2201
    %v2832 = vpack.c.b16 %v2206, %v2204
    %v2833 = vpack.c.b16 %v2207, %v2205
    %v2834 = vpack.c.b16 %v2210, %v2208
    %v2835 = vpack.c.b16 %v2211, %v2209
    %v2836 = vpack.c.b16 %v2214, %v2212
    %v2837 = vpack.c.b16 %v2215, %v2213
    %v2838 = vpack.c.b16 %v2218, %v2216
    %v2839 = vpack.c.b16 %v2219, %v2217
    %v2840 = vpack.c.b16 %v2222, %v2220
    %v2841 = vpack.c.b16 %v2223, %v2221
    %v2842 = vpack.c.b16 %v2226, %v2224
    %v2843 = vpack.c.b16 %v2227, %v2225
    %v2844 = vpack.c.b16 %v2230, %v2228
    %v2845 = vpack.c.b16 %v2231, %v2229
    %v2846 = vpack.c.b16 %v2234, %v2232
    %v2847 = vpack.c.b16 %v2235, %v2233
    %v2848 = vpack.c.b16 %v2238, %v2236
    %v2849 = vpack.c.b16 %v2239, %v2237
    %v2850 = vpack.c.b16 %v2242, %v2240
    %v2851 = vpack.c.b16 %v2243, %v2241
    %v2852 = vpack.c.b16 %v2246, %v2244
    %v2853 = vpack.c.b16 %v2247, %v2245
    %v2854 = vpack.c.b16 %v2250, %v2248
    %v2855 = vpack.c.b16 %v2251, %v2249
    %v2856 = vpack.c.b16 %v2254, %v2252
    %v2857 = vpack.c.b16 %v2255, %v2253
    %v2858 = vpack.c.b16 %v2258, %v2256
    %v2859 = vpack.c.b16 %v2259, %v2257
    %v2860 = vpack.c.b16 %v2262, %v2260
    %v2861 = vpack.c.b16 %v2263, %v2261
    %v2862 = vpack.c.b16 %v2266, %v2264
    %v2863 = vpack.c.b16 %v2267, %v2265
    %v2864 = vpack.c.b16 %v2270, %v2268
    %v2865 = vpack.c.b16 %v2271, %v2269
    %v2866 = vpack.c.b16 %v2274, %v2272
    %v2867 = vpack.c.b16 %v2275, %v2273
    %v2868 = vpack.c.b16 %v2278, %v2276
    %v2869 = vpack.c.b16 %v2279, %v2277
    %v2870 = vpack.c.b16 %v2282, %v2280
    %v2871 = vpack.c.b16 %v2283, %v2281
    %v2872 = vpack.c.b16 %v2286, %v2284
    %v2873 = vpack.c.b16 %v2287, %v2285
    %v2874 = vpack.c.b16 %v2290, %v2288
    %v2875 = vpack.c.b16 %v2291, %v2289
    %v2876 = vpack.c.b16 %v2294, %v2292
    %v2877 = vpack.c.b16 %v2295, %v2293
    %v2878 = vpack.c.b16 %v2298, %v2296
    %v2879 = vpack.c.b16 %v2299, %v2297
    %v2880 = vpack.c.b16 %v2302, %v2300
    %v2881 = vpack.c.b16 %v2303, %v2301
    %v2882 = vpack.c.b16 %v2306, %v2304
    %v2883 = vpack.c.b16 %v2307, %v2305
    %v2884 = vpack.c.b16 %v2310, %v2308
    %v2885 = vpack.c.b16 %v2311, %v2309
    %v2886 = vpack.c.b16 %v2314, %v2312
    %v2887 = vpack.c.b16 %v2315, %v2313
    %v2888 = vpack.c.b16 %v2318, %v2316
    %v2889 = vpack.c.b16 %v2319, %v2317
    %v2890 = vpack.c.b16 %v2322, %v2320
    %v2891 = vpack.c.b16 %v2323, %v2321
    %v2892 = vpack.c.b16 %v2326, %v2324
    %v2893 = vpack.c.b16 %v2327, %v2325
    %v2894 = vpack.c.b16 %v2330, %v2328
    %v2895 = vpack.c.b16 %v2331, %v2329
    %v2896 = vpack.c.b16 %v2334, %v2332
    %v2897 = vpack.c.b16 %v2335, %v2333
    %v2898 = vpack.c.b16 %v2338, %v2336
    %v2899 = vpack.c.b16 %v2339, %v2337
    %v2900 = vpack.c.b16 %v2342, %v2340
    %v2901 = vpack.c.b16 %v2343, %v2341
    %v2902 = vpack.c.b16 %v2346, %v2344
    %v2903 = vpack.c.b16 %v2347, %v2345
    %v2904 = vpack.c.b16 %v2350, %v2348
    %v2905 = vpack.c.b16 %v2351, %v2349
    %v2906 = vpack.c.b16 %v2354, %v2352
    %v2907 = vpack.c.b16 %v2355, %v2353
    %v2908 = vpack.c.b16 %v2358, %v2356
    %v2909 = vpack.c.b16 %v2359, %v2357
    %v2910 = vpack.c.b16 %v2362, %v2360
    %v2911 = vpack.c.b16 %v2363, %v2361
    %v2912 = vpack.c.b16 %v2366, %v2364
    %v2913 = vpack.c.b16 %v2367, %v2365
    %v2914 = vpack.c.b16 %v2370, %v2368
    %v2915 = vpack.c.b16 %v2371, %v2369
    %v2916 = vpack.c.b16 %v2374, %v2372
    %v2917 = vpack.c.b16 %v2375, %v2373
    %v2918 = vpack.c.b16 %v2378, %v2376
    %v2919 = vpack.c.b16 %v2379, %v2377
    %v2920 = vpack.c.b16 %v2382, %v2380
    %v2921 = vpack.c.b16 %v2383, %v2381
    %v2922 = vpack.c.b16 %v2386, %v2384
    %v2923 = vpack.c.b16 %v2387, %v2385
    %v2924 = vpack.c.b16 %v2390, %v2388
    %v2925 = vpack.c.b16 %v2391, %v2389
    %v2926 = vpack.c.b16 %v2394, %v2392
    %v2927 = vpack.c.b16 %v2395, %v2393
    %v2928 = vpack.c.b16 %v2398, %v2396
    %v2929 = vpack.c.b16 %v2399, %v2397
    %v2930 = vpack.c.b16 %v2402, %v2400
    %v2931 = vpack.c.b16 %v2403, %v2401
    %v2932 = vpack.c.b16 %v2406, %v2404
    %v2933 = vpack.c.b16 %v2407, %v2405
    %v2934 = vpack.c.b16 %v2410, %v2408
    %v2935 = vpack.c.b16 %v2411, %v2409
    %v2936 = vpack.c.b16 %v2414, %v2412
    %v2937 = vpack.c.b16 %v2415, %v2413
    %v2938 = vpack.c.b16 %v2418, %v2416
    %v2939 = vpack.c.b16 %v2419, %v2417
    %v2940 = vpack.c.b16 %v2422, %v2420
    %v2941 = vpack.c.b16 %v2423, %v2421
    %v2942 = vpack.c.b16 %v2426, %v2424
    %v2943 = vpack.c.b16 %v2427, %v2425
    %v2944 = vpack.c.b16 %v2430, %v2428
    %v2945 = vpack.c.b16 %v2431, %v2429
    %v2946 = vpack.c.b16 %v2434, %v2432
    %v2947 = vpack.c.b16 %v2435, %v2433
    %3460 = vmatprep.subr.bf16.mxu0 %v2451
    %3461 = vmatpush1.bf16.msra.mxu0 %v2450
    %3462 = vmatprep.subr.bf16.mxu0 %v2449
    %3463 = vmatpush1.bf16.msra.mxu0 %v2448
    %3464 = vmatprep.subr.bf16.mxu0 %v2447
    %3465 = vmatpush1.bf16.msra.mxu0 %v2446
    %3466 = vmatprep.subr.bf16.mxu0 %v2445
    %3467 = vmatpush1.bf16.msra.mxu0 %v2444
    %3468 = vmatprep.subr.bf16.mxu0 %v2443
    %3469 = vmatpush1.bf16.msra.mxu0 %v2442
    %3470 = vmatprep.subr.bf16.mxu0 %v2441
    %3471 = vmatpush1.bf16.msra.mxu0 %v2440
    %3472 = vmatprep.subr.bf16.mxu0 %v2439
    %3473 = vmatpush1.bf16.msra.mxu0 %v2438
    %3474 = vmatprep.subr.bf16.mxu0 %v2437
    %3475 = vmatpush1.bf16.msra.mxu0 %v2436
    %3476 = vmatprep.subr.bf16.mxu0 %v2467
    %3477 = vmatpush2.bf16.msra.mxu0 %v2466
    %3478 = vmatprep.subr.bf16.mxu0 %v2465
    %3479 = vmatpush2.bf16.msra.mxu0 %v2464
    %3480 = vmatprep.subr.bf16.mxu0 %v2463
    %3481 = vmatpush2.bf16.msra.mxu0 %v2462
    %3482 = vmatprep.subr.bf16.mxu0 %v2461
    %3483 = vmatpush2.bf16.msra.mxu0 %v2460
    %3484 = vmatprep.subr.bf16.mxu0 %v2459
    %3485 = vmatpush2.bf16.msra.mxu0 %v2458
    %3486 = vmatprep.subr.bf16.mxu0 %v2457
    %3487 = vmatpush2.bf16.msra.mxu0 %v2456
    %3488 = vmatprep.subr.bf16.mxu0 %v2455
    %3489 = vmatpush2.bf16.msra.mxu0 %v2454
    %3490 = vmatprep.subr.bf16.mxu0 %v2453
    %3491 = vmatpush2.bf16.msra.mxu0 %v2452
    %3492 = vmatprep.mubr.bf16.mxu0 %v345
    %3493 = vmatmul.mubr.bf16.gmra.mxu0 %v344
    %v3494 = vpop.f32.mrf.mxu0
    %v3495 = vadd.f32 %v893, %v3494
    %v3496 = vpop.f32.mrf.mxu0
    %v3497 = vadd.f32 %v897, %v3496
    %v3498 = vpop.f32.mrf.mxu0
    %v3499 = vpop.f32.mrf.mxu0
    %3500 = vdwg.mxu0
    %3501 = vmatprep.subr.bf16.mxu0 %v2483
    %3502 = vmatpush1.bf16.msra.mxu0 %v2482
    %3503 = vmatprep.subr.bf16.mxu0 %v2481
    %3504 = vmatpush1.bf16.msra.mxu0 %v2480
    %3505 = vmatprep.subr.bf16.mxu0 %v2479
    %3506 = vmatpush1.bf16.msra.mxu0 %v2478
    %3507 = vmatprep.subr.bf16.mxu0 %v2477
    %3508 = vmatpush1.bf16.msra.mxu0 %v2476
    %3509 = vmatprep.subr.bf16.mxu0 %v2475
    %3510 = vmatpush1.bf16.msra.mxu0 %v2474
    %3511 = vmatprep.subr.bf16.mxu0 %v2473
    %3512 = vmatpush1.bf16.msra.mxu0 %v2472
    %3513 = vmatprep.subr.bf16.mxu0 %v2471
    %3514 = vmatpush1.bf16.msra.mxu0 %v2470
    %3515 = vmatprep.subr.bf16.mxu0 %v2469
    %3516 = vmatpush1.bf16.msra.mxu0 %v2468
    %3517 = vmatprep.subr.bf16.mxu0 %v2499
    %3518 = vmatpush2.bf16.msra.mxu0 %v2498
    %3519 = vmatprep.subr.bf16.mxu0 %v2497
    %3520 = vmatpush2.bf16.msra.mxu0 %v2496
    %3521 = vmatprep.subr.bf16.mxu0 %v2495
    %3522 = vmatpush2.bf16.msra.mxu0 %v2494
    %3523 = vmatprep.subr.bf16.mxu0 %v2493
    %3524 = vmatpush2.bf16.msra.mxu0 %v2492
    %3525 = vmatprep.subr.bf16.mxu0 %v2491
    %3526 = vmatpush2.bf16.msra.mxu0 %v2490
    %3527 = vmatprep.subr.bf16.mxu0 %v2489
    %3528 = vmatpush2.bf16.msra.mxu0 %v2488
    %3529 = vmatprep.subr.bf16.mxu0 %v2487
    %3530 = vmatpush2.bf16.msra.mxu0 %v2486
    %3531 = vmatprep.subr.bf16.mxu0 %v2485
    %3532 = vmatpush2.bf16.msra.mxu0 %v2484
    %3533 = vmatprep.mubr.bf16.mxu0 %v347
    %3534 = vmatmul.mubr.bf16.gmra.mxu0 %v346
    %v3535 = vpop.f32.mrf.mxu0
    %v3536 = vadd.f32 %v3495, %v3535
    %v3537 = vpop.f32.mrf.mxu0
    %v3538 = vadd.f32 %v3497, %v3537
    %v3539 = vpop.f32.mrf.mxu0
    %v3540 = vpop.f32.mrf.mxu0
    %3541 = vdwg.mxu0
    %3542 = vmatprep.subr.bf16.mxu0 %v2515
    %3543 = vmatpush1.bf16.msra.mxu0 %v2514
    %3544 = vmatprep.subr.bf16.mxu0 %v2513
    %3545 = vmatpush1.bf16.msra.mxu0 %v2512
    %3546 = vmatprep.subr.bf16.mxu0 %v2511
    %3547 = vmatpush1.bf16.msra.mxu0 %v2510
    %3548 = vmatprep.subr.bf16.mxu0 %v2509
    %3549 = vmatpush1.bf16.msra.mxu0 %v2508
    %3550 = vmatprep.subr.bf16.mxu0 %v2507
    %3551 = vmatpush1.bf16.msra.mxu0 %v2506
    %3552 = vmatprep.subr.bf16.mxu0 %v2505
    %3553 = vmatpush1.bf16.msra.mxu0 %v2504
    %3554 = vmatprep.subr.bf16.mxu0 %v2503
    %3555 = vmatpush1.bf16.msra.mxu0 %v2502
    %3556 = vmatprep.subr.bf16.mxu0 %v2501
    %3557 = vmatpush1.bf16.msra.mxu0 %v2500
    %3558 = vmatprep.subr.bf16.mxu0 %v2531
    %3559 = vmatpush2.bf16.msra.mxu0 %v2530
    %3560 = vmatprep.subr.bf16.mxu0 %v2529
    %3561 = vmatpush2.bf16.msra.mxu0 %v2528
    %3562 = vmatprep.subr.bf16.mxu0 %v2527
    %3563 = vmatpush2.bf16.msra.mxu0 %v2526
    %3564 = vmatprep.subr.bf16.mxu0 %v2525
    %3565 = vmatpush2.bf16.msra.mxu0 %v2524
    %3566 = vmatprep.subr.bf16.mxu0 %v2523
    %3567 = vmatpush2.bf16.msra.mxu0 %v2522
    %3568 = vmatprep.subr.bf16.mxu0 %v2521
    %3569 = vmatpush2.bf16.msra.mxu0 %v2520
    %3570 = vmatprep.subr.bf16.mxu0 %v2519
    %3571 = vmatpush2.bf16.msra.mxu0 %v2518
    %3572 = vmatprep.subr.bf16.mxu0 %v2517
    %3573 = vmatpush2.bf16.msra.mxu0 %v2516
    %3574 = vmatprep.mubr.bf16.mxu0 %v349
    %3575 = vmatmul.mubr.bf16.gmra.mxu0 %v348
    %v3576 = vpop.f32.mrf.mxu0
    %v3577 = vadd.f32 %v3536, %v3576
    %v3578 = vpop.f32.mrf.mxu0
    %v3579 = vadd.f32 %v3538, %v3578
    %v3580 = vpop.f32.mrf.mxu0
    %v3581 = vpop.f32.mrf.mxu0
    %3582 = vdwg.mxu0
    %3583 = vmatprep.subr.bf16.mxu0 %v2547
    %3584 = vmatpush1.bf16.msra.mxu0 %v2546
    %3585 = vmatprep.subr.bf16.mxu0 %v2545
    %3586 = vmatpush1.bf16.msra.mxu0 %v2544
    %3587 = vmatprep.subr.bf16.mxu0 %v2543
    %3588 = vmatpush1.bf16.msra.mxu0 %v2542
    %3589 = vmatprep.subr.bf16.mxu0 %v2541
    %3590 = vmatpush1.bf16.msra.mxu0 %v2540
    %3591 = vmatprep.subr.bf16.mxu0 %v2539
    %3592 = vmatpush1.bf16.msra.mxu0 %v2538
    %3593 = vmatprep.subr.bf16.mxu0 %v2537
    %3594 = vmatpush1.bf16.msra.mxu0 %v2536
    %3595 = vmatprep.subr.bf16.mxu0 %v2535
    %3596 = vmatpush1.bf16.msra.mxu0 %v2534
    %3597 = vmatprep.subr.bf16.mxu0 %v2533
    %3598 = vmatpush1.bf16.msra.mxu0 %v2532
    %3599 = vmatprep.subr.bf16.mxu0 %v2563
    %3600 = vmatpush2.bf16.msra.mxu0 %v2562
    %3601 = vmatprep.subr.bf16.mxu0 %v2561
    %3602 = vmatpush2.bf16.msra.mxu0 %v2560
    %3603 = vmatprep.subr.bf16.mxu0 %v2559
    %3604 = vmatpush2.bf16.msra.mxu0 %v2558
    %3605 = vmatprep.subr.bf16.mxu0 %v2557
    %3606 = vmatpush2.bf16.msra.mxu0 %v2556
    %3607 = vmatprep.subr.bf16.mxu0 %v2555
    %3608 = vmatpush2.bf16.msra.mxu0 %v2554
    %3609 = vmatprep.subr.bf16.mxu0 %v2553
    %3610 = vmatpush2.bf16.msra.mxu0 %v2552
    %3611 = vmatprep.subr.bf16.mxu0 %v2551
    %3612 = vmatpush2.bf16.msra.mxu0 %v2550
    %3613 = vmatprep.subr.bf16.mxu0 %v2549
    %3614 = vmatpush2.bf16.msra.mxu0 %v2548
    %3615 = vmatprep.mubr.bf16.mxu0 %v351
    %3616 = vmatmul.mubr.bf16.gmra.mxu0 %v350
    %v3617 = vpop.f32.mrf.mxu0
    %v3618 = vadd.f32 %v3577, %v3617
    %v3619 = vpop.f32.mrf.mxu0
    %v3620 = vadd.f32 %v3579, %v3619
    %v3621 = vpop.f32.mrf.mxu0
    %v3622 = vpop.f32.mrf.mxu0
    %3623 = vdwg.mxu0
    %3624 = vmatprep.subr.bf16.mxu0 %v2579
    %3625 = vmatpush1.bf16.msra.mxu0 %v2578
    %3626 = vmatprep.subr.bf16.mxu0 %v2577
    %3627 = vmatpush1.bf16.msra.mxu0 %v2576
    %3628 = vmatprep.subr.bf16.mxu0 %v2575
    %3629 = vmatpush1.bf16.msra.mxu0 %v2574
    %3630 = vmatprep.subr.bf16.mxu0 %v2573
    %3631 = vmatpush1.bf16.msra.mxu0 %v2572
    %3632 = vmatprep.subr.bf16.mxu0 %v2571
    %3633 = vmatpush1.bf16.msra.mxu0 %v2570
    %3634 = vmatprep.subr.bf16.mxu0 %v2569
    %3635 = vmatpush1.bf16.msra.mxu0 %v2568
    %3636 = vmatprep.subr.bf16.mxu0 %v2567
    %3637 = vmatpush1.bf16.msra.mxu0 %v2566
    %3638 = vmatprep.subr.bf16.mxu0 %v2565
    %3639 = vmatpush1.bf16.msra.mxu0 %v2564
    %3640 = vmatprep.subr.bf16.mxu0 %v2595
    %3641 = vmatpush2.bf16.msra.mxu0 %v2594
    %3642 = vmatprep.subr.bf16.mxu0 %v2593
    %3643 = vmatpush2.bf16.msra.mxu0 %v2592
    %3644 = vmatprep.subr.bf16.mxu0 %v2591
    %3645 = vmatpush2.bf16.msra.mxu0 %v2590
    %3646 = vmatprep.subr.bf16.mxu0 %v2589
    %3647 = vmatpush2.bf16.msra.mxu0 %v2588
    %3648 = vmatprep.subr.bf16.mxu0 %v2587
    %3649 = vmatpush2.bf16.msra.mxu0 %v2586
    %3650 = vmatprep.subr.bf16.mxu0 %v2585
    %3651 = vmatpush2.bf16.msra.mxu0 %v2584
    %3652 = vmatprep.subr.bf16.mxu0 %v2583
    %3653 = vmatpush2.bf16.msra.mxu0 %v2582
    %3654 = vmatprep.subr.bf16.mxu0 %v2581
    %3655 = vmatpush2.bf16.msra.mxu0 %v2580
    %3656 = vmatprep.mubr.bf16.mxu0 %v353
    %3657 = vmatmul.mubr.bf16.gmra.mxu0 %v352
    %v3658 = vpop.f32.mrf.mxu0
    %v3659 = vadd.f32 %v3618, %v3658
    %v3660 = vpop.f32.mrf.mxu0
    %v3661 = vadd.f32 %v3620, %v3660
    %v3662 = vpop.f32.mrf.mxu0
    %v3663 = vpop.f32.mrf.mxu0
    %3664 = vdwg.mxu0
    %3665 = vmatprep.subr.bf16.mxu0 %v2611
    %3666 = vmatpush1.bf16.msra.mxu0 %v2610
    %3667 = vmatprep.subr.bf16.mxu0 %v2609
    %3668 = vmatpush1.bf16.msra.mxu0 %v2608
    %3669 = vmatprep.subr.bf16.mxu0 %v2607
    %3670 = vmatpush1.bf16.msra.mxu0 %v2606
    %3671 = vmatprep.subr.bf16.mxu0 %v2605
    %3672 = vmatpush1.bf16.msra.mxu0 %v2604
    %3673 = vmatprep.subr.bf16.mxu0 %v2603
    %3674 = vmatpush1.bf16.msra.mxu0 %v2602
    %3675 = vmatprep.subr.bf16.mxu0 %v2601
    %3676 = vmatpush1.bf16.msra.mxu0 %v2600
    %3677 = vmatprep.subr.bf16.mxu0 %v2599
    %3678 = vmatpush1.bf16.msra.mxu0 %v2598
    %3679 = vmatprep.subr.bf16.mxu0 %v2597
    %3680 = vmatpush1.bf16.msra.mxu0 %v2596
    %3681 = vmatprep.subr.bf16.mxu0 %v2627
    %3682 = vmatpush2.bf16.msra.mxu0 %v2626
    %3683 = vmatprep.subr.bf16.mxu0 %v2625
    %3684 = vmatpush2.bf16.msra.mxu0 %v2624
    %3685 = vmatprep.subr.bf16.mxu0 %v2623
    %3686 = vmatpush2.bf16.msra.mxu0 %v2622
    %3687 = vmatprep.subr.bf16.mxu0 %v2621
    %3688 = vmatpush2.bf16.msra.mxu0 %v2620
    %3689 = vmatprep.subr.bf16.mxu0 %v2619
    %3690 = vmatpush2.bf16.msra.mxu0 %v2618
    %3691 = vmatprep.subr.bf16.mxu0 %v2617
    %3692 = vmatpush2.bf16.msra.mxu0 %v2616
    %3693 = vmatprep.subr.bf16.mxu0 %v2615
    %3694 = vmatpush2.bf16.msra.mxu0 %v2614
    %3695 = vmatprep.subr.bf16.mxu0 %v2613
    %3696 = vmatpush2.bf16.msra.mxu0 %v2612
    %3697 = vmatprep.mubr.bf16.mxu0 %v355
    %3698 = vmatmul.mubr.bf16.gmra.mxu0 %v354
    %v3699 = vpop.f32.mrf.mxu0
    %v3700 = vadd.f32 %v3659, %v3699
    %v3701 = vpop.f32.mrf.mxu0
    %v3702 = vadd.f32 %v3661, %v3701
    %v3703 = vpop.f32.mrf.mxu0
    %v3704 = vpop.f32.mrf.mxu0
    %3705 = vdwg.mxu0
    %3706 = vmatprep.subr.bf16.mxu0 %v2643
    %3707 = vmatpush1.bf16.msra.mxu0 %v2642
    %3708 = vmatprep.subr.bf16.mxu0 %v2641
    %3709 = vmatpush1.bf16.msra.mxu0 %v2640
    %3710 = vmatprep.subr.bf16.mxu0 %v2639
    %3711 = vmatpush1.bf16.msra.mxu0 %v2638
    %3712 = vmatprep.subr.bf16.mxu0 %v2637
    %3713 = vmatpush1.bf16.msra.mxu0 %v2636
    %3714 = vmatprep.subr.bf16.mxu0 %v2635
    %3715 = vmatpush1.bf16.msra.mxu0 %v2634
    %3716 = vmatprep.subr.bf16.mxu0 %v2633
    %3717 = vmatpush1.bf16.msra.mxu0 %v2632
    %3718 = vmatprep.subr.bf16.mxu0 %v2631
    %3719 = vmatpush1.bf16.msra.mxu0 %v2630
    %3720 = vmatprep.subr.bf16.mxu0 %v2629
    %3721 = vmatpush1.bf16.msra.mxu0 %v2628
    %3722 = vmatprep.subr.bf16.mxu0 %v2659
    %3723 = vmatpush2.bf16.msra.mxu0 %v2658
    %3724 = vmatprep.subr.bf16.mxu0 %v2657
    %3725 = vmatpush2.bf16.msra.mxu0 %v2656
    %3726 = vmatprep.subr.bf16.mxu0 %v2655
    %3727 = vmatpush2.bf16.msra.mxu0 %v2654
    %3728 = vmatprep.subr.bf16.mxu0 %v2653
    %3729 = vmatpush2.bf16.msra.mxu0 %v2652
    %3730 = vmatprep.subr.bf16.mxu0 %v2651
    %3731 = vmatpush2.bf16.msra.mxu0 %v2650
    %3732 = vmatprep.subr.bf16.mxu0 %v2649
    %3733 = vmatpush2.bf16.msra.mxu0 %v2648
    %3734 = vmatprep.subr.bf16.mxu0 %v2647
    %3735 = vmatpush2.bf16.msra.mxu0 %v2646
    %3736 = vmatprep.subr.bf16.mxu0 %v2645
    %3737 = vmatpush2.bf16.msra.mxu0 %v2644
    %3738 = vmatprep.mubr.bf16.mxu0 %v357
    %3739 = vmatmul.mubr.bf16.gmra.mxu0 %v356
    %v3740 = vpop.f32.mrf.mxu0
    %v3741 = vadd.f32 %v3700, %v3740
    %v3742 = vpop.f32.mrf.mxu0
    %v3743 = vadd.f32 %v3702, %v3742
    %v3744 = vpop.f32.mrf.mxu0
    %v3745 = vpop.f32.mrf.mxu0
    %3746 = vdwg.mxu0
    %3747 = vmatprep.subr.bf16.mxu0 %v2675
    %3748 = vmatpush1.bf16.msra.mxu0 %v2674
    %3749 = vmatprep.subr.bf16.mxu0 %v2673
    %3750 = vmatpush1.bf16.msra.mxu0 %v2672
    %3751 = vmatprep.subr.bf16.mxu0 %v2671
    %3752 = vmatpush1.bf16.msra.mxu0 %v2670
    %3753 = vmatprep.subr.bf16.mxu0 %v2669
    %3754 = vmatpush1.bf16.msra.mxu0 %v2668
    %3755 = vmatprep.subr.bf16.mxu0 %v2667
    %3756 = vmatpush1.bf16.msra.mxu0 %v2666
    %3757 = vmatprep.subr.bf16.mxu0 %v2665
    %3758 = vmatpush1.bf16.msra.mxu0 %v2664
    %3759 = vmatprep.subr.bf16.mxu0 %v2663
    %3760 = vmatpush1.bf16.msra.mxu0 %v2662
    %3761 = vmatprep.subr.bf16.mxu0 %v2661
    %3762 = vmatpush1.bf16.msra.mxu0 %v2660
    %3763 = vmatprep.subr.bf16.mxu0 %v2691
    %3764 = vmatpush2.bf16.msra.mxu0 %v2690
    %3765 = vmatprep.subr.bf16.mxu0 %v2689
    %3766 = vmatpush2.bf16.msra.mxu0 %v2688
    %3767 = vmatprep.subr.bf16.mxu0 %v2687
    %3768 = vmatpush2.bf16.msra.mxu0 %v2686
    %3769 = vmatprep.subr.bf16.mxu0 %v2685
    %3770 = vmatpush2.bf16.msra.mxu0 %v2684
    %3771 = vmatprep.subr.bf16.mxu0 %v2683
    %3772 = vmatpush2.bf16.msra.mxu0 %v2682
    %3773 = vmatprep.subr.bf16.mxu0 %v2681
    %3774 = vmatpush2.bf16.msra.mxu0 %v2680
    %3775 = vmatprep.subr.bf16.mxu0 %v2679
    %3776 = vmatpush2.bf16.msra.mxu0 %v2678
    %3777 = vmatprep.subr.bf16.mxu0 %v2677
    %3778 = vmatpush2.bf16.msra.mxu0 %v2676
    %3779 = vmatprep.mubr.bf16.mxu0 %v359
    %3780 = vmatmul.mubr.bf16.gmra.mxu0 %v358
    %v3781 = vpop.f32.mrf.mxu0
    %v3782 = vadd.f32 %v3741, %v3781
    %v3783 = vpop.f32.mrf.mxu0
    %v3784 = vadd.f32 %v3743, %v3783
    %v3785 = vpop.f32.mrf.mxu0
    %v3786 = vpop.f32.mrf.mxu0
    %3787 = vdwg.mxu0
    %3788 = vmatprep.subr.bf16.mxu0 %v2707
    %3789 = vmatpush1.bf16.msra.mxu0 %v2706
    %3790 = vmatprep.subr.bf16.mxu0 %v2705
    %3791 = vmatpush1.bf16.msra.mxu0 %v2704
    %3792 = vmatprep.subr.bf16.mxu0 %v2703
    %3793 = vmatpush1.bf16.msra.mxu0 %v2702
    %3794 = vmatprep.subr.bf16.mxu0 %v2701
    %3795 = vmatpush1.bf16.msra.mxu0 %v2700
    %3796 = vmatprep.subr.bf16.mxu0 %v2699
    %3797 = vmatpush1.bf16.msra.mxu0 %v2698
    %3798 = vmatprep.subr.bf16.mxu0 %v2697
    %3799 = vmatpush1.bf16.msra.mxu0 %v2696
    %3800 = vmatprep.subr.bf16.mxu0 %v2695
    %3801 = vmatpush1.bf16.msra.mxu0 %v2694
    %3802 = vmatprep.subr.bf16.mxu0 %v2693
    %3803 = vmatpush1.bf16.msra.mxu0 %v2692
    %3804 = vmatprep.subr.bf16.mxu0 %v2723
    %3805 = vmatpush2.bf16.msra.mxu0 %v2722
    %3806 = vmatprep.subr.bf16.mxu0 %v2721
    %3807 = vmatpush2.bf16.msra.mxu0 %v2720
    %3808 = vmatprep.subr.bf16.mxu0 %v2719
    %3809 = vmatpush2.bf16.msra.mxu0 %v2718
    %3810 = vmatprep.subr.bf16.mxu0 %v2717
    %3811 = vmatpush2.bf16.msra.mxu0 %v2716
    %3812 = vmatprep.subr.bf16.mxu0 %v2715
    %3813 = vmatpush2.bf16.msra.mxu0 %v2714
    %3814 = vmatprep.subr.bf16.mxu0 %v2713
    %3815 = vmatpush2.bf16.msra.mxu0 %v2712
    %3816 = vmatprep.subr.bf16.mxu0 %v2711
    %3817 = vmatpush2.bf16.msra.mxu0 %v2710
    %3818 = vmatprep.subr.bf16.mxu0 %v2709
    %3819 = vmatpush2.bf16.msra.mxu0 %v2708
    %3820 = vmatprep.mubr.bf16.mxu0 %v361
    %3821 = vmatmul.mubr.bf16.gmra.mxu0 %v360
    %v3822 = vpop.f32.mrf.mxu0
    %v3823 = vadd.f32 %v3782, %v3822
    %v3824 = vpop.f32.mrf.mxu0
    %v3825 = vadd.f32 %v3784, %v3824
    %v3826 = vpop.f32.mrf.mxu0
    %v3827 = vpop.f32.mrf.mxu0
    %3828 = vdwg.mxu0
    %3829 = vmatprep.subr.bf16.mxu0 %v2739
    %3830 = vmatpush1.bf16.msra.mxu0 %v2738
    %3831 = vmatprep.subr.bf16.mxu0 %v2737
    %3832 = vmatpush1.bf16.msra.mxu0 %v2736
    %3833 = vmatprep.subr.bf16.mxu0 %v2735
    %3834 = vmatpush1.bf16.msra.mxu0 %v2734
    %3835 = vmatprep.subr.bf16.mxu0 %v2733
    %3836 = vmatpush1.bf16.msra.mxu0 %v2732
    %3837 = vmatprep.subr.bf16.mxu0 %v2731
    %3838 = vmatpush1.bf16.msra.mxu0 %v2730
    %3839 = vmatprep.subr.bf16.mxu0 %v2729
    %3840 = vmatpush1.bf16.msra.mxu0 %v2728
    %3841 = vmatprep.subr.bf16.mxu0 %v2727
    %3842 = vmatpush1.bf16.msra.mxu0 %v2726
    %3843 = vmatprep.subr.bf16.mxu0 %v2725
    %3844 = vmatpush1.bf16.msra.mxu0 %v2724
    %3845 = vmatprep.subr.bf16.mxu0 %v2755
    %3846 = vmatpush2.bf16.msra.mxu0 %v2754
    %3847 = vmatprep.subr.bf16.mxu0 %v2753
    %3848 = vmatpush2.bf16.msra.mxu0 %v2752
    %3849 = vmatprep.subr.bf16.mxu0 %v2751
    %3850 = vmatpush2.bf16.msra.mxu0 %v2750
    %3851 = vmatprep.subr.bf16.mxu0 %v2749
    %3852 = vmatpush2.bf16.msra.mxu0 %v2748
    %3853 = vmatprep.subr.bf16.mxu0 %v2747
    %3854 = vmatpush2.bf16.msra.mxu0 %v2746
    %3855 = vmatprep.subr.bf16.mxu0 %v2745
    %3856 = vmatpush2.bf16.msra.mxu0 %v2744
    %3857 = vmatprep.subr.bf16.mxu0 %v2743
    %3858 = vmatpush2.bf16.msra.mxu0 %v2742
    %3859 = vmatprep.subr.bf16.mxu0 %v2741
    %3860 = vmatpush2.bf16.msra.mxu0 %v2740
    %3861 = vmatprep.mubr.bf16.mxu0 %v363
    %3862 = vmatmul.mubr.bf16.gmra.mxu0 %v362
    %v3863 = vpop.f32.mrf.mxu0
    %v3864 = vadd.f32 %v3823, %v3863
    %v3865 = vpop.f32.mrf.mxu0
    %v3866 = vadd.f32 %v3825, %v3865
    %v3867 = vpop.f32.mrf.mxu0
    %v3868 = vpop.f32.mrf.mxu0
    %3869 = vdwg.mxu0
    %3870 = vmatprep.subr.bf16.mxu0 %v2771
    %3871 = vmatpush1.bf16.msra.mxu0 %v2770
    %3872 = vmatprep.subr.bf16.mxu0 %v2769
    %3873 = vmatpush1.bf16.msra.mxu0 %v2768
    %3874 = vmatprep.subr.bf16.mxu0 %v2767
    %3875 = vmatpush1.bf16.msra.mxu0 %v2766
    %3876 = vmatprep.subr.bf16.mxu0 %v2765
    %3877 = vmatpush1.bf16.msra.mxu0 %v2764
    %3878 = vmatprep.subr.bf16.mxu0 %v2763
    %3879 = vmatpush1.bf16.msra.mxu0 %v2762
    %3880 = vmatprep.subr.bf16.mxu0 %v2761
    %3881 = vmatpush1.bf16.msra.mxu0 %v2760
    %3882 = vmatprep.subr.bf16.mxu0 %v2759
    %3883 = vmatpush1.bf16.msra.mxu0 %v2758
    %3884 = vmatprep.subr.bf16.mxu0 %v2757
    %3885 = vmatpush1.bf16.msra.mxu0 %v2756
    %3886 = vmatprep.subr.bf16.mxu0 %v2787
    %3887 = vmatpush2.bf16.msra.mxu0 %v2786
    %3888 = vmatprep.subr.bf16.mxu0 %v2785
    %3889 = vmatpush2.bf16.msra.mxu0 %v2784
    %3890 = vmatprep.subr.bf16.mxu0 %v2783
    %3891 = vmatpush2.bf16.msra.mxu0 %v2782
    %3892 = vmatprep.subr.bf16.mxu0 %v2781
    %3893 = vmatpush2.bf16.msra.mxu0 %v2780
    %3894 = vmatprep.subr.bf16.mxu0 %v2779
    %3895 = vmatpush2.bf16.msra.mxu0 %v2778
    %3896 = vmatprep.subr.bf16.mxu0 %v2777
    %3897 = vmatpush2.bf16.msra.mxu0 %v2776
    %3898 = vmatprep.subr.bf16.mxu0 %v2775
    %3899 = vmatpush2.bf16.msra.mxu0 %v2774
    %3900 = vmatprep.subr.bf16.mxu0 %v2773
    %3901 = vmatpush2.bf16.msra.mxu0 %v2772
    %3902 = vmatprep.mubr.bf16.mxu0 %v365
    %3903 = vmatmul.mubr.bf16.gmra.mxu0 %v364
    %v3904 = vpop.f32.mrf.mxu0
    %v3905 = vadd.f32 %v3864, %v3904
    %v3906 = vpop.f32.mrf.mxu0
    %v3907 = vadd.f32 %v3866, %v3906
    %v3908 = vpop.f32.mrf.mxu0
    %v3909 = vpop.f32.mrf.mxu0
    %3910 = vdwg.mxu0
    %3911 = vmatprep.subr.bf16.mxu0 %v2803
    %3912 = vmatpush1.bf16.msra.mxu0 %v2802
    %3913 = vmatprep.subr.bf16.mxu0 %v2801
    %3914 = vmatpush1.bf16.msra.mxu0 %v2800
    %3915 = vmatprep.subr.bf16.mxu0 %v2799
    %3916 = vmatpush1.bf16.msra.mxu0 %v2798
    %3917 = vmatprep.subr.bf16.mxu0 %v2797
    %3918 = vmatpush1.bf16.msra.mxu0 %v2796
    %3919 = vmatprep.subr.bf16.mxu0 %v2795
    %3920 = vmatpush1.bf16.msra.mxu0 %v2794
    %3921 = vmatprep.subr.bf16.mxu0 %v2793
    %3922 = vmatpush1.bf16.msra.mxu0 %v2792
    %3923 = vmatprep.subr.bf16.mxu0 %v2791
    %3924 = vmatpush1.bf16.msra.mxu0 %v2790
    %3925 = vmatprep.subr.bf16.mxu0 %v2789
    %3926 = vmatpush1.bf16.msra.mxu0 %v2788
    %3927 = vmatprep.subr.bf16.mxu0 %v2819
    %3928 = vmatpush2.bf16.msra.mxu0 %v2818
    %3929 = vmatprep.subr.bf16.mxu0 %v2817
    %3930 = vmatpush2.bf16.msra.mxu0 %v2816
    %3931 = vmatprep.subr.bf16.mxu0 %v2815
    %3932 = vmatpush2.bf16.msra.mxu0 %v2814
    %3933 = vmatprep.subr.bf16.mxu0 %v2813
    %3934 = vmatpush2.bf16.msra.mxu0 %v2812
    %3935 = vmatprep.subr.bf16.mxu0 %v2811
    %3936 = vmatpush2.bf16.msra.mxu0 %v2810
    %3937 = vmatprep.subr.bf16.mxu0 %v2809
    %3938 = vmatpush2.bf16.msra.mxu0 %v2808
    %3939 = vmatprep.subr.bf16.mxu0 %v2807
    %3940 = vmatpush2.bf16.msra.mxu0 %v2806
    %3941 = vmatprep.subr.bf16.mxu0 %v2805
    %3942 = vmatpush2.bf16.msra.mxu0 %v2804
    %3943 = vmatprep.mubr.bf16.mxu0 %v367
    %3944 = vmatmul.mubr.bf16.gmra.mxu0 %v366
    %v3945 = vpop.f32.mrf.mxu0
    %v3946 = vadd.f32 %v3905, %v3945
    %v3947 = vpop.f32.mrf.mxu0
    %v3948 = vadd.f32 %v3907, %v3947
    %v3949 = vpop.f32.mrf.mxu0
    %v3950 = vpop.f32.mrf.mxu0
    %3951 = vdwg.mxu0
    %3952 = vmatprep.subr.bf16.mxu0 %v2835
    %3953 = vmatpush1.bf16.msra.mxu0 %v2834
    %3954 = vmatprep.subr.bf16.mxu0 %v2833
    %3955 = vmatpush1.bf16.msra.mxu0 %v2832
    %3956 = vmatprep.subr.bf16.mxu0 %v2831
    %3957 = vmatpush1.bf16.msra.mxu0 %v2830
    %3958 = vmatprep.subr.bf16.mxu0 %v2829
    %3959 = vmatpush1.bf16.msra.mxu0 %v2828
    %3960 = vmatprep.subr.bf16.mxu0 %v2827
    %3961 = vmatpush1.bf16.msra.mxu0 %v2826
    %3962 = vmatprep.subr.bf16.mxu0 %v2825
    %3963 = vmatpush1.bf16.msra.mxu0 %v2824
    %3964 = vmatprep.subr.bf16.mxu0 %v2823
    %3965 = vmatpush1.bf16.msra.mxu0 %v2822
    %3966 = vmatprep.subr.bf16.mxu0 %v2821
    %3967 = vmatpush1.bf16.msra.mxu0 %v2820
    %3968 = vmatprep.subr.bf16.mxu0 %v2851
    %3969 = vmatpush2.bf16.msra.mxu0 %v2850
    %3970 = vmatprep.subr.bf16.mxu0 %v2849
    %3971 = vmatpush2.bf16.msra.mxu0 %v2848
    %3972 = vmatprep.subr.bf16.mxu0 %v2847
    %3973 = vmatpush2.bf16.msra.mxu0 %v2846
    %3974 = vmatprep.subr.bf16.mxu0 %v2845
    %3975 = vmatpush2.bf16.msra.mxu0 %v2844
    %3976 = vmatprep.subr.bf16.mxu0 %v2843
    %3977 = vmatpush2.bf16.msra.mxu0 %v2842
    %3978 = vmatprep.subr.bf16.mxu0 %v2841
    %3979 = vmatpush2.bf16.msra.mxu0 %v2840
    %3980 = vmatprep.subr.bf16.mxu0 %v2839
    %3981 = vmatpush2.bf16.msra.mxu0 %v2838
    %3982 = vmatprep.subr.bf16.mxu0 %v2837
    %3983 = vmatpush2.bf16.msra.mxu0 %v2836
    %3984 = vmatprep.mubr.bf16.mxu0 %v369
    %3985 = vmatmul.mubr.bf16.gmra.mxu0 %v368
    %v3986 = vpop.f32.mrf.mxu0
    %v3987 = vadd.f32 %v3946, %v3986
    %v3988 = vpop.f32.mrf.mxu0
    %v3989 = vadd.f32 %v3948, %v3988
    %v3990 = vpop.f32.mrf.mxu0
    %v3991 = vpop.f32.mrf.mxu0
    %3992 = vdwg.mxu0
    %3993 = vmatprep.subr.bf16.mxu0 %v2867
    %3994 = vmatpush1.bf16.msra.mxu0 %v2866
    %3995 = vmatprep.subr.bf16.mxu0 %v2865
    %3996 = vmatpush1.bf16.msra.mxu0 %v2864
    %3997 = vmatprep.subr.bf16.mxu0 %v2863
    %3998 = vmatpush1.bf16.msra.mxu0 %v2862
    %3999 = vmatprep.subr.bf16.mxu0 %v2861
    %4000 = vmatpush1.bf16.msra.mxu0 %v2860
    %4001 = vmatprep.subr.bf16.mxu0 %v2859
    %4002 = vmatpush1.bf16.msra.mxu0 %v2858
    %4003 = vmatprep.subr.bf16.mxu0 %v2857
    %4004 = vmatpush1.bf16.msra.mxu0 %v2856
    %4005 = vmatprep.subr.bf16.mxu0 %v2855
    %4006 = vmatpush1.bf16.msra.mxu0 %v2854
    %4007 = vmatprep.subr.bf16.mxu0 %v2853
    %4008 = vmatpush1.bf16.msra.mxu0 %v2852
    %4009 = vmatprep.subr.bf16.mxu0 %v2883
    %4010 = vmatpush2.bf16.msra.mxu0 %v2882
    %4011 = vmatprep.subr.bf16.mxu0 %v2881
    %4012 = vmatpush2.bf16.msra.mxu0 %v2880
    %4013 = vmatprep.subr.bf16.mxu0 %v2879
    %4014 = vmatpush2.bf16.msra.mxu0 %v2878
    %4015 = vmatprep.subr.bf16.mxu0 %v2877
    %4016 = vmatpush2.bf16.msra.mxu0 %v2876
    %4017 = vmatprep.subr.bf16.mxu0 %v2875
    %4018 = vmatpush2.bf16.msra.mxu0 %v2874
    %4019 = vmatprep.subr.bf16.mxu0 %v2873
    %4020 = vmatpush2.bf16.msra.mxu0 %v2872
    %4021 = vmatprep.subr.bf16.mxu0 %v2871
    %4022 = vmatpush2.bf16.msra.mxu0 %v2870
    %4023 = vmatprep.subr.bf16.mxu0 %v2869
    %4024 = vmatpush2.bf16.msra.mxu0 %v2868
    %4025 = vmatprep.mubr.bf16.mxu0 %v371
    %4026 = vmatmul.mubr.bf16.gmra.mxu0 %v370
    %v4027 = vpop.f32.mrf.mxu0
    %v4028 = vadd.f32 %v3987, %v4027
    %v4029 = vpop.f32.mrf.mxu0
    %v4030 = vadd.f32 %v3989, %v4029
    %v4031 = vpop.f32.mrf.mxu0
    %v4032 = vpop.f32.mrf.mxu0
    %4033 = vdwg.mxu0
    %4034 = vmatprep.subr.bf16.mxu0 %v2899
    %4035 = vmatpush1.bf16.msra.mxu0 %v2898
    %4036 = vmatprep.subr.bf16.mxu0 %v2897
    %4037 = vmatpush1.bf16.msra.mxu0 %v2896
    %4038 = vmatprep.subr.bf16.mxu0 %v2895
    %4039 = vmatpush1.bf16.msra.mxu0 %v2894
    %4040 = vmatprep.subr.bf16.mxu0 %v2893
    %4041 = vmatpush1.bf16.msra.mxu0 %v2892
    %4042 = vmatprep.subr.bf16.mxu0 %v2891
    %4043 = vmatpush1.bf16.msra.mxu0 %v2890
    %4044 = vmatprep.subr.bf16.mxu0 %v2889
    %4045 = vmatpush1.bf16.msra.mxu0 %v2888
    %4046 = vmatprep.subr.bf16.mxu0 %v2887
    %4047 = vmatpush1.bf16.msra.mxu0 %v2886
    %4048 = vmatprep.subr.bf16.mxu0 %v2885
    %4049 = vmatpush1.bf16.msra.mxu0 %v2884
    %4050 = vmatprep.subr.bf16.mxu0 %v2915
    %4051 = vmatpush2.bf16.msra.mxu0 %v2914
    %4052 = vmatprep.subr.bf16.mxu0 %v2913
    %4053 = vmatpush2.bf16.msra.mxu0 %v2912
    %4054 = vmatprep.subr.bf16.mxu0 %v2911
    %4055 = vmatpush2.bf16.msra.mxu0 %v2910
    %4056 = vmatprep.subr.bf16.mxu0 %v2909
    %4057 = vmatpush2.bf16.msra.mxu0 %v2908
    %4058 = vmatprep.subr.bf16.mxu0 %v2907
    %4059 = vmatpush2.bf16.msra.mxu0 %v2906
    %4060 = vmatprep.subr.bf16.mxu0 %v2905
    %4061 = vmatpush2.bf16.msra.mxu0 %v2904
    %4062 = vmatprep.subr.bf16.mxu0 %v2903
    %4063 = vmatpush2.bf16.msra.mxu0 %v2902
    %4064 = vmatprep.subr.bf16.mxu0 %v2901
    %4065 = vmatpush2.bf16.msra.mxu0 %v2900
    %4066 = vmatprep.mubr.bf16.mxu0 %v373
    %4067 = vmatmul.mubr.bf16.gmra.mxu0 %v372
    %v4068 = vpop.f32.mrf.mxu0
    %v4069 = vadd.f32 %v4028, %v4068
    %v4070 = vpop.f32.mrf.mxu0
    %v4071 = vadd.f32 %v4030, %v4070
    %v4072 = vpop.f32.mrf.mxu0
    %v4073 = vpop.f32.mrf.mxu0
    %4074 = vdwg.mxu0
    %4075 = vmatprep.subr.bf16.mxu0 %v2931
    %4076 = vmatpush1.bf16.msra.mxu0 %v2930
    %4077 = vmatprep.subr.bf16.mxu0 %v2929
    %4078 = vmatpush1.bf16.msra.mxu0 %v2928
    %4079 = vmatprep.subr.bf16.mxu0 %v2927
    %4080 = vmatpush1.bf16.msra.mxu0 %v2926
    %4081 = vmatprep.subr.bf16.mxu0 %v2925
    %4082 = vmatpush1.bf16.msra.mxu0 %v2924
    %4083 = vmatprep.subr.bf16.mxu0 %v2923
    %4084 = vmatpush1.bf16.msra.mxu0 %v2922
    %4085 = vmatprep.subr.bf16.mxu0 %v2921
    %4086 = vmatpush1.bf16.msra.mxu0 %v2920
    %4087 = vmatprep.subr.bf16.mxu0 %v2919
    %4088 = vmatpush1.bf16.msra.mxu0 %v2918
    %4089 = vmatprep.subr.bf16.mxu0 %v2917
    %4090 = vmatpush1.bf16.msra.mxu0 %v2916
    %4091 = vmatprep.subr.bf16.mxu0 %v2947
    %4092 = vmatpush2.bf16.msra.mxu0 %v2946
    %4093 = vmatprep.subr.bf16.mxu0 %v2945
    %4094 = vmatpush2.bf16.msra.mxu0 %v2944
    %4095 = vmatprep.subr.bf16.mxu0 %v2943
    %4096 = vmatpush2.bf16.msra.mxu0 %v2942
    %4097 = vmatprep.subr.bf16.mxu0 %v2941
    %4098 = vmatpush2.bf16.msra.mxu0 %v2940
    %4099 = vmatprep.subr.bf16.mxu0 %v2939
    %4100 = vmatpush2.bf16.msra.mxu0 %v2938
    %4101 = vmatprep.subr.bf16.mxu0 %v2937
    %4102 = vmatpush2.bf16.msra.mxu0 %v2936
    %4103 = vmatprep.subr.bf16.mxu0 %v2935
    %4104 = vmatpush2.bf16.msra.mxu0 %v2934
    %4105 = vmatprep.subr.bf16.mxu0 %v2933
    %4106 = vmatpush2.bf16.msra.mxu0 %v2932
    %4107 = vmatprep.mubr.bf16.mxu0 %v375
    %4108 = vmatmul.mubr.bf16.gmra.mxu0 %v374
    %v4109 = vpop.f32.mrf.mxu0
    %v4110 = vadd.f32 %v4069, %v4109
    %v4111 = vpop.f32.mrf.mxu0
    %v4112 = vadd.f32 %v4071, %v4111
    %v4113 = vpop.f32.mrf.mxu0
    %v4114 = vpop.f32.mrf.mxu0
    %4115 = vdwg.mxu0
    %v4116 = vmax.f32 %v4110, 0.0
    %v4117 = vmax.f32 %v4112, 0.0
    %v4120 = vcombine.low %v4116, %v4117
    %v4122 = vunpack.c.l.s4 1983009808
    %v4123 = vunpack.c.0.s8 %v4122
    %v4124 = vlaneseq
    %v4125 = vshrl.u32 %v4124, 7
    %v4126 = vsub.s32 %v4123, %v4125
    %v4127 = vrot.slane %v4120, %v4126
    %4129 = vst [vmem:[#allocation2] sm:$0xf] %v4127
    %v4130 = vpack.c.bf16 %v4116, %v4116
    %v4131 = vpack.c.bf16 %v4117, %v4117
    %v4132 = vld [vmem:[%s4] sm:$0xf]
    %v4133 = vld [vmem:[%s4 + $0x4] sm:$0xf]
    %v4134 = vld [vmem:[%s4 + $0x8] sm:$0xf]
    %v4135 = vld [vmem:[%s4 + $0xc] sm:$0xf]
    %v4136 = vld [vmem:[%s4 + $0x10] sm:$0xf]
    %v4137 = vld [vmem:[%s4 + $0x14] sm:$0xf]
    %v4138 = vld [vmem:[%s4 + $0x18] sm:$0xf]
    %v4139 = vld [vmem:[%s4 + $0x1c] sm:$0xf]
    %v4140 = vld [vmem:[%s4 + $0x20] sm:$0xf]
    %v4141 = vld [vmem:[%s4 + $0x24] sm:$0xf]
    %v4142 = vld [vmem:[%s4 + $0x28] sm:$0xf]
    %v4143 = vld [vmem:[%s4 + $0x2c] sm:$0xf]
    %v4144 = vld [vmem:[%s4 + $0x30] sm:$0xf]
    %v4145 = vld [vmem:[%s4 + $0x34] sm:$0xf]
    %v4146 = vld [vmem:[%s4 + $0x38] sm:$0xf]
    %v4147 = vld [vmem:[%s4 + $0x3c] sm:$0xf]
    %v4148 = vld [vmem:[%s4 + $0x40] sm:$0xf]
    %v4149 = vld [vmem:[%s4 + $0x44] sm:$0xf]
    %v4150 = vld [vmem:[%s4 + $0x48] sm:$0xf]
    %v4151 = vld [vmem:[%s4 + $0x4c] sm:$0xf]
    %v4152 = vld [vmem:[%s4 + $0x50] sm:$0xf]
    %v4153 = vld [vmem:[%s4 + $0x54] sm:$0xf]
    %v4154 = vld [vmem:[%s4 + $0x58] sm:$0xf]
    %v4155 = vld [vmem:[%s4 + $0x5c] sm:$0xf]
    %v4156 = vld [vmem:[%s4 + $0x60] sm:$0xf]
    %v4157 = vld [vmem:[%s4 + $0x64] sm:$0xf]
    %v4158 = vld [vmem:[%s4 + $0x68] sm:$0xf]
    %v4159 = vld [vmem:[%s4 + $0x6c] sm:$0xf]
    %v4160 = vld [vmem:[%s4 + $0x70] sm:$0xf]
    %v4161 = vld [vmem:[%s4 + $0x74] sm:$0xf]
    %v4162 = vld [vmem:[%s4 + $0x78] sm:$0xf]
    %v4163 = vld [vmem:[%s4 + $0x7c] sm:$0xf]
    %v4164 = vld [vmem:[%s5] sm:$0x1]
    %v4166 = vlaneseq
    %v4167 = vshrl.u32 %v4166, 7
    %v4168 = vsub.s32 0, %v4167
    %v4169 = vrot.slane %v4164, %v4168
    %v4203 = vunpack.c.l.b16 %v4132
    %v4204 = vunpack.c.l.b16 %v4133
    %v4205 = vunpack.c.l.b16 %v4134
    %v4206 = vunpack.c.l.b16 %v4135
    %v4207 = vunpack.c.l.b16 %v4136
    %v4208 = vunpack.c.l.b16 %v4137
    %v4209 = vunpack.c.l.b16 %v4138
    %v4210 = vunpack.c.l.b16 %v4139
    %v4211 = vunpack.c.l.b16 %v4140
    %v4212 = vunpack.c.l.b16 %v4141
    %v4213 = vunpack.c.l.b16 %v4142
    %v4214 = vunpack.c.l.b16 %v4143
    %v4215 = vunpack.c.l.b16 %v4144
    %v4216 = vunpack.c.l.b16 %v4145
    %v4217 = vunpack.c.l.b16 %v4146
    %v4218 = vunpack.c.l.b16 %v4147
    %v4219 = vunpack.c.l.b16 %v4148
    %v4220 = vunpack.c.l.b16 %v4149
    %v4221 = vunpack.c.l.b16 %v4150
    %v4222 = vunpack.c.l.b16 %v4151
    %v4223 = vunpack.c.l.b16 %v4152
    %v4224 = vunpack.c.l.b16 %v4153
    %v4225 = vunpack.c.l.b16 %v4154
    %v4226 = vunpack.c.l.b16 %v4155
    %v4227 = vunpack.c.l.b16 %v4156
    %v4228 = vunpack.c.l.b16 %v4157
    %v4229 = vunpack.c.l.b16 %v4158
    %v4230 = vunpack.c.l.b16 %v4159
    %v4231 = vunpack.c.l.b16 %v4160
    %v4232 = vunpack.c.l.b16 %v4161
    %v4233 = vunpack.c.l.b16 %v4162
    %v4234 = vunpack.c.l.b16 %v4163
    %v4235 = vpack.c.b16 %v4204, %v4203
    %v4236 = vpack.c.b16 %v4206, %v4205
    %v4237 = vpack.c.b16 %v4208, %v4207
    %v4238 = vpack.c.b16 %v4210, %v4209
    %v4239 = vpack.c.b16 %v4212, %v4211
    %v4240 = vpack.c.b16 %v4214, %v4213
    %v4241 = vpack.c.b16 %v4216, %v4215
    %v4242 = vpack.c.b16 %v4218, %v4217
    %v4243 = vpack.c.b16 %v4220, %v4219
    %v4244 = vpack.c.b16 %v4222, %v4221
    %v4245 = vpack.c.b16 %v4224, %v4223
    %v4246 = vpack.c.b16 %v4226, %v4225
    %v4247 = vpack.c.b16 %v4228, %v4227
    %v4248 = vpack.c.b16 %v4230, %v4229
    %v4249 = vpack.c.b16 %v4232, %v4231
    %v4250 = vpack.c.b16 %v4234, %v4233
    %4267 = vmatprep.subr.bf16.mxu0 0
    %4268 = vmatpush1.bf16.msra.mxu0 %v4242
    %4269 = vmatprep.subr.bf16.mxu0 0
    %4270 = vmatpush1.bf16.msra.mxu0 %v4241
    %4271 = vmatprep.subr.bf16.mxu0 0
    %4272 = vmatpush1.bf16.msra.mxu0 %v4240
    %4273 = vmatprep.subr.bf16.mxu0 0
    %4274 = vmatpush1.bf16.msra.mxu0 %v4239
    %4275 = vmatprep.subr.bf16.mxu0 0
    %4276 = vmatpush1.bf16.msra.mxu0 %v4238
    %4277 = vmatprep.subr.bf16.mxu0 0
    %4278 = vmatpush1.bf16.msra.mxu0 %v4237
    %4279 = vmatprep.subr.bf16.mxu0 0
    %4280 = vmatpush1.bf16.msra.mxu0 %v4236
    %4281 = vmatprep.subr.bf16.mxu0 0
    %4282 = vmatpush1.bf16.msra.mxu0 %v4235
    %4283 = vmatprep.subr.bf16.mxu0 0
    %4284 = vmatpush2.bf16.msra.mxu0 %v4250
    %4285 = vmatprep.subr.bf16.mxu0 0
    %4286 = vmatpush2.bf16.msra.mxu0 %v4249
    %4287 = vmatprep.subr.bf16.mxu0 0
    %4288 = vmatpush2.bf16.msra.mxu0 %v4248
    %4289 = vmatprep.subr.bf16.mxu0 0
    %4290 = vmatpush2.bf16.msra.mxu0 %v4247
    %4291 = vmatprep.subr.bf16.mxu0 0
    %4292 = vmatpush2.bf16.msra.mxu0 %v4246
    %4293 = vmatprep.subr.bf16.mxu0 0
    %4294 = vmatpush2.bf16.msra.mxu0 %v4245
    %4295 = vmatprep.subr.bf16.mxu0 0
    %4296 = vmatpush2.bf16.msra.mxu0 %v4244
    %4297 = vmatprep.subr.bf16.mxu0 0
    %4298 = vmatpush2.bf16.msra.mxu0 %v4243
    %4299 = vmatprep.mubr.bf16.mxu0 %v4131
    %4300 = vmatmul.mubr.bf16.gmra.mxu0 %v4130
    %v4301 = vpop.f32.mrf.mxu0
    %v4302 = vadd.f32 %v4169, %v4301
    %v4303 = vpop.f32.mrf.mxu0
    %v4304 = vpop.f32.mrf.mxu0
    %v4305 = vpop.f32.mrf.mxu0
    %4306 = vdwg.mxu0
    %4307 = vst [vmem:[#allocation4] sm:$0x3] %v4302
    // Predicated region
    $region26: #{encoder_forward.1} parent=1 // pred_check
      _
    $region27: #{encoder_forward.1} parent=1 // pred_check_branch
      %4309 = sbr.rel (0) target = $region29
    $region28: #{encoder_forward.1} parent=1 // pred_region
      %s4311 = ssub.s32 64, 64
      %4312 = vsyncadd [#allocation3], %s4311
      %s4314 = sshll.u32 [#allocation2], 4
      %s4315 = int_to_ptr.vmem [resolvable:$true] %s4314
      %4317 = dma.vmem_to_hbm [thread:$0]  %s4315, 64, %s6, [#allocation3]
    $region29: #{encoder_forward.1} parent=1 // pred_fallthru
      _
    // Predicated region
    $region30: #{encoder_forward.1} parent=1 // pred_check
      _
    $region31: #{encoder_forward.1} parent=1 // pred_check_branch
      %4319 = sbr.rel (0) target = $region33
    $region32: #{encoder_forward.1} parent=1 // pred_region
      %s4321 = ssub.s32 32, 32
      %4322 = vsyncadd [#allocation5], %s4321
      %s4324 = sshll.u32 [#allocation4], 4
      %s4325 = int_to_ptr.vmem [resolvable:$true] %s4324
      %4327 = dma.vmem_to_hbm [thread:$0]  %s4325, 32, %s7, [#allocation5]
    $region33: #{encoder_forward.1} parent=1 // pred_fallthru
      _
    // Predicated region
    $region34: #{encoder_forward.1} parent=1 // pred_check
      _
    $region35: #{encoder_forward.1} parent=1 // pred_check_branch
      %4329 = sbr.rel (0) target = $region37
    $region36: #{encoder_forward.1} parent=1 // pred_region
      %4330 = dma.done [#allocation3], 64
    $region37: #{encoder_forward.1} parent=1 // pred_fallthru
      _
    // Predicated region
    $region38: #{encoder_forward.1} parent=1 // pred_check
      _
    $region39: #{encoder_forward.1} parent=1 // pred_check_branch
      %4332 = sbr.rel (0) target = $region41
    $region40: #{encoder_forward.1} parent=1 // pred_region
      %4333 = dma.done [#allocation5], 32
    $region41: #{encoder_forward.1} parent=1 // pred_fallthru
      _
    %4334 = vsyncpa [#allocation3], 1
    %4335 = vsyncpa [#allocation5], 1

</llo_original>
